<compile_context>
chip_gen: v7x
topology: tpu7x:2x2x1
jax: 0.10.0
libtpu: 0.0.40
codegen_flags: <defaults>
</compile_context>

<pallas_src>
import functools

import jax
import jax.numpy as jnp
from jax.experimental import pallas as pl
from jax.experimental.pallas import tpu as pltpu


def _layernorm(y, g, b, eps=1e-5):
    mu = jnp.mean(y, axis=-1, keepdims=True)
    var = jnp.mean((y - mu) ** 2, axis=-1, keepdims=True)
    return (y - mu) * jax.lax.rsqrt(var + eps) * g + b


def _kernel(num_layers,
            x_ref, wp_ref, bp_ref,
            wv_ref, bv_ref, wo_ref, bo_ref,
            g1_ref, be1_ref, w1_ref, b1_ref, w2_ref, b2_ref, g2_ref, be2_ref,
            wc1_ref, bc1_ref, wc2_ref, bc2_ref,
            out_ref):
    # bf16 matmul operands, f32 accumulation; all elementwise math stays f32.
    def mm(a, w):
        return jnp.dot(a.astype(jnp.bfloat16), w,
                       preferred_element_type=jnp.float32)

    x = x_ref[...]                                                  # (Bt, in_dim) f32

    # feature projection (nn.Linear(input_dim, d_model))
    x = mm(x, wp_ref[...]) + bp_ref[...]

    # transformer encoder layers; seq_len == 1 so attention == out_proj(V)
    for l in range(num_layers):
        v = mm(x, wv_ref[l]) + bv_ref[l]                            # V projection only
        src2 = mm(v, wo_ref[l]) + bo_ref[l]                         # attn out_proj
        x = _layernorm(x + src2, g1_ref[l], be1_ref[l])

        h = jnp.maximum(mm(x, w1_ref[l]) + b1_ref[l], 0.0)          # FF + ReLU
        src2 = mm(h, w2_ref[l]) + b2_ref[l]
        x = _layernorm(x + src2, g2_ref[l], be2_ref[l])

    # classifier: Linear -> ReLU -> (Dropout=identity) -> Linear (lane-padded)
    h = jnp.maximum(mm(x, wc1_ref[...]) + bc1_ref[...], 0.0)
    out_ref[...] = mm(h, wc2_ref[...]) + bc2_ref[...]


def pretrained_feature_transformer(x, params, *, d_model, num_layers,
                                   num_classes, b_tile=None):
    B, input_dim = x.shape
    d = d_model
    ff = params['w1'].shape[-1]
    if b_tile is None:
        b_tile = B if B <= 128 else 128
    assert B % b_tile == 0

    bf16 = jnp.bfloat16
    # lane-dense output: pad classifier output columns to a multiple of 128
    nc_pad = -(-num_classes // 128) * 128

    # V block only of the fused in_proj (Q/K are dead at seq_len == 1)
    wv = params['w_in'][:, :, 2 * d:3 * d].astype(bf16)             # (L, d, d)
    bv = params['b_in'][:, :, 2 * d:3 * d]                          # (L, 1, d) f32
    wc2 = jnp.zeros((d // 2, nc_pad), bf16).at[:, :num_classes].set(
        params['wc2'].astype(bf16))
    bc2 = jnp.zeros((1, nc_pad), jnp.float32).at[:, :num_classes].set(params['bc2'])

    weights = [
        params['wp'].astype(bf16), params['bp'],
        wv, bv,
        params['wo'].astype(bf16), params['bo'],
        params['g1'], params['be1'],
        params['w1'].astype(bf16), params['b1'],
        params['w2'].astype(bf16), params['b2'],
        params['g2'], params['be2'],
        params['wc1'].astype(bf16), params['bc1'],
        wc2, bc2,
    ]

    def full_spec(a):
        nd = a.ndim
        return pl.BlockSpec(a.shape, lambda i, _nd=nd: (0,) * _nd)

    in_specs = [pl.BlockSpec((b_tile, input_dim), lambda i: (i, 0))]
    in_specs += [full_spec(a) for a in weights]
    out_specs = pl.BlockSpec((b_tile, nc_pad), lambda i: (i, 0))

    flops = 2 * B * (input_dim * d
                     + num_layers * (2 * d * d + 2 * d * ff)
                     + d * (d // 2) + (d // 2) * nc_pad)
    bytes_accessed = int(x.size) * x.dtype.itemsize + B * nc_pad * 4
    bytes_accessed += sum(int(w.size) * w.dtype.itemsize for w in weights)

    kern = functools.partial(_kernel, num_layers)
    out_padded = pl.pallas_call(
        kern,
        out_shape=jax.ShapeDtypeStruct((B, nc_pad), jnp.float32),
        grid=(B // b_tile,),
        in_specs=in_specs,
        out_specs=out_specs,
        compiler_params=pltpu.CompilerParams(dimension_semantics=("parallel",)),
        cost_estimate=pl.CostEstimate(flops=flops,
                                      transcendentals=2 * num_layers * B,
                                      bytes_accessed=bytes_accessed),
    )(x, *weights)
    # TODO(synk): for much larger d_model/ff/num_layers (v7x 64 MiB VMEM), move the
    # layer loop to an 'arbitrary' grid axis and stream per-layer weights.
    return out_padded[:, :num_classes]


def init_params(key, input_dim, num_classes, d_model, num_layers, dim_feedforward):
    d = d_model
    ks = iter(jax.random.split(key, 40))

    def w(shape, scale=0.02):
        return (scale * jax.random.normal(next(ks), shape)).astype(jnp.float32)

    return {
        'wp': w((input_dim, d)), 'bp': w((1, d)),
        'w_in': w((num_layers, d, 3 * d)), 'b_in': w((num_layers, 1, 3 * d)),
        'wo': w((num_layers, d, d)), 'bo': w((num_layers, 1, d)),
        'g1': jnp.ones((num_layers, 1, d), jnp.float32),
        'be1': jnp.zeros((num_layers, 1, d), jnp.float32),
        'w1': w((num_layers, d, dim_feedforward)), 'b1': w((num_layers, 1, dim_feedforward)),
        'w2': w((num_layers, dim_feedforward, d)), 'b2': w((num_layers, 1, d)),
        'g2': jnp.ones((num_layers, 1, d), jnp.float32),
        'be2': jnp.zeros((num_layers, 1, d), jnp.float32),
        'wc1': w((d, d // 2)), 'bc1': w((1, d // 2)),
        'wc2': w((d // 2, num_classes)), 'bc2': w((1, num_classes)),
    }


def reference(x, p, d_model, nhead, num_layers):
    """Pure-JAX, PyTorch-faithful f32 forward (explicit seq dim + per-head softmax)."""
    d = d_model
    dh = d // nhead
    B = x.shape[0]
    h = x @ p['wp'] + p['bp']
    src = h[:, None, :]                                             # (B, 1, d)
    for l in range(num_layers):
        qkv = src @ p['w_in'][l] + p['b_in'][l]                     # (B, 1, 3d)
        q, k, v = jnp.split(qkv, 3, axis=-1)
        q = q.reshape(B, 1, nhead, dh).transpose(0, 2, 1, 3)
        k = k.reshape(B, 1, nhead, dh).transpose(0, 2, 1, 3)
        v = v.reshape(B, 1, nhead, dh).transpose(0, 2, 1, 3)
        scores = (q @ k.transpose(0, 1, 3, 2)) / jnp.sqrt(jnp.float32(dh))
        attn = jax.nn.softmax(scores, axis=-1)
        o = (attn @ v).transpose(0, 2, 1, 3).reshape(B, 1, d)
        src2 = o @ p['wo'][l] + p['bo'][l]
        src = _layernorm(src + src2, p['g1'][l], p['be1'][l])
        ffn = jnp.maximum(src @ p['w1'][l] + p['b1'][l], 0.0) @ p['w2'][l] + p['b2'][l]
        src = _layernorm(src + ffn, p['g2'][l], p['be2'][l])
    h = src.mean(axis=1)
    h = jnp.maximum(h @ p['wc1'] + p['bc1'], 0.0)
    return h @ p['wc2'] + p['bc2']


if __name__ == "__main__":
    B, input_dim, num_classes = 16, 64, 16
    d_model, nhead, num_layers, dim_feedforward = 128, 8, 4, 256

    key = jax.random.PRNGKey(0)
    kx, kp = jax.random.split(key)
    x = jax.random.normal(kx, (B, input_dim), jnp.float32)
    params = init_params(kp, input_dim, num_classes, d_model, num_layers, dim_feedforward)

    out = pretrained_feature_transformer(
        x, params, d_model=d_model, num_layers=num_layers, num_classes=num_classes)
    out = jax.block_until_ready(out)

    ref = reference(x, params, d_model, nhead, num_layers)
    assert out.shape == (B, num_classes)
    # bf16 matmul weights/operands vs f32 reference -> relaxed tolerance.
    err = float(jnp.max(jnp.abs(out - ref)))
    assert err < 1e-2, err
    print("KERNEL_OK")
</pallas_src>

<mosaic_0001>
module attributes {stable_mosaic.version = 11 : i64} {
  func.func @_kernel(%arg0: i32, %arg1: memref<16x64xf32, #tpu.memory_space<vmem>>, %arg2: memref<64x128xbf16, #tpu.memory_space<vmem>>, %arg3: memref<1x128xf32, #tpu.memory_space<vmem>>, %arg4: memref<4x128x128xbf16, #tpu.memory_space<vmem>>, %arg5: memref<4x1x128xf32, #tpu.memory_space<vmem>>, %arg6: memref<4x128x128xbf16, #tpu.memory_space<vmem>>, %arg7: memref<4x1x128xf32, #tpu.memory_space<vmem>>, %arg8: memref<4x1x128xf32, #tpu.memory_space<vmem>>, %arg9: memref<4x1x128xf32, #tpu.memory_space<vmem>>, %arg10: memref<4x128x256xbf16, #tpu.memory_space<vmem>>, %arg11: memref<4x1x256xf32, #tpu.memory_space<vmem>>, %arg12: memref<4x256x128xbf16, #tpu.memory_space<vmem>>, %arg13: memref<4x1x128xf32, #tpu.memory_space<vmem>>, %arg14: memref<4x1x128xf32, #tpu.memory_space<vmem>>, %arg15: memref<4x1x128xf32, #tpu.memory_space<vmem>>, %arg16: memref<128x64xbf16, #tpu.memory_space<vmem>>, %arg17: memref<1x64xf32, #tpu.memory_space<vmem>>, %arg18: memref<64x128xbf16, #tpu.memory_space<vmem>>, %arg19: memref<1x128xf32, #tpu.memory_space<vmem>>, %arg20: memref<16x128xf32, #tpu.memory_space<vmem>>) attributes {dimension_semantics = [#tpu.dimension_semantics<parallel>], iteration_bounds = array<i64: 1>, scalar_prefetch = 0 : i64, scratch_operands = 0 : i64, tpu.core_type = #tpu.core_type<tc>, window_params = [{transform_indices = @transform_0, window_bounds = array<i64: 16, 64>}, {pipeline_mode = #tpu.pipeline_mode<synchronous>, transform_indices = @transform_1, window_bounds = array<i64: 64, 128>}, {pipeline_mode = #tpu.pipeline_mode<synchronous>, transform_indices = @transform_2, window_bounds = array<i64: 1, 128>}, {pipeline_mode = #tpu.pipeline_mode<synchronous>, transform_indices = @transform_3, window_bounds = array<i64: 4, 128, 128>}, {pipeline_mode = #tpu.pipeline_mode<synchronous>, transform_indices = @transform_4, window_bounds = array<i64: 4, 1, 128>}, {pipeline_mode = #tpu.pipeline_mode<synchronous>, transform_indices = @transform_5, window_bounds = array<i64: 4, 128, 128>}, {pipeline_mode = #tpu.pipeline_mode<synchronous>, transform_indices = @transform_6, window_bounds = array<i64: 4, 1, 128>}, {pipeline_mode = #tpu.pipeline_mode<synchronous>, transform_indices = @transform_7, window_bounds = array<i64: 4, 1, 128>}, {pipeline_mode = #tpu.pipeline_mode<synchronous>, transform_indices = @transform_8, window_bounds = array<i64: 4, 1, 128>}, {pipeline_mode = #tpu.pipeline_mode<synchronous>, transform_indices = @transform_9, window_bounds = array<i64: 4, 128, 256>}, {pipeline_mode = #tpu.pipeline_mode<synchronous>, transform_indices = @transform_10, window_bounds = array<i64: 4, 1, 256>}, {pipeline_mode = #tpu.pipeline_mode<synchronous>, transform_indices = @transform_11, window_bounds = array<i64: 4, 256, 128>}, {pipeline_mode = #tpu.pipeline_mode<synchronous>, transform_indices = @transform_12, window_bounds = array<i64: 4, 1, 128>}, {pipeline_mode = #tpu.pipeline_mode<synchronous>, transform_indices = @transform_13, window_bounds = array<i64: 4, 1, 128>}, {pipeline_mode = #tpu.pipeline_mode<synchronous>, transform_indices = @transform_14, window_bounds = array<i64: 4, 1, 128>}, {pipeline_mode = #tpu.pipeline_mode<synchronous>, transform_indices = @transform_15, window_bounds = array<i64: 128, 64>}, {pipeline_mode = #tpu.pipeline_mode<synchronous>, transform_indices = @transform_16, window_bounds = array<i64: 1, 64>}, {pipeline_mode = #tpu.pipeline_mode<synchronous>, transform_indices = @transform_17, window_bounds = array<i64: 64, 128>}, {pipeline_mode = #tpu.pipeline_mode<synchronous>, transform_indices = @transform_18, window_bounds = array<i64: 1, 128>}, {transform_indices = @transform_19, window_bounds = array<i64: 16, 128>}]} {
    %c0 = arith.constant 0 : index
    %c0_0 = arith.constant 0 : index
    %0 = vector.load %arg1[%c0, %c0_0] : memref<16x64xf32, #tpu.memory_space<vmem>>, vector<16x64xf32>
    %c0_1 = arith.constant 0 : index
    %c0_2 = arith.constant 0 : index
    %1 = vector.load %arg2[%c0_1, %c0_2] : memref<64x128xbf16, #tpu.memory_space<vmem>>, vector<64x128xbf16>
    %2 = arith.truncf %0 : vector<16x64xf32> to vector<16x64xbf16>
    %cst = arith.constant dense<0.000000e+00> : vector<16x128xf32>
    %3 = tpu.matmul %2, %1, %cst {dimension_numbers = #tpu.dot_dimension_numbers<[1], [0], [0], [1], [0, 0, 1, 1], [], []>} : vector<16x64xbf16>, vector<64x128xbf16>, vector<16x128xf32> -> vector<16x128xf32>
    %c0_3 = arith.constant 0 : index
    %c0_4 = arith.constant 0 : index
    %4 = vector.load %arg3[%c0_3, %c0_4] : memref<1x128xf32, #tpu.memory_space<vmem>>, vector<1x128xf32>
    %5 = vector.broadcast %4 : vector<1x128xf32> to vector<16x128xf32>
    %6 = arith.addf %3, %5 : vector<16x128xf32>
    %c0_5 = arith.constant 0 : index
    %c0_6 = arith.constant 0 : index
    %c0_7 = arith.constant 0 : index
    %7 = vector.load %arg4[%c0_5, %c0_6, %c0_7] : memref<4x128x128xbf16, #tpu.memory_space<vmem>>, vector<1x128x128xbf16>
    %8 = vector.shape_cast %7 : vector<1x128x128xbf16> to vector<128x128xbf16>
    %9 = arith.truncf %6 : vector<16x128xf32> to vector<16x128xbf16>
    %cst_8 = arith.constant dense<0.000000e+00> : vector<16x128xf32>
    %10 = tpu.matmul %9, %8, %cst_8 {dimension_numbers = #tpu.dot_dimension_numbers<[1], [0], [0], [1], [0, 0, 1, 1], [], []>} : vector<16x128xbf16>, vector<128x128xbf16>, vector<16x128xf32> -> vector<16x128xf32>
    %c0_9 = arith.constant 0 : index
    %c0_10 = arith.constant 0 : index
    %c0_11 = arith.constant 0 : index
    %11 = vector.load %arg5[%c0_9, %c0_10, %c0_11] : memref<4x1x128xf32, #tpu.memory_space<vmem>>, vector<1x1x128xf32>
    %12 = vector.shape_cast %11 : vector<1x1x128xf32> to vector<1x128xf32>
    %13 = vector.broadcast %12 : vector<1x128xf32> to vector<16x128xf32>
    %14 = arith.addf %10, %13 : vector<16x128xf32>
    %c0_12 = arith.constant 0 : index
    %c0_13 = arith.constant 0 : index
    %c0_14 = arith.constant 0 : index
    %15 = vector.load %arg6[%c0_12, %c0_13, %c0_14] : memref<4x128x128xbf16, #tpu.memory_space<vmem>>, vector<1x128x128xbf16>
    %16 = vector.shape_cast %15 : vector<1x128x128xbf16> to vector<128x128xbf16>
    %17 = arith.truncf %14 : vector<16x128xf32> to vector<16x128xbf16>
    %cst_15 = arith.constant dense<0.000000e+00> : vector<16x128xf32>
    %18 = tpu.matmul %17, %16, %cst_15 {dimension_numbers = #tpu.dot_dimension_numbers<[1], [0], [0], [1], [0, 0, 1, 1], [], []>} : vector<16x128xbf16>, vector<128x128xbf16>, vector<16x128xf32> -> vector<16x128xf32>
    %c0_16 = arith.constant 0 : index
    %c0_17 = arith.constant 0 : index
    %c0_18 = arith.constant 0 : index
    %19 = vector.load %arg7[%c0_16, %c0_17, %c0_18] : memref<4x1x128xf32, #tpu.memory_space<vmem>>, vector<1x1x128xf32>
    %20 = vector.shape_cast %19 : vector<1x1x128xf32> to vector<1x128xf32>
    %21 = vector.broadcast %20 : vector<1x128xf32> to vector<16x128xf32>
    %22 = arith.addf %18, %21 : vector<16x128xf32>
    %23 = arith.addf %6, %22 : vector<16x128xf32>
    %c0_19 = arith.constant 0 : index
    %c0_20 = arith.constant 0 : index
    %c0_21 = arith.constant 0 : index
    %24 = vector.load %arg8[%c0_19, %c0_20, %c0_21] : memref<4x1x128xf32, #tpu.memory_space<vmem>>, vector<1x1x128xf32>
    %25 = vector.shape_cast %24 : vector<1x1x128xf32> to vector<1x128xf32>
    %c0_22 = arith.constant 0 : index
    %c0_23 = arith.constant 0 : index
    %c0_24 = arith.constant 0 : index
    %26 = vector.load %arg9[%c0_22, %c0_23, %c0_24] : memref<4x1x128xf32, #tpu.memory_space<vmem>>, vector<1x1x128xf32>
    %27 = vector.shape_cast %26 : vector<1x1x128xf32> to vector<1x128xf32>
    %cst_25 = arith.constant dense<0.000000e+00> : vector<16xf32>
    %28 = vector.multi_reduction <add>, %23, %cst_25 [1] : vector<16x128xf32> to vector<16xf32>
    %29 = vector.shape_cast %28 : vector<16xf32> to vector<16x1xf32>
    %cst_26 = arith.constant 1.280000e+02 : f32
    %30 = vector.broadcast %cst_26 : f32 to vector<16x1xf32>
    %31 = arith.divf %29, %30 : vector<16x1xf32>
    %32 = vector.broadcast %31 : vector<16x1xf32> to vector<16x128xf32>
    %33 = arith.subf %23, %32 : vector<16x128xf32>
    %34 = arith.mulf %33, %33 : vector<16x128xf32>
    %cst_27 = arith.constant dense<0.000000e+00> : vector<16xf32>
    %35 = vector.multi_reduction <add>, %34, %cst_27 [1] : vector<16x128xf32> to vector<16xf32>
    %36 = vector.shape_cast %35 : vector<16xf32> to vector<16x1xf32>
    %cst_28 = arith.constant 1.280000e+02 : f32
    %37 = vector.broadcast %cst_28 : f32 to vector<16x1xf32>
    %38 = arith.divf %36, %37 : vector<16x1xf32>
    %39 = vector.broadcast %31 : vector<16x1xf32> to vector<16x128xf32>
    %40 = arith.subf %23, %39 : vector<16x128xf32>
    %cst_29 = arith.constant 9.99999974E-6 : f32
    %41 = vector.broadcast %cst_29 : f32 to vector<16x1xf32>
    %42 = arith.addf %38, %41 : vector<16x1xf32>
    %43 = math.rsqrt %42 : vector<16x1xf32>
    %44 = vector.broadcast %43 : vector<16x1xf32> to vector<16x128xf32>
    %45 = arith.mulf %40, %44 : vector<16x128xf32>
    %46 = vector.broadcast %25 : vector<1x128xf32> to vector<16x128xf32>
    %47 = arith.mulf %45, %46 : vector<16x128xf32>
    %48 = vector.broadcast %27 : vector<1x128xf32> to vector<16x128xf32>
    %49 = arith.addf %47, %48 : vector<16x128xf32>
    %c0_30 = arith.constant 0 : index
    %c0_31 = arith.constant 0 : index
    %c0_32 = arith.constant 0 : index
    %50 = vector.load %arg10[%c0_30, %c0_31, %c0_32] : memref<4x128x256xbf16, #tpu.memory_space<vmem>>, vector<1x128x256xbf16>
    %51 = vector.shape_cast %50 : vector<1x128x256xbf16> to vector<128x256xbf16>
    %52 = arith.truncf %49 : vector<16x128xf32> to vector<16x128xbf16>
    %cst_33 = arith.constant dense<0.000000e+00> : vector<16x256xf32>
    %53 = tpu.matmul %52, %51, %cst_33 {dimension_numbers = #tpu.dot_dimension_numbers<[1], [0], [0], [1], [0, 0, 1, 1], [], []>} : vector<16x128xbf16>, vector<128x256xbf16>, vector<16x256xf32> -> vector<16x256xf32>
    %c0_34 = arith.constant 0 : index
    %c0_35 = arith.constant 0 : index
    %c0_36 = arith.constant 0 : index
    %54 = vector.load %arg11[%c0_34, %c0_35, %c0_36] : memref<4x1x256xf32, #tpu.memory_space<vmem>>, vector<1x1x256xf32>
    %55 = vector.shape_cast %54 : vector<1x1x256xf32> to vector<1x256xf32>
    %56 = vector.broadcast %55 : vector<1x256xf32> to vector<16x256xf32>
    %57 = arith.addf %53, %56 : vector<16x256xf32>
    %cst_37 = arith.constant 0.000000e+00 : f32
    %58 = vector.broadcast %cst_37 : f32 to vector<16x256xf32>
    %59 = arith.maximumf %57, %58 : vector<16x256xf32>
    %c0_38 = arith.constant 0 : index
    %c0_39 = arith.constant 0 : index
    %c0_40 = arith.constant 0 : index
    %60 = vector.load %arg12[%c0_38, %c0_39, %c0_40] : memref<4x256x128xbf16, #tpu.memory_space<vmem>>, vector<1x256x128xbf16>
    %61 = vector.shape_cast %60 : vector<1x256x128xbf16> to vector<256x128xbf16>
    %62 = arith.truncf %59 : vector<16x256xf32> to vector<16x256xbf16>
    %cst_41 = arith.constant dense<0.000000e+00> : vector<16x128xf32>
    %63 = tpu.matmul %62, %61, %cst_41 {dimension_numbers = #tpu.dot_dimension_numbers<[1], [0], [0], [1], [0, 0, 1, 1], [], []>} : vector<16x256xbf16>, vector<256x128xbf16>, vector<16x128xf32> -> vector<16x128xf32>
    %c0_42 = arith.constant 0 : index
    %c0_43 = arith.constant 0 : index
    %c0_44 = arith.constant 0 : index
    %64 = vector.load %arg13[%c0_42, %c0_43, %c0_44] : memref<4x1x128xf32, #tpu.memory_space<vmem>>, vector<1x1x128xf32>
    %65 = vector.shape_cast %64 : vector<1x1x128xf32> to vector<1x128xf32>
    %66 = vector.broadcast %65 : vector<1x128xf32> to vector<16x128xf32>
    %67 = arith.addf %63, %66 : vector<16x128xf32>
    %68 = arith.addf %49, %67 : vector<16x128xf32>
    %c0_45 = arith.constant 0 : index
    %c0_46 = arith.constant 0 : index
    %c0_47 = arith.constant 0 : index
    %69 = vector.load %arg14[%c0_45, %c0_46, %c0_47] : memref<4x1x128xf32, #tpu.memory_space<vmem>>, vector<1x1x128xf32>
    %70 = vector.shape_cast %69 : vector<1x1x128xf32> to vector<1x128xf32>
    %c0_48 = arith.constant 0 : index
    %c0_49 = arith.constant 0 : index
    %c0_50 = arith.constant 0 : index
    %71 = vector.load %arg15[%c0_48, %c0_49, %c0_50] : memref<4x1x128xf32, #tpu.memory_space<vmem>>, vector<1x1x128xf32>
    %72 = vector.shape_cast %71 : vector<1x1x128xf32> to vector<1x128xf32>
    %cst_51 = arith.constant dense<0.000000e+00> : vector<16xf32>
    %73 = vector.multi_reduction <add>, %68, %cst_51 [1] : vector<16x128xf32> to vector<16xf32>
    %74 = vector.shape_cast %73 : vector<16xf32> to vector<16x1xf32>
    %cst_52 = arith.constant 1.280000e+02 : f32
    %75 = vector.broadcast %cst_52 : f32 to vector<16x1xf32>
    %76 = arith.divf %74, %75 : vector<16x1xf32>
    %77 = vector.broadcast %76 : vector<16x1xf32> to vector<16x128xf32>
    %78 = arith.subf %68, %77 : vector<16x128xf32>
    %79 = arith.mulf %78, %78 : vector<16x128xf32>
    %cst_53 = arith.constant dense<0.000000e+00> : vector<16xf32>
    %80 = vector.multi_reduction <add>, %79, %cst_53 [1] : vector<16x128xf32> to vector<16xf32>
    %81 = vector.shape_cast %80 : vector<16xf32> to vector<16x1xf32>
    %cst_54 = arith.constant 1.280000e+02 : f32
    %82 = vector.broadcast %cst_54 : f32 to vector<16x1xf32>
    %83 = arith.divf %81, %82 : vector<16x1xf32>
    %84 = vector.broadcast %76 : vector<16x1xf32> to vector<16x128xf32>
    %85 = arith.subf %68, %84 : vector<16x128xf32>
    %cst_55 = arith.constant 9.99999974E-6 : f32
    %86 = vector.broadcast %cst_55 : f32 to vector<16x1xf32>
    %87 = arith.addf %83, %86 : vector<16x1xf32>
    %88 = math.rsqrt %87 : vector<16x1xf32>
    %89 = vector.broadcast %88 : vector<16x1xf32> to vector<16x128xf32>
    %90 = arith.mulf %85, %89 : vector<16x128xf32>
    %91 = vector.broadcast %70 : vector<1x128xf32> to vector<16x128xf32>
    %92 = arith.mulf %90, %91 : vector<16x128xf32>
    %93 = vector.broadcast %72 : vector<1x128xf32> to vector<16x128xf32>
    %94 = arith.addf %92, %93 : vector<16x128xf32>
    %c1 = arith.constant 1 : index
    %c0_56 = arith.constant 0 : index
    %c0_57 = arith.constant 0 : index
    %95 = vector.load %arg4[%c1, %c0_56, %c0_57] : memref<4x128x128xbf16, #tpu.memory_space<vmem>>, vector<1x128x128xbf16>
    %96 = vector.shape_cast %95 : vector<1x128x128xbf16> to vector<128x128xbf16>
    %97 = arith.truncf %94 : vector<16x128xf32> to vector<16x128xbf16>
    %cst_58 = arith.constant dense<0.000000e+00> : vector<16x128xf32>
    %98 = tpu.matmul %97, %96, %cst_58 {dimension_numbers = #tpu.dot_dimension_numbers<[1], [0], [0], [1], [0, 0, 1, 1], [], []>} : vector<16x128xbf16>, vector<128x128xbf16>, vector<16x128xf32> -> vector<16x128xf32>
    %c1_59 = arith.constant 1 : index
    %c0_60 = arith.constant 0 : index
    %c0_61 = arith.constant 0 : index
    %99 = vector.load %arg5[%c1_59, %c0_60, %c0_61] : memref<4x1x128xf32, #tpu.memory_space<vmem>>, vector<1x1x128xf32>
    %100 = vector.shape_cast %99 : vector<1x1x128xf32> to vector<1x128xf32>
    %101 = vector.broadcast %100 : vector<1x128xf32> to vector<16x128xf32>
    %102 = arith.addf %98, %101 : vector<16x128xf32>
    %c1_62 = arith.constant 1 : index
    %c0_63 = arith.constant 0 : index
    %c0_64 = arith.constant 0 : index
    %103 = vector.load %arg6[%c1_62, %c0_63, %c0_64] : memref<4x128x128xbf16, #tpu.memory_space<vmem>>, vector<1x128x128xbf16>
    %104 = vector.shape_cast %103 : vector<1x128x128xbf16> to vector<128x128xbf16>
    %105 = arith.truncf %102 : vector<16x128xf32> to vector<16x128xbf16>
    %cst_65 = arith.constant dense<0.000000e+00> : vector<16x128xf32>
    %106 = tpu.matmul %105, %104, %cst_65 {dimension_numbers = #tpu.dot_dimension_numbers<[1], [0], [0], [1], [0, 0, 1, 1], [], []>} : vector<16x128xbf16>, vector<128x128xbf16>, vector<16x128xf32> -> vector<16x128xf32>
    %c1_66 = arith.constant 1 : index
    %c0_67 = arith.constant 0 : index
    %c0_68 = arith.constant 0 : index
    %107 = vector.load %arg7[%c1_66, %c0_67, %c0_68] : memref<4x1x128xf32, #tpu.memory_space<vmem>>, vector<1x1x128xf32>
    %108 = vector.shape_cast %107 : vector<1x1x128xf32> to vector<1x128xf32>
    %109 = vector.broadcast %108 : vector<1x128xf32> to vector<16x128xf32>
    %110 = arith.addf %106, %109 : vector<16x128xf32>
    %111 = arith.addf %94, %110 : vector<16x128xf32>
    %c1_69 = arith.constant 1 : index
    %c0_70 = arith.constant 0 : index
    %c0_71 = arith.constant 0 : index
    %112 = vector.load %arg8[%c1_69, %c0_70, %c0_71] : memref<4x1x128xf32, #tpu.memory_space<vmem>>, vector<1x1x128xf32>
    %113 = vector.shape_cast %112 : vector<1x1x128xf32> to vector<1x128xf32>
    %c1_72 = arith.constant 1 : index
    %c0_73 = arith.constant 0 : index
    %c0_74 = arith.constant 0 : index
    %114 = vector.load %arg9[%c1_72, %c0_73, %c0_74] : memref<4x1x128xf32, #tpu.memory_space<vmem>>, vector<1x1x128xf32>
    %115 = vector.shape_cast %114 : vector<1x1x128xf32> to vector<1x128xf32>
    %cst_75 = arith.constant dense<0.000000e+00> : vector<16xf32>
    %116 = vector.multi_reduction <add>, %111, %cst_75 [1] : vector<16x128xf32> to vector<16xf32>
    %117 = vector.shape_cast %116 : vector<16xf32> to vector<16x1xf32>
    %cst_76 = arith.constant 1.280000e+02 : f32
    %118 = vector.broadcast %cst_76 : f32 to vector<16x1xf32>
    %119 = arith.divf %117, %118 : vector<16x1xf32>
    %120 = vector.broadcast %119 : vector<16x1xf32> to vector<16x128xf32>
    %121 = arith.subf %111, %120 : vector<16x128xf32>
    %122 = arith.mulf %121, %121 : vector<16x128xf32>
    %cst_77 = arith.constant dense<0.000000e+00> : vector<16xf32>
    %123 = vector.multi_reduction <add>, %122, %cst_77 [1] : vector<16x128xf32> to vector<16xf32>
    %124 = vector.shape_cast %123 : vector<16xf32> to vector<16x1xf32>
    %cst_78 = arith.constant 1.280000e+02 : f32
    %125 = vector.broadcast %cst_78 : f32 to vector<16x1xf32>
    %126 = arith.divf %124, %125 : vector<16x1xf32>
    %127 = vector.broadcast %119 : vector<16x1xf32> to vector<16x128xf32>
    %128 = arith.subf %111, %127 : vector<16x128xf32>
    %cst_79 = arith.constant 9.99999974E-6 : f32
    %129 = vector.broadcast %cst_79 : f32 to vector<16x1xf32>
    %130 = arith.addf %126, %129 : vector<16x1xf32>
    %131 = math.rsqrt %130 : vector<16x1xf32>
    %132 = vector.broadcast %131 : vector<16x1xf32> to vector<16x128xf32>
    %133 = arith.mulf %128, %132 : vector<16x128xf32>
    %134 = vector.broadcast %113 : vector<1x128xf32> to vector<16x128xf32>
    %135 = arith.mulf %133, %134 : vector<16x128xf32>
    %136 = vector.broadcast %115 : vector<1x128xf32> to vector<16x128xf32>
    %137 = arith.addf %135, %136 : vector<16x128xf32>
    %c1_80 = arith.constant 1 : index
    %c0_81 = arith.constant 0 : index
    %c0_82 = arith.constant 0 : index
    %138 = vector.load %arg10[%c1_80, %c0_81, %c0_82] : memref<4x128x256xbf16, #tpu.memory_space<vmem>>, vector<1x128x256xbf16>
    %139 = vector.shape_cast %138 : vector<1x128x256xbf16> to vector<128x256xbf16>
    %140 = arith.truncf %137 : vector<16x128xf32> to vector<16x128xbf16>
    %cst_83 = arith.constant dense<0.000000e+00> : vector<16x256xf32>
    %141 = tpu.matmul %140, %139, %cst_83 {dimension_numbers = #tpu.dot_dimension_numbers<[1], [0], [0], [1], [0, 0, 1, 1], [], []>} : vector<16x128xbf16>, vector<128x256xbf16>, vector<16x256xf32> -> vector<16x256xf32>
    %c1_84 = arith.constant 1 : index
    %c0_85 = arith.constant 0 : index
    %c0_86 = arith.constant 0 : index
    %142 = vector.load %arg11[%c1_84, %c0_85, %c0_86] : memref<4x1x256xf32, #tpu.memory_space<vmem>>, vector<1x1x256xf32>
    %143 = vector.shape_cast %142 : vector<1x1x256xf32> to vector<1x256xf32>
    %144 = vector.broadcast %143 : vector<1x256xf32> to vector<16x256xf32>
    %145 = arith.addf %141, %144 : vector<16x256xf32>
    %cst_87 = arith.constant 0.000000e+00 : f32
    %146 = vector.broadcast %cst_87 : f32 to vector<16x256xf32>
    %147 = arith.maximumf %145, %146 : vector<16x256xf32>
    %c1_88 = arith.constant 1 : index
    %c0_89 = arith.constant 0 : index
    %c0_90 = arith.constant 0 : index
    %148 = vector.load %arg12[%c1_88, %c0_89, %c0_90] : memref<4x256x128xbf16, #tpu.memory_space<vmem>>, vector<1x256x128xbf16>
    %149 = vector.shape_cast %148 : vector<1x256x128xbf16> to vector<256x128xbf16>
    %150 = arith.truncf %147 : vector<16x256xf32> to vector<16x256xbf16>
    %cst_91 = arith.constant dense<0.000000e+00> : vector<16x128xf32>
    %151 = tpu.matmul %150, %149, %cst_91 {dimension_numbers = #tpu.dot_dimension_numbers<[1], [0], [0], [1], [0, 0, 1, 1], [], []>} : vector<16x256xbf16>, vector<256x128xbf16>, vector<16x128xf32> -> vector<16x128xf32>
    %c1_92 = arith.constant 1 : index
    %c0_93 = arith.constant 0 : index
    %c0_94 = arith.constant 0 : index
    %152 = vector.load %arg13[%c1_92, %c0_93, %c0_94] : memref<4x1x128xf32, #tpu.memory_space<vmem>>, vector<1x1x128xf32>
    %153 = vector.shape_cast %152 : vector<1x1x128xf32> to vector<1x128xf32>
    %154 = vector.broadcast %153 : vector<1x128xf32> to vector<16x128xf32>
    %155 = arith.addf %151, %154 : vector<16x128xf32>
    %156 = arith.addf %137, %155 : vector<16x128xf32>
    %c1_95 = arith.constant 1 : index
    %c0_96 = arith.constant 0 : index
    %c0_97 = arith.constant 0 : index
    %157 = vector.load %arg14[%c1_95, %c0_96, %c0_97] : memref<4x1x128xf32, #tpu.memory_space<vmem>>, vector<1x1x128xf32>
    %158 = vector.shape_cast %157 : vector<1x1x128xf32> to vector<1x128xf32>
    %c1_98 = arith.constant 1 : index
    %c0_99 = arith.constant 0 : index
    %c0_100 = arith.constant 0 : index
    %159 = vector.load %arg15[%c1_98, %c0_99, %c0_100] : memref<4x1x128xf32, #tpu.memory_space<vmem>>, vector<1x1x128xf32>
    %160 = vector.shape_cast %159 : vector<1x1x128xf32> to vector<1x128xf32>
    %cst_101 = arith.constant dense<0.000000e+00> : vector<16xf32>
    %161 = vector.multi_reduction <add>, %156, %cst_101 [1] : vector<16x128xf32> to vector<16xf32>
    %162 = vector.shape_cast %161 : vector<16xf32> to vector<16x1xf32>
    %cst_102 = arith.constant 1.280000e+02 : f32
    %163 = vector.broadcast %cst_102 : f32 to vector<16x1xf32>
    %164 = arith.divf %162, %163 : vector<16x1xf32>
    %165 = vector.broadcast %164 : vector<16x1xf32> to vector<16x128xf32>
    %166 = arith.subf %156, %165 : vector<16x128xf32>
    %167 = arith.mulf %166, %166 : vector<16x128xf32>
    %cst_103 = arith.constant dense<0.000000e+00> : vector<16xf32>
    %168 = vector.multi_reduction <add>, %167, %cst_103 [1] : vector<16x128xf32> to vector<16xf32>
    %169 = vector.shape_cast %168 : vector<16xf32> to vector<16x1xf32>
    %cst_104 = arith.constant 1.280000e+02 : f32
    %170 = vector.broadcast %cst_104 : f32 to vector<16x1xf32>
    %171 = arith.divf %169, %170 : vector<16x1xf32>
    %172 = vector.broadcast %164 : vector<16x1xf32> to vector<16x128xf32>
    %173 = arith.subf %156, %172 : vector<16x128xf32>
    %cst_105 = arith.constant 9.99999974E-6 : f32
    %174 = vector.broadcast %cst_105 : f32 to vector<16x1xf32>
    %175 = arith.addf %171, %174 : vector<16x1xf32>
    %176 = math.rsqrt %175 : vector<16x1xf32>
    %177 = vector.broadcast %176 : vector<16x1xf32> to vector<16x128xf32>
    %178 = arith.mulf %173, %177 : vector<16x128xf32>
    %179 = vector.broadcast %158 : vector<1x128xf32> to vector<16x128xf32>
    %180 = arith.mulf %178, %179 : vector<16x128xf32>
    %181 = vector.broadcast %160 : vector<1x128xf32> to vector<16x128xf32>
    %182 = arith.addf %180, %181 : vector<16x128xf32>
    %c2 = arith.constant 2 : index
    %c0_106 = arith.constant 0 : index
    %c0_107 = arith.constant 0 : index
    %183 = vector.load %arg4[%c2, %c0_106, %c0_107] : memref<4x128x128xbf16, #tpu.memory_space<vmem>>, vector<1x128x128xbf16>
    %184 = vector.shape_cast %183 : vector<1x128x128xbf16> to vector<128x128xbf16>
    %185 = arith.truncf %182 : vector<16x128xf32> to vector<16x128xbf16>
    %cst_108 = arith.constant dense<0.000000e+00> : vector<16x128xf32>
    %186 = tpu.matmul %185, %184, %cst_108 {dimension_numbers = #tpu.dot_dimension_numbers<[1], [0], [0], [1], [0, 0, 1, 1], [], []>} : vector<16x128xbf16>, vector<128x128xbf16>, vector<16x128xf32> -> vector<16x128xf32>
    %c2_109 = arith.constant 2 : index
    %c0_110 = arith.constant 0 : index
    %c0_111 = arith.constant 0 : index
    %187 = vector.load %arg5[%c2_109, %c0_110, %c0_111] : memref<4x1x128xf32, #tpu.memory_space<vmem>>, vector<1x1x128xf32>
    %188 = vector.shape_cast %187 : vector<1x1x128xf32> to vector<1x128xf32>
    %189 = vector.broadcast %188 : vector<1x128xf32> to vector<16x128xf32>
    %190 = arith.addf %186, %189 : vector<16x128xf32>
    %c2_112 = arith.constant 2 : index
    %c0_113 = arith.constant 0 : index
    %c0_114 = arith.constant 0 : index
    %191 = vector.load %arg6[%c2_112, %c0_113, %c0_114] : memref<4x128x128xbf16, #tpu.memory_space<vmem>>, vector<1x128x128xbf16>
    %192 = vector.shape_cast %191 : vector<1x128x128xbf16> to vector<128x128xbf16>
    %193 = arith.truncf %190 : vector<16x128xf32> to vector<16x128xbf16>
    %cst_115 = arith.constant dense<0.000000e+00> : vector<16x128xf32>
    %194 = tpu.matmul %193, %192, %cst_115 {dimension_numbers = #tpu.dot_dimension_numbers<[1], [0], [0], [1], [0, 0, 1, 1], [], []>} : vector<16x128xbf16>, vector<128x128xbf16>, vector<16x128xf32> -> vector<16x128xf32>
    %c2_116 = arith.constant 2 : index
    %c0_117 = arith.constant 0 : index
    %c0_118 = arith.constant 0 : index
    %195 = vector.load %arg7[%c2_116, %c0_117, %c0_118] : memref<4x1x128xf32, #tpu.memory_space<vmem>>, vector<1x1x128xf32>
    %196 = vector.shape_cast %195 : vector<1x1x128xf32> to vector<1x128xf32>
    %197 = vector.broadcast %196 : vector<1x128xf32> to vector<16x128xf32>
    %198 = arith.addf %194, %197 : vector<16x128xf32>
    %199 = arith.addf %182, %198 : vector<16x128xf32>
    %c2_119 = arith.constant 2 : index
    %c0_120 = arith.constant 0 : index
    %c0_121 = arith.constant 0 : index
    %200 = vector.load %arg8[%c2_119, %c0_120, %c0_121] : memref<4x1x128xf32, #tpu.memory_space<vmem>>, vector<1x1x128xf32>
    %201 = vector.shape_cast %200 : vector<1x1x128xf32> to vector<1x128xf32>
    %c2_122 = arith.constant 2 : index
    %c0_123 = arith.constant 0 : index
    %c0_124 = arith.constant 0 : index
    %202 = vector.load %arg9[%c2_122, %c0_123, %c0_124] : memref<4x1x128xf32, #tpu.memory_space<vmem>>, vector<1x1x128xf32>
    %203 = vector.shape_cast %202 : vector<1x1x128xf32> to vector<1x128xf32>
    %cst_125 = arith.constant dense<0.000000e+00> : vector<16xf32>
    %204 = vector.multi_reduction <add>, %199, %cst_125 [1] : vector<16x128xf32> to vector<16xf32>
    %205 = vector.shape_cast %204 : vector<16xf32> to vector<16x1xf32>
    %cst_126 = arith.constant 1.280000e+02 : f32
    %206 = vector.broadcast %cst_126 : f32 to vector<16x1xf32>
    %207 = arith.divf %205, %206 : vector<16x1xf32>
    %208 = vector.broadcast %207 : vector<16x1xf32> to vector<16x128xf32>
    %209 = arith.subf %199, %208 : vector<16x128xf32>
    %210 = arith.mulf %209, %209 : vector<16x128xf32>
    %cst_127 = arith.constant dense<0.000000e+00> : vector<16xf32>
    %211 = vector.multi_reduction <add>, %210, %cst_127 [1] : vector<16x128xf32> to vector<16xf32>
    %212 = vector.shape_cast %211 : vector<16xf32> to vector<16x1xf32>
    %cst_128 = arith.constant 1.280000e+02 : f32
    %213 = vector.broadcast %cst_128 : f32 to vector<16x1xf32>
    %214 = arith.divf %212, %213 : vector<16x1xf32>
    %215 = vector.broadcast %207 : vector<16x1xf32> to vector<16x128xf32>
    %216 = arith.subf %199, %215 : vector<16x128xf32>
    %cst_129 = arith.constant 9.99999974E-6 : f32
    %217 = vector.broadcast %cst_129 : f32 to vector<16x1xf32>
    %218 = arith.addf %214, %217 : vector<16x1xf32>
    %219 = math.rsqrt %218 : vector<16x1xf32>
    %220 = vector.broadcast %219 : vector<16x1xf32> to vector<16x128xf32>
    %221 = arith.mulf %216, %220 : vector<16x128xf32>
    %222 = vector.broadcast %201 : vector<1x128xf32> to vector<16x128xf32>
    %223 = arith.mulf %221, %222 : vector<16x128xf32>
    %224 = vector.broadcast %203 : vector<1x128xf32> to vector<16x128xf32>
    %225 = arith.addf %223, %224 : vector<16x128xf32>
    %c2_130 = arith.constant 2 : index
    %c0_131 = arith.constant 0 : index
    %c0_132 = arith.constant 0 : index
    %226 = vector.load %arg10[%c2_130, %c0_131, %c0_132] : memref<4x128x256xbf16, #tpu.memory_space<vmem>>, vector<1x128x256xbf16>
    %227 = vector.shape_cast %226 : vector<1x128x256xbf16> to vector<128x256xbf16>
    %228 = arith.truncf %225 : vector<16x128xf32> to vector<16x128xbf16>
    %cst_133 = arith.constant dense<0.000000e+00> : vector<16x256xf32>
    %229 = tpu.matmul %228, %227, %cst_133 {dimension_numbers = #tpu.dot_dimension_numbers<[1], [0], [0], [1], [0, 0, 1, 1], [], []>} : vector<16x128xbf16>, vector<128x256xbf16>, vector<16x256xf32> -> vector<16x256xf32>
    %c2_134 = arith.constant 2 : index
    %c0_135 = arith.constant 0 : index
    %c0_136 = arith.constant 0 : index
    %230 = vector.load %arg11[%c2_134, %c0_135, %c0_136] : memref<4x1x256xf32, #tpu.memory_space<vmem>>, vector<1x1x256xf32>
    %231 = vector.shape_cast %230 : vector<1x1x256xf32> to vector<1x256xf32>
    %232 = vector.broadcast %231 : vector<1x256xf32> to vector<16x256xf32>
    %233 = arith.addf %229, %232 : vector<16x256xf32>
    %cst_137 = arith.constant 0.000000e+00 : f32
    %234 = vector.broadcast %cst_137 : f32 to vector<16x256xf32>
    %235 = arith.maximumf %233, %234 : vector<16x256xf32>
    %c2_138 = arith.constant 2 : index
    %c0_139 = arith.constant 0 : index
    %c0_140 = arith.constant 0 : index
    %236 = vector.load %arg12[%c2_138, %c0_139, %c0_140] : memref<4x256x128xbf16, #tpu.memory_space<vmem>>, vector<1x256x128xbf16>
    %237 = vector.shape_cast %236 : vector<1x256x128xbf16> to vector<256x128xbf16>
    %238 = arith.truncf %235 : vector<16x256xf32> to vector<16x256xbf16>
    %cst_141 = arith.constant dense<0.000000e+00> : vector<16x128xf32>
    %239 = tpu.matmul %238, %237, %cst_141 {dimension_numbers = #tpu.dot_dimension_numbers<[1], [0], [0], [1], [0, 0, 1, 1], [], []>} : vector<16x256xbf16>, vector<256x128xbf16>, vector<16x128xf32> -> vector<16x128xf32>
    %c2_142 = arith.constant 2 : index
    %c0_143 = arith.constant 0 : index
    %c0_144 = arith.constant 0 : index
    %240 = vector.load %arg13[%c2_142, %c0_143, %c0_144] : memref<4x1x128xf32, #tpu.memory_space<vmem>>, vector<1x1x128xf32>
    %241 = vector.shape_cast %240 : vector<1x1x128xf32> to vector<1x128xf32>
    %242 = vector.broadcast %241 : vector<1x128xf32> to vector<16x128xf32>
    %243 = arith.addf %239, %242 : vector<16x128xf32>
    %244 = arith.addf %225, %243 : vector<16x128xf32>
    %c2_145 = arith.constant 2 : index
    %c0_146 = arith.constant 0 : index
    %c0_147 = arith.constant 0 : index
    %245 = vector.load %arg14[%c2_145, %c0_146, %c0_147] : memref<4x1x128xf32, #tpu.memory_space<vmem>>, vector<1x1x128xf32>
    %246 = vector.shape_cast %245 : vector<1x1x128xf32> to vector<1x128xf32>
    %c2_148 = arith.constant 2 : index
    %c0_149 = arith.constant 0 : index
    %c0_150 = arith.constant 0 : index
    %247 = vector.load %arg15[%c2_148, %c0_149, %c0_150] : memref<4x1x128xf32, #tpu.memory_space<vmem>>, vector<1x1x128xf32>
    %248 = vector.shape_cast %247 : vector<1x1x128xf32> to vector<1x128xf32>
    %cst_151 = arith.constant dense<0.000000e+00> : vector<16xf32>
    %249 = vector.multi_reduction <add>, %244, %cst_151 [1] : vector<16x128xf32> to vector<16xf32>
    %250 = vector.shape_cast %249 : vector<16xf32> to vector<16x1xf32>
    %cst_152 = arith.constant 1.280000e+02 : f32
    %251 = vector.broadcast %cst_152 : f32 to vector<16x1xf32>
    %252 = arith.divf %250, %251 : vector<16x1xf32>
    %253 = vector.broadcast %252 : vector<16x1xf32> to vector<16x128xf32>
    %254 = arith.subf %244, %253 : vector<16x128xf32>
    %255 = arith.mulf %254, %254 : vector<16x128xf32>
    %cst_153 = arith.constant dense<0.000000e+00> : vector<16xf32>
    %256 = vector.multi_reduction <add>, %255, %cst_153 [1] : vector<16x128xf32> to vector<16xf32>
    %257 = vector.shape_cast %256 : vector<16xf32> to vector<16x1xf32>
    %cst_154 = arith.constant 1.280000e+02 : f32
    %258 = vector.broadcast %cst_154 : f32 to vector<16x1xf32>
    %259 = arith.divf %257, %258 : vector<16x1xf32>
    %260 = vector.broadcast %252 : vector<16x1xf32> to vector<16x128xf32>
    %261 = arith.subf %244, %260 : vector<16x128xf32>
    %cst_155 = arith.constant 9.99999974E-6 : f32
    %262 = vector.broadcast %cst_155 : f32 to vector<16x1xf32>
    %263 = arith.addf %259, %262 : vector<16x1xf32>
    %264 = math.rsqrt %263 : vector<16x1xf32>
    %265 = vector.broadcast %264 : vector<16x1xf32> to vector<16x128xf32>
    %266 = arith.mulf %261, %265 : vector<16x128xf32>
    %267 = vector.broadcast %246 : vector<1x128xf32> to vector<16x128xf32>
    %268 = arith.mulf %266, %267 : vector<16x128xf32>
    %269 = vector.broadcast %248 : vector<1x128xf32> to vector<16x128xf32>
    %270 = arith.addf %268, %269 : vector<16x128xf32>
    %c3 = arith.constant 3 : index
    %c0_156 = arith.constant 0 : index
    %c0_157 = arith.constant 0 : index
    %271 = vector.load %arg4[%c3, %c0_156, %c0_157] : memref<4x128x128xbf16, #tpu.memory_space<vmem>>, vector<1x128x128xbf16>
    %272 = vector.shape_cast %271 : vector<1x128x128xbf16> to vector<128x128xbf16>
    %273 = arith.truncf %270 : vector<16x128xf32> to vector<16x128xbf16>
    %cst_158 = arith.constant dense<0.000000e+00> : vector<16x128xf32>
    %274 = tpu.matmul %273, %272, %cst_158 {dimension_numbers = #tpu.dot_dimension_numbers<[1], [0], [0], [1], [0, 0, 1, 1], [], []>} : vector<16x128xbf16>, vector<128x128xbf16>, vector<16x128xf32> -> vector<16x128xf32>
    %c3_159 = arith.constant 3 : index
    %c0_160 = arith.constant 0 : index
    %c0_161 = arith.constant 0 : index
    %275 = vector.load %arg5[%c3_159, %c0_160, %c0_161] : memref<4x1x128xf32, #tpu.memory_space<vmem>>, vector<1x1x128xf32>
    %276 = vector.shape_cast %275 : vector<1x1x128xf32> to vector<1x128xf32>
    %277 = vector.broadcast %276 : vector<1x128xf32> to vector<16x128xf32>
    %278 = arith.addf %274, %277 : vector<16x128xf32>
    %c3_162 = arith.constant 3 : index
    %c0_163 = arith.constant 0 : index
    %c0_164 = arith.constant 0 : index
    %279 = vector.load %arg6[%c3_162, %c0_163, %c0_164] : memref<4x128x128xbf16, #tpu.memory_space<vmem>>, vector<1x128x128xbf16>
    %280 = vector.shape_cast %279 : vector<1x128x128xbf16> to vector<128x128xbf16>
    %281 = arith.truncf %278 : vector<16x128xf32> to vector<16x128xbf16>
    %cst_165 = arith.constant dense<0.000000e+00> : vector<16x128xf32>
    %282 = tpu.matmul %281, %280, %cst_165 {dimension_numbers = #tpu.dot_dimension_numbers<[1], [0], [0], [1], [0, 0, 1, 1], [], []>} : vector<16x128xbf16>, vector<128x128xbf16>, vector<16x128xf32> -> vector<16x128xf32>
    %c3_166 = arith.constant 3 : index
    %c0_167 = arith.constant 0 : index
    %c0_168 = arith.constant 0 : index
    %283 = vector.load %arg7[%c3_166, %c0_167, %c0_168] : memref<4x1x128xf32, #tpu.memory_space<vmem>>, vector<1x1x128xf32>
    %284 = vector.shape_cast %283 : vector<1x1x128xf32> to vector<1x128xf32>
    %285 = vector.broadcast %284 : vector<1x128xf32> to vector<16x128xf32>
    %286 = arith.addf %282, %285 : vector<16x128xf32>
    %287 = arith.addf %270, %286 : vector<16x128xf32>
    %c3_169 = arith.constant 3 : index
    %c0_170 = arith.constant 0 : index
    %c0_171 = arith.constant 0 : index
    %288 = vector.load %arg8[%c3_169, %c0_170, %c0_171] : memref<4x1x128xf32, #tpu.memory_space<vmem>>, vector<1x1x128xf32>
    %289 = vector.shape_cast %288 : vector<1x1x128xf32> to vector<1x128xf32>
    %c3_172 = arith.constant 3 : index
    %c0_173 = arith.constant 0 : index
    %c0_174 = arith.constant 0 : index
    %290 = vector.load %arg9[%c3_172, %c0_173, %c0_174] : memref<4x1x128xf32, #tpu.memory_space<vmem>>, vector<1x1x128xf32>
    %291 = vector.shape_cast %290 : vector<1x1x128xf32> to vector<1x128xf32>
    %cst_175 = arith.constant dense<0.000000e+00> : vector<16xf32>
    %292 = vector.multi_reduction <add>, %287, %cst_175 [1] : vector<16x128xf32> to vector<16xf32>
    %293 = vector.shape_cast %292 : vector<16xf32> to vector<16x1xf32>
    %cst_176 = arith.constant 1.280000e+02 : f32
    %294 = vector.broadcast %cst_176 : f32 to vector<16x1xf32>
    %295 = arith.divf %293, %294 : vector<16x1xf32>
    %296 = vector.broadcast %295 : vector<16x1xf32> to vector<16x128xf32>
    %297 = arith.subf %287, %296 : vector<16x128xf32>
    %298 = arith.mulf %297, %297 : vector<16x128xf32>
    %cst_177 = arith.constant dense<0.000000e+00> : vector<16xf32>
    %299 = vector.multi_reduction <add>, %298, %cst_177 [1] : vector<16x128xf32> to vector<16xf32>
    %300 = vector.shape_cast %299 : vector<16xf32> to vector<16x1xf32>
    %cst_178 = arith.constant 1.280000e+02 : f32
    %301 = vector.broadcast %cst_178 : f32 to vector<16x1xf32>
    %302 = arith.divf %300, %301 : vector<16x1xf32>
    %303 = vector.broadcast %295 : vector<16x1xf32> to vector<16x128xf32>
    %304 = arith.subf %287, %303 : vector<16x128xf32>
    %cst_179 = arith.constant 9.99999974E-6 : f32
    %305 = vector.broadcast %cst_179 : f32 to vector<16x1xf32>
    %306 = arith.addf %302, %305 : vector<16x1xf32>
    %307 = math.rsqrt %306 : vector<16x1xf32>
    %308 = vector.broadcast %307 : vector<16x1xf32> to vector<16x128xf32>
    %309 = arith.mulf %304, %308 : vector<16x128xf32>
    %310 = vector.broadcast %289 : vector<1x128xf32> to vector<16x128xf32>
    %311 = arith.mulf %309, %310 : vector<16x128xf32>
    %312 = vector.broadcast %291 : vector<1x128xf32> to vector<16x128xf32>
    %313 = arith.addf %311, %312 : vector<16x128xf32>
    %c3_180 = arith.constant 3 : index
    %c0_181 = arith.constant 0 : index
    %c0_182 = arith.constant 0 : index
    %314 = vector.load %arg10[%c3_180, %c0_181, %c0_182] : memref<4x128x256xbf16, #tpu.memory_space<vmem>>, vector<1x128x256xbf16>
    %315 = vector.shape_cast %314 : vector<1x128x256xbf16> to vector<128x256xbf16>
    %316 = arith.truncf %313 : vector<16x128xf32> to vector<16x128xbf16>
    %cst_183 = arith.constant dense<0.000000e+00> : vector<16x256xf32>
    %317 = tpu.matmul %316, %315, %cst_183 {dimension_numbers = #tpu.dot_dimension_numbers<[1], [0], [0], [1], [0, 0, 1, 1], [], []>} : vector<16x128xbf16>, vector<128x256xbf16>, vector<16x256xf32> -> vector<16x256xf32>
    %c3_184 = arith.constant 3 : index
    %c0_185 = arith.constant 0 : index
    %c0_186 = arith.constant 0 : index
    %318 = vector.load %arg11[%c3_184, %c0_185, %c0_186] : memref<4x1x256xf32, #tpu.memory_space<vmem>>, vector<1x1x256xf32>
    %319 = vector.shape_cast %318 : vector<1x1x256xf32> to vector<1x256xf32>
    %320 = vector.broadcast %319 : vector<1x256xf32> to vector<16x256xf32>
    %321 = arith.addf %317, %320 : vector<16x256xf32>
    %cst_187 = arith.constant 0.000000e+00 : f32
    %322 = vector.broadcast %cst_187 : f32 to vector<16x256xf32>
    %323 = arith.maximumf %321, %322 : vector<16x256xf32>
    %c3_188 = arith.constant 3 : index
    %c0_189 = arith.constant 0 : index
    %c0_190 = arith.constant 0 : index
    %324 = vector.load %arg12[%c3_188, %c0_189, %c0_190] : memref<4x256x128xbf16, #tpu.memory_space<vmem>>, vector<1x256x128xbf16>
    %325 = vector.shape_cast %324 : vector<1x256x128xbf16> to vector<256x128xbf16>
    %326 = arith.truncf %323 : vector<16x256xf32> to vector<16x256xbf16>
    %cst_191 = arith.constant dense<0.000000e+00> : vector<16x128xf32>
    %327 = tpu.matmul %326, %325, %cst_191 {dimension_numbers = #tpu.dot_dimension_numbers<[1], [0], [0], [1], [0, 0, 1, 1], [], []>} : vector<16x256xbf16>, vector<256x128xbf16>, vector<16x128xf32> -> vector<16x128xf32>
    %c3_192 = arith.constant 3 : index
    %c0_193 = arith.constant 0 : index
    %c0_194 = arith.constant 0 : index
    %328 = vector.load %arg13[%c3_192, %c0_193, %c0_194] : memref<4x1x128xf32, #tpu.memory_space<vmem>>, vector<1x1x128xf32>
    %329 = vector.shape_cast %328 : vector<1x1x128xf32> to vector<1x128xf32>
    %330 = vector.broadcast %329 : vector<1x128xf32> to vector<16x128xf32>
    %331 = arith.addf %327, %330 : vector<16x128xf32>
    %332 = arith.addf %313, %331 : vector<16x128xf32>
    %c3_195 = arith.constant 3 : index
    %c0_196 = arith.constant 0 : index
    %c0_197 = arith.constant 0 : index
    %333 = vector.load %arg14[%c3_195, %c0_196, %c0_197] : memref<4x1x128xf32, #tpu.memory_space<vmem>>, vector<1x1x128xf32>
    %334 = vector.shape_cast %333 : vector<1x1x128xf32> to vector<1x128xf32>
    %c3_198 = arith.constant 3 : index
    %c0_199 = arith.constant 0 : index
    %c0_200 = arith.constant 0 : index
    %335 = vector.load %arg15[%c3_198, %c0_199, %c0_200] : memref<4x1x128xf32, #tpu.memory_space<vmem>>, vector<1x1x128xf32>
    %336 = vector.shape_cast %335 : vector<1x1x128xf32> to vector<1x128xf32>
    %cst_201 = arith.constant dense<0.000000e+00> : vector<16xf32>
    %337 = vector.multi_reduction <add>, %332, %cst_201 [1] : vector<16x128xf32> to vector<16xf32>
    %338 = vector.shape_cast %337 : vector<16xf32> to vector<16x1xf32>
    %cst_202 = arith.constant 1.280000e+02 : f32
    %339 = vector.broadcast %cst_202 : f32 to vector<16x1xf32>
    %340 = arith.divf %338, %339 : vector<16x1xf32>
    %341 = vector.broadcast %340 : vector<16x1xf32> to vector<16x128xf32>
    %342 = arith.subf %332, %341 : vector<16x128xf32>
    %343 = arith.mulf %342, %342 : vector<16x128xf32>
    %cst_203 = arith.constant dense<0.000000e+00> : vector<16xf32>
    %344 = vector.multi_reduction <add>, %343, %cst_203 [1] : vector<16x128xf32> to vector<16xf32>
    %345 = vector.shape_cast %344 : vector<16xf32> to vector<16x1xf32>
    %cst_204 = arith.constant 1.280000e+02 : f32
    %346 = vector.broadcast %cst_204 : f32 to vector<16x1xf32>
    %347 = arith.divf %345, %346 : vector<16x1xf32>
    %348 = vector.broadcast %340 : vector<16x1xf32> to vector<16x128xf32>
    %349 = arith.subf %332, %348 : vector<16x128xf32>
    %cst_205 = arith.constant 9.99999974E-6 : f32
    %350 = vector.broadcast %cst_205 : f32 to vector<16x1xf32>
    %351 = arith.addf %347, %350 : vector<16x1xf32>
    %352 = math.rsqrt %351 : vector<16x1xf32>
    %353 = vector.broadcast %352 : vector<16x1xf32> to vector<16x128xf32>
    %354 = arith.mulf %349, %353 : vector<16x128xf32>
    %355 = vector.broadcast %334 : vector<1x128xf32> to vector<16x128xf32>
    %356 = arith.mulf %354, %355 : vector<16x128xf32>
    %357 = vector.broadcast %336 : vector<1x128xf32> to vector<16x128xf32>
    %358 = arith.addf %356, %357 : vector<16x128xf32>
    %c0_206 = arith.constant 0 : index
    %c0_207 = arith.constant 0 : index
    %359 = vector.load %arg16[%c0_206, %c0_207] : memref<128x64xbf16, #tpu.memory_space<vmem>>, vector<128x64xbf16>
    %360 = arith.truncf %358 : vector<16x128xf32> to vector<16x128xbf16>
    %cst_208 = arith.constant dense<0.000000e+00> : vector<16x64xf32>
    %361 = tpu.matmul %360, %359, %cst_208 {dimension_numbers = #tpu.dot_dimension_numbers<[1], [0], [0], [1], [0, 0, 1, 1], [], []>} : vector<16x128xbf16>, vector<128x64xbf16>, vector<16x64xf32> -> vector<16x64xf32>
    %c0_209 = arith.constant 0 : index
    %c0_210 = arith.constant 0 : index
    %362 = vector.load %arg17[%c0_209, %c0_210] : memref<1x64xf32, #tpu.memory_space<vmem>>, vector<1x64xf32>
    %363 = vector.broadcast %362 : vector<1x64xf32> to vector<16x64xf32>
    %364 = arith.addf %361, %363 : vector<16x64xf32>
    %cst_211 = arith.constant 0.000000e+00 : f32
    %365 = vector.broadcast %cst_211 : f32 to vector<16x64xf32>
    %366 = arith.maximumf %364, %365 : vector<16x64xf32>
    %c0_212 = arith.constant 0 : index
    %c0_213 = arith.constant 0 : index
    %367 = vector.load %arg18[%c0_212, %c0_213] : memref<64x128xbf16, #tpu.memory_space<vmem>>, vector<64x128xbf16>
    %368 = arith.truncf %366 : vector<16x64xf32> to vector<16x64xbf16>
    %cst_214 = arith.constant dense<0.000000e+00> : vector<16x128xf32>
    %369 = tpu.matmul %368, %367, %cst_214 {dimension_numbers = #tpu.dot_dimension_numbers<[1], [0], [0], [1], [0, 0, 1, 1], [], []>} : vector<16x64xbf16>, vector<64x128xbf16>, vector<16x128xf32> -> vector<16x128xf32>
    %c0_215 = arith.constant 0 : index
    %c0_216 = arith.constant 0 : index
    %370 = vector.load %arg19[%c0_215, %c0_216] : memref<1x128xf32, #tpu.memory_space<vmem>>, vector<1x128xf32>
    %371 = vector.broadcast %370 : vector<1x128xf32> to vector<16x128xf32>
    %372 = arith.addf %369, %371 : vector<16x128xf32>
    %c0_217 = arith.constant 0 : index
    %c0_218 = arith.constant 0 : index
    %373 = vector.load %arg20[%c0_217, %c0_218] : memref<16x128xf32, #tpu.memory_space<vmem>>, vector<16x128xf32>
    tpu.vector_store %arg20[%c0_217, %c0_218], %372 {strides = array<i32>} : memref<16x128xf32, #tpu.memory_space<vmem>>, vector<16x128xf32>,
    return
  }
  func.func @transform_0(%arg0: i32) -> (i32, i32) {
    %c0_i32 = arith.constant 0 : i32
    %c0_i32_0 = arith.constant 0 : i32
    return %arg0, %c0_i32 : i32, i32
  }
  func.func @transform_1(%arg0: i32) -> (i32, i32) {
    %c0_i32 = arith.constant 0 : i32
    %c0_i32_0 = arith.constant 0 : i32
    %c0_i32_1 = arith.constant 0 : i32
    return %c0_i32, %c0_i32_0 : i32, i32
  }
  func.func @transform_2(%arg0: i32) -> (i32, i32) {
    %c0_i32 = arith.constant 0 : i32
    %c0_i32_0 = arith.constant 0 : i32
    %c0_i32_1 = arith.constant 0 : i32
    return %c0_i32, %c0_i32_0 : i32, i32
  }
  func.func @transform_3(%arg0: i32) -> (i32, i32, i32) {
    %c0_i32 = arith.constant 0 : i32
    %c0_i32_0 = arith.constant 0 : i32
    %c0_i32_1 = arith.constant 0 : i32
    %c0_i32_2 = arith.constant 0 : i32
    return %c0_i32, %c0_i32_0, %c0_i32_1 : i32, i32, i32
  }
  func.func @transform_4(%arg0: i32) -> (i32, i32, i32) {
    %c0_i32 = arith.constant 0 : i32
    %c0_i32_0 = arith.constant 0 : i32
    %c0_i32_1 = arith.constant 0 : i32
    %c0_i32_2 = arith.constant 0 : i32
    return %c0_i32, %c0_i32_0, %c0_i32_1 : i32, i32, i32
  }
  func.func @transform_5(%arg0: i32) -> (i32, i32, i32) {
    %c0_i32 = arith.constant 0 : i32
    %c0_i32_0 = arith.constant 0 : i32
    %c0_i32_1 = arith.constant 0 : i32
    %c0_i32_2 = arith.constant 0 : i32
    return %c0_i32, %c0_i32_0, %c0_i32_1 : i32, i32, i32
  }
  func.func @transform_6(%arg0: i32) -> (i32, i32, i32) {
    %c0_i32 = arith.constant 0 : i32
    %c0_i32_0 = arith.constant 0 : i32
    %c0_i32_1 = arith.constant 0 : i32
    %c0_i32_2 = arith.constant 0 : i32
    return %c0_i32, %c0_i32_0, %c0_i32_1 : i32, i32, i32
  }
  func.func @transform_7(%arg0: i32) -> (i32, i32, i32) {
    %c0_i32 = arith.constant 0 : i32
    %c0_i32_0 = arith.constant 0 : i32
    %c0_i32_1 = arith.constant 0 : i32
    %c0_i32_2 = arith.constant 0 : i32
    return %c0_i32, %c0_i32_0, %c0_i32_1 : i32, i32, i32
  }
  func.func @transform_8(%arg0: i32) -> (i32, i32, i32) {
    %c0_i32 = arith.constant 0 : i32
    %c0_i32_0 = arith.constant 0 : i32
    %c0_i32_1 = arith.constant 0 : i32
    %c0_i32_2 = arith.constant 0 : i32
    return %c0_i32, %c0_i32_0, %c0_i32_1 : i32, i32, i32
  }
  func.func @transform_9(%arg0: i32) -> (i32, i32, i32) {
    %c0_i32 = arith.constant 0 : i32
    %c0_i32_0 = arith.constant 0 : i32
    %c0_i32_1 = arith.constant 0 : i32
    %c0_i32_2 = arith.constant 0 : i32
    return %c0_i32, %c0_i32_0, %c0_i32_1 : i32, i32, i32
  }
  func.func @transform_10(%arg0: i32) -> (i32, i32, i32) {
    %c0_i32 = arith.constant 0 : i32
    %c0_i32_0 = arith.constant 0 : i32
    %c0_i32_1 = arith.constant 0 : i32
    %c0_i32_2 = arith.constant 0 : i32
    return %c0_i32, %c0_i32_0, %c0_i32_1 : i32, i32, i32
  }
  func.func @transform_11(%arg0: i32) -> (i32, i32, i32) {
    %c0_i32 = arith.constant 0 : i32
    %c0_i32_0 = arith.constant 0 : i32
    %c0_i32_1 = arith.constant 0 : i32
    %c0_i32_2 = arith.constant 0 : i32
    return %c0_i32, %c0_i32_0, %c0_i32_1 : i32, i32, i32
  }
  func.func @transform_12(%arg0: i32) -> (i32, i32, i32) {
    %c0_i32 = arith.constant 0 : i32
    %c0_i32_0 = arith.constant 0 : i32
    %c0_i32_1 = arith.constant 0 : i32
    %c0_i32_2 = arith.constant 0 : i32
    return %c0_i32, %c0_i32_0, %c0_i32_1 : i32, i32, i32
  }
  func.func @transform_13(%arg0: i32) -> (i32, i32, i32) {
    %c0_i32 = arith.constant 0 : i32
    %c0_i32_0 = arith.constant 0 : i32
    %c0_i32_1 = arith.constant 0 : i32
    %c0_i32_2 = arith.constant 0 : i32
    return %c0_i32, %c0_i32_0, %c0_i32_1 : i32, i32, i32
  }
  func.func @transform_14(%arg0: i32) -> (i32, i32, i32) {
    %c0_i32 = arith.constant 0 : i32
    %c0_i32_0 = arith.constant 0 : i32
    %c0_i32_1 = arith.constant 0 : i32
    %c0_i32_2 = arith.constant 0 : i32
    return %c0_i32, %c0_i32_0, %c0_i32_1 : i32, i32, i32
  }
  func.func @transform_15(%arg0: i32) -> (i32, i32) {
    %c0_i32 = arith.constant 0 : i32
    %c0_i32_0 = arith.constant 0 : i32
    %c0_i32_1 = arith.constant 0 : i32
    return %c0_i32, %c0_i32_0 : i32, i32
  }
  func.func @transform_16(%arg0: i32) -> (i32, i32) {
    %c0_i32 = arith.constant 0 : i32
    %c0_i32_0 = arith.constant 0 : i32
    %c0_i32_1 = arith.constant 0 : i32
    return %c0_i32, %c0_i32_0 : i32, i32
  }
  func.func @transform_17(%arg0: i32) -> (i32, i32) {
    %c0_i32 = arith.constant 0 : i32
    %c0_i32_0 = arith.constant 0 : i32
    %c0_i32_1 = arith.constant 0 : i32
    return %c0_i32, %c0_i32_0 : i32, i32
  }
  func.func @transform_18(%arg0: i32) -> (i32, i32) {
    %c0_i32 = arith.constant 0 : i32
    %c0_i32_0 = arith.constant 0 : i32
    %c0_i32_1 = arith.constant 0 : i32
    return %c0_i32, %c0_i32_0 : i32, i32
  }
  func.func @transform_19(%arg0: i32) -> (i32, i32) {
    %c0_i32 = arith.constant 0 : i32
    %c0_i32_0 = arith.constant 0 : i32
    return %arg0, %c0_i32 : i32, i32
  }
}

</mosaic_0001>

<llo_original>
// kernel: tpu_custom_call.1
$region0: #{tpu_custom_call.1}
  #allocation0 [shape = 'u32[]', space=smem, size = 0x4, offset = 0x4, fixed_abs, tag = 'smem constant byte address 0x4 - core index']
  #allocation1 [shape = 'u32[144,128]{1,0:T(1,128)}', space=vmem, size = 0x12000, scoped, tag = 'internal scratch']
  %s0 = inlined_call_operand.vmem [shape: f32[16,64], index: 0, kind: input, shape index: {}]
  %s1 = inlined_call_operand.vmem [shape: bf16[64,128], index: 1, kind: input, shape index: {}]
  %s2 = inlined_call_operand.vmem [shape: f32[1,128], index: 2, kind: input, shape index: {}]
  %s3 = inlined_call_operand.hbm [shape: bf16[4,128,128], index: 3, kind: input, shape index: {}]
  %s4 = inlined_call_operand.vmem [shape: f32[4,1,128], index: 4, kind: input, shape index: {}]
  %s5 = inlined_call_operand.hbm [shape: bf16[4,128,128], index: 5, kind: input, shape index: {}]
  %s6 = inlined_call_operand.vmem [shape: f32[4,1,128], index: 6, kind: input, shape index: {}]
  %s7 = inlined_call_operand.vmem [shape: f32[4,1,128], index: 7, kind: input, shape index: {}]
  %s8 = inlined_call_operand.vmem [shape: f32[4,1,128], index: 8, kind: input, shape index: {}]
  %s9 = inlined_call_operand.hbm [shape: bf16[4,128,256], index: 9, kind: input, shape index: {}]
  %s10 = inlined_call_operand.vmem [shape: f32[4,1,256], index: 10, kind: input, shape index: {}]
  %s11 = inlined_call_operand.hbm [shape: bf16[4,256,128], index: 11, kind: input, shape index: {}]
  %s12 = inlined_call_operand.vmem [shape: f32[4,1,128], index: 12, kind: input, shape index: {}]
  %s13 = inlined_call_operand.vmem [shape: f32[4,1,128], index: 13, kind: input, shape index: {}]
  %s14 = inlined_call_operand.vmem [shape: f32[4,1,128], index: 14, kind: input, shape index: {}]
  %s15 = inlined_call_operand.vmem [shape: bf16[128,64], index: 15, kind: input, shape index: {}]
  %s16 = inlined_call_operand.vmem [shape: f32[1,64], index: 16, kind: input, shape index: {}]
  %s17 = inlined_call_operand.vmem [shape: bf16[64,128], index: 17, kind: input, shape index: {}]
  %s18 = inlined_call_operand.vmem [shape: f32[1,128], index: 18, kind: input, shape index: {}]
  %s19 = inlined_call_operand.hbm [shape: f32[16,128], index: 19, kind: output, shape index: {}]
  %s20 = sld [smem:[#allocation0]]
  $region102: #{tpu_custom_call.1} parent=0
    _
  %s22 = ssub.s32 1, %s20
  %s23 = scalar_select 0, %s22, %s20
  $region1: #{tpu_custom_call.1} parent=0
    #allocation2 [shape = 'u8[131072]{0}', space=vmem, size = 0x20000, scoped, tag = 'input window, operand 3, single buffered']
    #allocation3 [shape = 's32[1]{0}', space=sflag, size = 0x4, scoped, tag = 'scoped memory for tpu_custom_call.1']
    #allocation4 [shape = 's32[1]{0}', space=sflag, size = 0x4, scoped, tag = 'scoped memory for tpu_custom_call.1']
    #allocation5 [shape = 'u8[131072]{0}', space=vmem, size = 0x20000, scoped, tag = 'input window, operand 5, single buffered']
    #allocation6 [shape = 's32[1]{0}', space=sflag, size = 0x4, scoped, tag = 'scoped memory for tpu_custom_call.1']
    #allocation7 [shape = 'u8[262144]{0}', space=vmem, size = 0x40000, scoped, tag = 'input window, operand 9, single buffered']
    #allocation8 [shape = 'u8[262144]{0}', space=vmem, size = 0x40000, scoped, tag = 'input window, operand 11, single buffered']
    #allocation9 [shape = 's32[1]{0}', space=sflag, size = 0x4, scoped, tag = 'scoped memory for tpu_custom_call.1']
    #allocation10 [shape = 'u8[8192]{0}', space=vmem, size = 0x2000, scoped, tag = 'output window, operand 0, single buffered']
    %24 = vsyncpa [#allocation3], 0
    %25 = vsyncpa [#allocation6], 0
    %26 = vsyncpa [#allocation9], 0
    %27 = vsyncpa [#allocation4], 0
    // Predicated region
    $region2: #{tpu_custom_call.1} parent=1 // pred_check
      _
    $region3: #{tpu_custom_call.1} parent=1 // pred_check_branch
      %29 = sbr.rel (0) target = $region5
    $region4: #{tpu_custom_call.1} parent=1 // pred_region
      _
    $region5: #{tpu_custom_call.1} parent=1 // pred_fallthru
      _
    // Predicated region
    $region6: #{tpu_custom_call.1} parent=1 // pred_check
      _
    $region7: #{tpu_custom_call.1} parent=1 // pred_check_branch
      %31 = sbr.rel (0) target = $region9
    $region8: #{tpu_custom_call.1} parent=1 // pred_region
      _
    $region9: #{tpu_custom_call.1} parent=1 // pred_fallthru
      _
    // Predicated region
    $region10: #{tpu_custom_call.1} parent=1 // pred_check
      _
    $region11: #{tpu_custom_call.1} parent=1 // pred_check_branch
      %33 = sbr.rel (0) target = $region13
    $region12: #{tpu_custom_call.1} parent=1 // pred_region
      _
    $region13: #{tpu_custom_call.1} parent=1 // pred_fallthru
      _
    // Predicated region
    $region14: #{tpu_custom_call.1} parent=1 // pred_check
      _
    $region15: #{tpu_custom_call.1} parent=1 // pred_check_branch
      %35 = sbr.rel (0) target = $region17
    $region16: #{tpu_custom_call.1} parent=1 // pred_region
      %s37 = ssub.s32 4096, 4096
      %38 = vsyncadd [#allocation3], %s37
      %s39 = sshll.u32 [#allocation2], 4
      %s40 = int_to_ptr.vmem [resolvable:$true] %s39
      %45 = dma.hbm_to_vmem [thread:$0]  %s3, 4096, %s40, [#allocation3], 64, 64, 4
    $region17: #{tpu_custom_call.1} parent=1 // pred_fallthru
      _
    // Predicated region
    $region18: #{tpu_custom_call.1} parent=1 // pred_check
      _
    $region19: #{tpu_custom_call.1} parent=1 // pred_check_branch
      %47 = sbr.rel (0) target = $region21
    $region20: #{tpu_custom_call.1} parent=1 // pred_region
      _
    $region21: #{tpu_custom_call.1} parent=1 // pred_fallthru
      _
    // Predicated region
    $region22: #{tpu_custom_call.1} parent=1 // pred_check
      _
    $region23: #{tpu_custom_call.1} parent=1 // pred_check_branch
      %49 = sbr.rel (0) target = $region25
    $region24: #{tpu_custom_call.1} parent=1 // pred_region
      %s51 = ssub.s32 4096, 4096
      %52 = vsyncadd [#allocation6], %s51
      %s53 = sshll.u32 [#allocation5], 4
      %s54 = int_to_ptr.vmem [resolvable:$true] %s53
      %59 = dma.hbm_to_vmem [thread:$0]  %s5, 4096, %s54, [#allocation6], 64, 64, 4
    $region25: #{tpu_custom_call.1} parent=1 // pred_fallthru
      _
    // Predicated region
    $region26: #{tpu_custom_call.1} parent=1 // pred_check
      _
    $region27: #{tpu_custom_call.1} parent=1 // pred_check_branch
      %61 = sbr.rel (0) target = $region29
    $region28: #{tpu_custom_call.1} parent=1 // pred_region
      _
    $region29: #{tpu_custom_call.1} parent=1 // pred_fallthru
      _
    // Predicated region
    $region30: #{tpu_custom_call.1} parent=1 // pred_check
      _
    $region31: #{tpu_custom_call.1} parent=1 // pred_check_branch
      %63 = sbr.rel (0) target = $region33
    $region32: #{tpu_custom_call.1} parent=1 // pred_region
      _
    $region33: #{tpu_custom_call.1} parent=1 // pred_fallthru
      _
    // Predicated region
    $region34: #{tpu_custom_call.1} parent=1 // pred_check
      _
    $region35: #{tpu_custom_call.1} parent=1 // pred_check_branch
      %65 = sbr.rel (0) target = $region37
    $region36: #{tpu_custom_call.1} parent=1 // pred_region
      _
    $region37: #{tpu_custom_call.1} parent=1 // pred_fallthru
      _
    // Predicated region
    $region38: #{tpu_custom_call.1} parent=1 // pred_check
      _
    $region39: #{tpu_custom_call.1} parent=1 // pred_check_branch
      %67 = sbr.rel (0) target = $region41
    $region40: #{tpu_custom_call.1} parent=1 // pred_region
      %s69 = ssub.s32 8192, 8192
      %70 = vsyncadd [#allocation6], %s69
      %s71 = sshll.u32 [#allocation7], 4
      %s72 = int_to_ptr.vmem [resolvable:$true] %s71
      %77 = dma.hbm_to_vmem [thread:$0]  %s9, 8192, %s72, [#allocation6], 128, 128, 8
    $region41: #{tpu_custom_call.1} parent=1 // pred_fallthru
      _
    // Predicated region
    $region42: #{tpu_custom_call.1} parent=1 // pred_check
      _
    $region43: #{tpu_custom_call.1} parent=1 // pred_check_branch
      %79 = sbr.rel (0) target = $region45
    $region44: #{tpu_custom_call.1} parent=1 // pred_region
      _
    $region45: #{tpu_custom_call.1} parent=1 // pred_fallthru
      _
    // Predicated region
    $region46: #{tpu_custom_call.1} parent=1 // pred_check
      _
    $region47: #{tpu_custom_call.1} parent=1 // pred_check_branch
      %81 = sbr.rel (0) target = $region49
    $region48: #{tpu_custom_call.1} parent=1 // pred_region
      %s83 = ssub.s32 8192, 8192
      %84 = vsyncadd [#allocation9], %s83
      %s85 = sshll.u32 [#allocation8], 4
      %s86 = int_to_ptr.vmem [resolvable:$true] %s85
      %91 = dma.hbm_to_vmem [thread:$0]  %s11, 8192, %s86, [#allocation9], 64, 64, 4
    $region49: #{tpu_custom_call.1} parent=1 // pred_fallthru
      _
    // Predicated region
    $region50: #{tpu_custom_call.1} parent=1 // pred_check
      _
    $region51: #{tpu_custom_call.1} parent=1 // pred_check_branch
      %93 = sbr.rel (0) target = $region53
    $region52: #{tpu_custom_call.1} parent=1 // pred_region
      _
    $region53: #{tpu_custom_call.1} parent=1 // pred_fallthru
      _
    // Predicated region
    $region54: #{tpu_custom_call.1} parent=1 // pred_check
      _
    $region55: #{tpu_custom_call.1} parent=1 // pred_check_branch
      %95 = sbr.rel (0) target = $region57
    $region56: #{tpu_custom_call.1} parent=1 // pred_region
      _
    $region57: #{tpu_custom_call.1} parent=1 // pred_fallthru
      _
    // Predicated region
    $region58: #{tpu_custom_call.1} parent=1 // pred_check
      _
    $region59: #{tpu_custom_call.1} parent=1 // pred_check_branch
      %97 = sbr.rel (0) target = $region61
    $region60: #{tpu_custom_call.1} parent=1 // pred_region
      _
    $region61: #{tpu_custom_call.1} parent=1 // pred_fallthru
      _
    // Predicated region
    $region62: #{tpu_custom_call.1} parent=1 // pred_check
      _
    $region63: #{tpu_custom_call.1} parent=1 // pred_check_branch
      %99 = sbr.rel (0) target = $region65
    $region64: #{tpu_custom_call.1} parent=1 // pred_region
      _
    $region65: #{tpu_custom_call.1} parent=1 // pred_fallthru
      _
    // Predicated region
    $region66: #{tpu_custom_call.1} parent=1 // pred_check
      _
    $region67: #{tpu_custom_call.1} parent=1 // pred_check_branch
      %101 = sbr.rel (0) target = $region69
    $region68: #{tpu_custom_call.1} parent=1 // pred_region
      _
    $region69: #{tpu_custom_call.1} parent=1 // pred_fallthru
      _
    // Predicated region
    $region70: #{tpu_custom_call.1} parent=1 // pred_check
      _
    $region71: #{tpu_custom_call.1} parent=1 // pred_check_branch
      %103 = sbr.rel (0) target = $region73
    $region72: #{tpu_custom_call.1} parent=1 // pred_region
      _
    $region73: #{tpu_custom_call.1} parent=1 // pred_fallthru
      _
    // Predicated region
    $region74: #{tpu_custom_call.1} parent=1 // pred_check
      _
    $region75: #{tpu_custom_call.1} parent=1 // pred_check_branch
      %105 = sbr.rel (0) target = $region77
    $region76: #{tpu_custom_call.1} parent=1 // pred_region
      _
    $region77: #{tpu_custom_call.1} parent=1 // pred_fallthru
      _
    // Predicated region
    $region78: #{tpu_custom_call.1} parent=1 // pred_check
      _
    $region79: #{tpu_custom_call.1} parent=1 // pred_check_branch
      %107 = sbr.rel (0) target = $region81
    $region80: #{tpu_custom_call.1} parent=1 // pred_region
      %108 = dma.done [#allocation3], 4096
    $region81: #{tpu_custom_call.1} parent=1 // pred_fallthru
      _
    // Predicated region
    $region82: #{tpu_custom_call.1} parent=1 // pred_check
      _
    $region83: #{tpu_custom_call.1} parent=1 // pred_check_branch
      %110 = sbr.rel (0) target = $region85
    $region84: #{tpu_custom_call.1} parent=1 // pred_region
      %111 = dma.done [#allocation6], 4096
    $region85: #{tpu_custom_call.1} parent=1 // pred_fallthru
      _
    // Predicated region
    $region86: #{tpu_custom_call.1} parent=1 // pred_check
      _
    $region87: #{tpu_custom_call.1} parent=1 // pred_check_branch
      %113 = sbr.rel (0) target = $region89
    $region88: #{tpu_custom_call.1} parent=1 // pred_region
      %114 = dma.done [#allocation6], 8192
    $region89: #{tpu_custom_call.1} parent=1 // pred_fallthru
      _
    // Predicated region
    $region90: #{tpu_custom_call.1} parent=1 // pred_check
      _
    $region91: #{tpu_custom_call.1} parent=1 // pred_check_branch
      %116 = sbr.rel (0) target = $region93
    $region92: #{tpu_custom_call.1} parent=1 // pred_region
      %117 = dma.done [#allocation9], 8192
    $region93: #{tpu_custom_call.1} parent=1 // pred_fallthru
      _
    %v119 = vld [vmem:[%s0] sm:$0xff]
    %v120 = vld [vmem:[%s0 + $0x8] sm:$0xff]
    %v121 = vld [vmem:[%s1] sm:$0xf]
    %v122 = vld [vmem:[%s1 + $0x4] sm:$0xf]
    %v123 = vld [vmem:[%s1 + $0x8] sm:$0xf]
    %v124 = vld [vmem:[%s1 + $0xc] sm:$0xf]
    %v125 = vld [vmem:[%s1 + $0x10] sm:$0xf]
    %v126 = vld [vmem:[%s1 + $0x14] sm:$0xf]
    %v127 = vld [vmem:[%s1 + $0x18] sm:$0xf]
    %v128 = vld [vmem:[%s1 + $0x1c] sm:$0xf]
    %v129 = vpack.c.bf16 %v120, %v119
    %v130 = vld [vmem:[%s2] sm:$0x1]
    %v132 = vlaneseq
    %v133 = vshrl.u32 %v132, 7
    %v134 = vsub.s32 0, %v133
    %v135 = vrot.slane %v130, %v134
    %v145 = vunpack.c.l.b16 %v121
    %v146 = vunpack.c.l.b16 %v122
    %v147 = vunpack.c.l.b16 %v123
    %v148 = vunpack.c.l.b16 %v124
    %v149 = vunpack.c.l.b16 %v125
    %v150 = vunpack.c.l.b16 %v126
    %v151 = vunpack.c.l.b16 %v127
    %v152 = vunpack.c.l.b16 %v128
    %v153 = vpack.c.b16 %v146, %v145
    %v154 = vpack.c.b16 %v148, %v147
    %v155 = vpack.c.b16 %v150, %v149
    %v156 = vpack.c.b16 %v152, %v151
    %vm161 = vcmask 523264
    %v163 = vsel %vm161, %v129, 0
    %165 = vmatprep.subr.bf16.mxu0 0
    %166 = vmatpush1.bf16.msra.mxu0 %v153
    %167 = vmatprep.subr.bf16.mxu0 0
    %168 = vmatpush1.bf16.msra.mxu0 %v154
    %169 = vmatprep.subr.bf16.mxu0 0
    %170 = vmatpush1.bf16.msra.mxu0 %v155
    %171 = vmatprep.subr.bf16.mxu0 0
    %172 = vmatpush1.bf16.msra.mxu0 %v156
    %173 = vmatprep.subr.bf16.mxu0 0
    %174 = vmatpush1.bf16.msra.mxu0 0
    %175 = vmatprep.subr.bf16.mxu0 0
    %176 = vmatpush1.bf16.msra.mxu0 0
    %177 = vmatprep.subr.bf16.mxu0 0
    %178 = vmatpush1.bf16.msra.mxu0 0
    %179 = vmatprep.subr.bf16.mxu0 0
    %180 = vmatpush1.bf16.msra.mxu0 0
    %181 = vmatprep.subr.bf16.mxu0 0
    %182 = vmatpush1.bf16.msra.mxu0 0
    %183 = vmatprep.subr.bf16.mxu0 0
    %184 = vmatpush1.bf16.msra.mxu0 0
    %185 = vmatprep.subr.bf16.mxu0 0
    %186 = vmatpush1.bf16.msra.mxu0 0
    %187 = vmatprep.subr.bf16.mxu0 0
    %188 = vmatpush1.bf16.msra.mxu0 0
    %189 = vmatprep.subr.bf16.mxu0 0
    %190 = vmatpush1.bf16.msra.mxu0 0
    %191 = vmatprep.subr.bf16.mxu0 0
    %192 = vmatpush1.bf16.msra.mxu0 0
    %193 = vmatprep.subr.bf16.mxu0 0
    %194 = vmatpush1.bf16.msra.mxu0 0
    %195 = vmatprep.subr.bf16.mxu0 0
    %196 = vmatpush1.bf16.msra.mxu0 0
    %197 = vmatprep.mubr.bf16.mxu0 0
    %198 = vmatmul.mubr.bf16.gmra.mrb[0].mxu0 %v163
    %v199 = vpop.f32.mrb[0].mxu0
    %v200 = vadd.f32 %v135, %v199
    %v201 = vpop.f32.mrb[0].mxu0
    %v202 = vpop.f32.mrb[0].mxu0
    %v203 = vadd.f32 %v135, %v202
    %v204 = vpop.f32.mrb[0].mxu0
    %205 = vdwg.mxu0
    %v206 = vld [vmem:[#allocation2] sm:$0xf]
    %v207 = vld [vmem:[#allocation2 + $0x4] sm:$0xf]
    %v208 = vld [vmem:[#allocation2 + $0x8] sm:$0xf]
    %v209 = vld [vmem:[#allocation2 + $0xc] sm:$0xf]
    %v210 = vld [vmem:[#allocation2 + $0x10] sm:$0xf]
    %v211 = vld [vmem:[#allocation2 + $0x14] sm:$0xf]
    %v212 = vld [vmem:[#allocation2 + $0x18] sm:$0xf]
    %v213 = vld [vmem:[#allocation2 + $0x1c] sm:$0xf]
    %v214 = vld [vmem:[#allocation2 + $0x20] sm:$0xf]
    %v215 = vld [vmem:[#allocation2 + $0x24] sm:$0xf]
    %v216 = vld [vmem:[#allocation2 + $0x28] sm:$0xf]
    %v217 = vld [vmem:[#allocation2 + $0x2c] sm:$0xf]
    %v218 = vld [vmem:[#allocation2 + $0x30] sm:$0xf]
    %v219 = vld [vmem:[#allocation2 + $0x34] sm:$0xf]
    %v220 = vld [vmem:[#allocation2 + $0x38] sm:$0xf]
    %v221 = vld [vmem:[#allocation2 + $0x3c] sm:$0xf]
    %v222 = vpack.c.bf16 %v203, %v200
    %v223 = vld [vmem:[%s4] sm:$0x1]
    %v225 = vlaneseq
    %v226 = vshrl.u32 %v225, 7
    %v227 = vsub.s32 0, %v226
    %v228 = vrot.slane %v223, %v227
    %v246 = vunpack.c.l.b16 %v206
    %v247 = vunpack.c.l.b16 %v207
    %v248 = vunpack.c.l.b16 %v208
    %v249 = vunpack.c.l.b16 %v209
    %v250 = vunpack.c.l.b16 %v210
    %v251 = vunpack.c.l.b16 %v211
    %v252 = vunpack.c.l.b16 %v212
    %v253 = vunpack.c.l.b16 %v213
    %v254 = vunpack.c.l.b16 %v214
    %v255 = vunpack.c.l.b16 %v215
    %v256 = vunpack.c.l.b16 %v216
    %v257 = vunpack.c.l.b16 %v217
    %v258 = vunpack.c.l.b16 %v218
    %v259 = vunpack.c.l.b16 %v219
    %v260 = vunpack.c.l.b16 %v220
    %v261 = vunpack.c.l.b16 %v221
    %v262 = vpack.c.b16 %v247, %v246
    %v263 = vpack.c.b16 %v249, %v248
    %v264 = vpack.c.b16 %v251, %v250
    %v265 = vpack.c.b16 %v253, %v252
    %v266 = vpack.c.b16 %v255, %v254
    %v267 = vpack.c.b16 %v257, %v256
    %v268 = vpack.c.b16 %v259, %v258
    %v269 = vpack.c.b16 %v261, %v260
    %278 = vmatprep.subr.bf16.mxu0 0
    %279 = vmatpush1.bf16.msra.mxu0 %v262
    %280 = vmatprep.subr.bf16.mxu0 0
    %281 = vmatpush1.bf16.msra.mxu0 %v263
    %282 = vmatprep.subr.bf16.mxu0 0
    %283 = vmatpush1.bf16.msra.mxu0 %v264
    %284 = vmatprep.subr.bf16.mxu0 0
    %285 = vmatpush1.bf16.msra.mxu0 %v265
    %286 = vmatprep.subr.bf16.mxu0 0
    %287 = vmatpush1.bf16.msra.mxu0 %v266
    %288 = vmatprep.subr.bf16.mxu0 0
    %289 = vmatpush1.bf16.msra.mxu0 %v267
    %290 = vmatprep.subr.bf16.mxu0 0
    %291 = vmatpush1.bf16.msra.mxu0 %v268
    %292 = vmatprep.subr.bf16.mxu0 0
    %293 = vmatpush1.bf16.msra.mxu0 %v269
    %294 = vmatprep.subr.bf16.mxu0 0
    %295 = vmatpush1.bf16.msra.mxu0 0
    %296 = vmatprep.subr.bf16.mxu0 0
    %297 = vmatpush1.bf16.msra.mxu0 0
    %298 = vmatprep.subr.bf16.mxu0 0
    %299 = vmatpush1.bf16.msra.mxu0 0
    %300 = vmatprep.subr.bf16.mxu0 0
    %301 = vmatpush1.bf16.msra.mxu0 0
    %302 = vmatprep.subr.bf16.mxu0 0
    %303 = vmatpush1.bf16.msra.mxu0 0
    %304 = vmatprep.subr.bf16.mxu0 0
    %305 = vmatpush1.bf16.msra.mxu0 0
    %306 = vmatprep.subr.bf16.mxu0 0
    %307 = vmatpush1.bf16.msra.mxu0 0
    %308 = vmatprep.subr.bf16.mxu0 0
    %309 = vmatpush1.bf16.msra.mxu0 0
    %310 = vmatprep.mubr.bf16.mxu0 0
    %311 = vmatmul.mubr.bf16.gmra.mrb[0].mxu0 %v222
    %v312 = vpop.f32.mrb[0].mxu0
    %v313 = vadd.f32 %v228, %v312
    %v314 = vpop.f32.mrb[0].mxu0
    %v315 = vpop.f32.mrb[0].mxu0
    %v316 = vadd.f32 %v228, %v315
    %v317 = vpop.f32.mrb[0].mxu0
    %318 = vdwg.mxu0
    %v319 = vld [vmem:[#allocation5] sm:$0xf]
    %v320 = vld [vmem:[#allocation5 + $0x4] sm:$0xf]
    %v321 = vld [vmem:[#allocation5 + $0x8] sm:$0xf]
    %v322 = vld [vmem:[#allocation5 + $0xc] sm:$0xf]
    %v323 = vld [vmem:[#allocation5 + $0x10] sm:$0xf]
    %v324 = vld [vmem:[#allocation5 + $0x14] sm:$0xf]
    %v325 = vld [vmem:[#allocation5 + $0x18] sm:$0xf]
    %v326 = vld [vmem:[#allocation5 + $0x1c] sm:$0xf]
    %v327 = vld [vmem:[#allocation5 + $0x20] sm:$0xf]
    %v328 = vld [vmem:[#allocation5 + $0x24] sm:$0xf]
    %v329 = vld [vmem:[#allocation5 + $0x28] sm:$0xf]
    %v330 = vld [vmem:[#allocation5 + $0x2c] sm:$0xf]
    %v331 = vld [vmem:[#allocation5 + $0x30] sm:$0xf]
    %v332 = vld [vmem:[#allocation5 + $0x34] sm:$0xf]
    %v333 = vld [vmem:[#allocation5 + $0x38] sm:$0xf]
    %v334 = vld [vmem:[#allocation5 + $0x3c] sm:$0xf]
    %v335 = vpack.c.bf16 %v316, %v313
    %v336 = vld [vmem:[%s6] sm:$0x1]
    %v338 = vlaneseq
    %v339 = vshrl.u32 %v338, 7
    %v340 = vsub.s32 0, %v339
    %v341 = vrot.slane %v336, %v340
    %v359 = vunpack.c.l.b16 %v319
    %v360 = vunpack.c.l.b16 %v320
    %v361 = vunpack.c.l.b16 %v321
    %v362 = vunpack.c.l.b16 %v322
    %v363 = vunpack.c.l.b16 %v323
    %v364 = vunpack.c.l.b16 %v324
    %v365 = vunpack.c.l.b16 %v325
    %v366 = vunpack.c.l.b16 %v326
    %v367 = vunpack.c.l.b16 %v327
    %v368 = vunpack.c.l.b16 %v328
    %v369 = vunpack.c.l.b16 %v329
    %v370 = vunpack.c.l.b16 %v330
    %v371 = vunpack.c.l.b16 %v331
    %v372 = vunpack.c.l.b16 %v332
    %v373 = vunpack.c.l.b16 %v333
    %v374 = vunpack.c.l.b16 %v334
    %v375 = vpack.c.b16 %v360, %v359
    %v376 = vpack.c.b16 %v362, %v361
    %v377 = vpack.c.b16 %v364, %v363
    %v378 = vpack.c.b16 %v366, %v365
    %v379 = vpack.c.b16 %v368, %v367
    %v380 = vpack.c.b16 %v370, %v369
    %v381 = vpack.c.b16 %v372, %v371
    %v382 = vpack.c.b16 %v374, %v373
    %391 = vmatprep.subr.bf16.mxu0 0
    %392 = vmatpush1.bf16.msra.mxu0 %v375
    %393 = vmatprep.subr.bf16.mxu0 0
    %394 = vmatpush1.bf16.msra.mxu0 %v376
    %395 = vmatprep.subr.bf16.mxu0 0
    %396 = vmatpush1.bf16.msra.mxu0 %v377
    %397 = vmatprep.subr.bf16.mxu0 0
    %398 = vmatpush1.bf16.msra.mxu0 %v378
    %399 = vmatprep.subr.bf16.mxu0 0
    %400 = vmatpush1.bf16.msra.mxu0 %v379
    %401 = vmatprep.subr.bf16.mxu0 0
    %402 = vmatpush1.bf16.msra.mxu0 %v380
    %403 = vmatprep.subr.bf16.mxu0 0
    %404 = vmatpush1.bf16.msra.mxu0 %v381
    %405 = vmatprep.subr.bf16.mxu0 0
    %406 = vmatpush1.bf16.msra.mxu0 %v382
    %407 = vmatprep.subr.bf16.mxu0 0
    %408 = vmatpush1.bf16.msra.mxu0 0
    %409 = vmatprep.subr.bf16.mxu0 0
    %410 = vmatpush1.bf16.msra.mxu0 0
    %411 = vmatprep.subr.bf16.mxu0 0
    %412 = vmatpush1.bf16.msra.mxu0 0
    %413 = vmatprep.subr.bf16.mxu0 0
    %414 = vmatpush1.bf16.msra.mxu0 0
    %415 = vmatprep.subr.bf16.mxu0 0
    %416 = vmatpush1.bf16.msra.mxu0 0
    %417 = vmatprep.subr.bf16.mxu0 0
    %418 = vmatpush1.bf16.msra.mxu0 0
    %419 = vmatprep.subr.bf16.mxu0 0
    %420 = vmatpush1.bf16.msra.mxu0 0
    %421 = vmatprep.subr.bf16.mxu0 0
    %422 = vmatpush1.bf16.msra.mxu0 0
    %423 = vmatprep.mubr.bf16.mxu0 0
    %424 = vmatmul.mubr.bf16.gmra.mrb[0].mxu0 %v335
    %v425 = vpop.f32.mrb[0].mxu0
    %v426 = vadd.f32 %v341, %v425
    %v427 = vpop.f32.mrb[0].mxu0
    %v428 = vpop.f32.mrb[0].mxu0
    %v429 = vadd.f32 %v341, %v428
    %v430 = vpop.f32.mrb[0].mxu0
    %431 = vdwg.mxu0
    %v432 = vadd.f32 %v200, %v426
    %v433 = vadd.f32 %v203, %v429
    %v434 = vld [vmem:[%s7] sm:$0x1]
    %v435 = vld [vmem:[%s8] sm:$0x1]
    %436 = vadd.xlane.f32.xlu0 %v432
    %v437 = vpop.xlane.xlu0 %436
    %438 = vadd.xlane.f32.xlu0 %v433
    %v439 = vpop.xlane.xlu0 %438
    %v440 = vrcp.pop 128.0
    %v441 = vmul.f32 %v437, %v440
    %v442 = vmul.f32 %v439, %v440
    %v443 = vsub.f32 %v432, %v441
    %v444 = vsub.f32 %v433, %v442
    %v445 = vmul.f32 %v443, %v443
    %v446 = vmul.f32 %v444, %v444
    %447 = vadd.xlane.f32.xlu0 %v445
    %v448 = vpop.xlane.xlu0 %447
    %449 = vadd.xlane.f32.xlu0 %v446
    %v450 = vpop.xlane.xlu0 %449
    %v451 = vmul.f32 %v448, %v440
    %v452 = vmul.f32 %v450, %v440
    %v453 = vadd.f32 %v451, 1e-05
    %v454 = vadd.f32 %v452, 1e-05
    %v455 = vrsqrt.pop %v453
    %v456 = vrsqrt.pop %v454
    %v457 = vmul.f32 %v443, %v455
    %v458 = vmul.f32 %v444, %v456
    %v460 = vlaneseq
    %v461 = vshrl.u32 %v460, 7
    %v462 = vsub.s32 0, %v461
    %v463 = vrot.slane %v434, %v462
    %v465 = vmul.f32 %v457, %v463
    %v466 = vmul.f32 %v458, %v463
    %v468 = vlaneseq
    %v469 = vshrl.u32 %v468, 7
    %v470 = vsub.s32 0, %v469
    %v471 = vrot.slane %v435, %v470
    %v473 = vadd.f32 %v465, %v471
    %v474 = vadd.f32 %v466, %v471
    %v475 = vld [vmem:[#allocation7] sm:$0xff]
    %v476 = vld [vmem:[#allocation7 + $0x8] sm:$0xff]
    %v477 = vld [vmem:[#allocation7 + $0x10] sm:$0xff]
    %v478 = vld [vmem:[#allocation7 + $0x18] sm:$0xff]
    %v479 = vld [vmem:[#allocation7 + $0x20] sm:$0xff]
    %v480 = vld [vmem:[#allocation7 + $0x28] sm:$0xff]
    %v481 = vld [vmem:[#allocation7 + $0x30] sm:$0xff]
    %v482 = vld [vmem:[#allocation7 + $0x38] sm:$0xff]
    %v483 = vld [vmem:[#allocation7 + $0x40] sm:$0xff]
    %v484 = vld [vmem:[#allocation7 + $0x48] sm:$0xff]
    %v485 = vld [vmem:[#allocation7 + $0x50] sm:$0xff]
    %v486 = vld [vmem:[#allocation7 + $0x58] sm:$0xff]
    %v487 = vld [vmem:[#allocation7 + $0x60] sm:$0xff]
    %v488 = vld [vmem:[#allocation7 + $0x68] sm:$0xff]
    %v489 = vld [vmem:[#allocation7 + $0x70] sm:$0xff]
    %v490 = vld [vmem:[#allocation7 + $0x78] sm:$0xff]
    %v491 = vpack.c.bf16 %v474, %v473
    %v492 = vld [vmem:[%s10] sm:$0x3]
    %v494 = vlaneseq
    %v495 = vshrl.u32 %v494, 7
    %v496 = vsub.s32 0, %v495
    %v497 = vrot.slane %v492, %v496
    %v498 = vlaneseq
    %v499 = vshrl.u32 %v498, 7
    %v500 = vsub.s32 1, %v499
    %v501 = vrot.slane %v492, %v500
    %v520 = vunpack.c.l.b16 %v475
    %v521 = vunpack.c.h.b16 %v475
    %v522 = vunpack.c.l.b16 %v476
    %v523 = vunpack.c.h.b16 %v476
    %v524 = vunpack.c.l.b16 %v477
    %v525 = vunpack.c.h.b16 %v477
    %v526 = vunpack.c.l.b16 %v478
    %v527 = vunpack.c.h.b16 %v478
    %v528 = vunpack.c.l.b16 %v479
    %v529 = vunpack.c.h.b16 %v479
    %v530 = vunpack.c.l.b16 %v480
    %v531 = vunpack.c.h.b16 %v480
    %v532 = vunpack.c.l.b16 %v481
    %v533 = vunpack.c.h.b16 %v481
    %v534 = vunpack.c.l.b16 %v482
    %v535 = vunpack.c.h.b16 %v482
    %v536 = vunpack.c.l.b16 %v483
    %v537 = vunpack.c.h.b16 %v483
    %v538 = vunpack.c.l.b16 %v484
    %v539 = vunpack.c.h.b16 %v484
    %v540 = vunpack.c.l.b16 %v485
    %v541 = vunpack.c.h.b16 %v485
    %v542 = vunpack.c.l.b16 %v486
    %v543 = vunpack.c.h.b16 %v486
    %v544 = vunpack.c.l.b16 %v487
    %v545 = vunpack.c.h.b16 %v487
    %v546 = vunpack.c.l.b16 %v488
    %v547 = vunpack.c.h.b16 %v488
    %v548 = vunpack.c.l.b16 %v489
    %v549 = vunpack.c.h.b16 %v489
    %v550 = vunpack.c.l.b16 %v490
    %v551 = vunpack.c.h.b16 %v490
    %v552 = vpack.c.b16 %v522, %v520
    %v553 = vpack.c.b16 %v523, %v521
    %v554 = vpack.c.b16 %v526, %v524
    %v555 = vpack.c.b16 %v527, %v525
    %v556 = vpack.c.b16 %v530, %v528
    %v557 = vpack.c.b16 %v531, %v529
    %v558 = vpack.c.b16 %v534, %v532
    %v559 = vpack.c.b16 %v535, %v533
    %v560 = vpack.c.b16 %v538, %v536
    %v561 = vpack.c.b16 %v539, %v537
    %v562 = vpack.c.b16 %v542, %v540
    %v563 = vpack.c.b16 %v543, %v541
    %v564 = vpack.c.b16 %v546, %v544
    %v565 = vpack.c.b16 %v547, %v545
    %v566 = vpack.c.b16 %v550, %v548
    %v567 = vpack.c.b16 %v551, %v549
    %584 = vmatprep.subr.bf16.mxu0 %v553
    %585 = vmatpush1.bf16.msra.mxu0 %v552
    %586 = vmatprep.subr.bf16.mxu0 %v555
    %587 = vmatpush1.bf16.msra.mxu0 %v554
    %588 = vmatprep.subr.bf16.mxu0 %v557
    %589 = vmatpush1.bf16.msra.mxu0 %v556
    %590 = vmatprep.subr.bf16.mxu0 %v559
    %591 = vmatpush1.bf16.msra.mxu0 %v558
    %592 = vmatprep.subr.bf16.mxu0 %v561
    %593 = vmatpush1.bf16.msra.mxu0 %v560
    %594 = vmatprep.subr.bf16.mxu0 %v563
    %595 = vmatpush1.bf16.msra.mxu0 %v562
    %596 = vmatprep.subr.bf16.mxu0 %v565
    %597 = vmatpush1.bf16.msra.mxu0 %v564
    %598 = vmatprep.subr.bf16.mxu0 %v567
    %599 = vmatpush1.bf16.msra.mxu0 %v566
    %600 = vmatprep.subr.bf16.mxu0 0
    %601 = vmatpush1.bf16.msra.mxu0 0
    %602 = vmatprep.subr.bf16.mxu0 0
    %603 = vmatpush1.bf16.msra.mxu0 0
    %604 = vmatprep.subr.bf16.mxu0 0
    %605 = vmatpush1.bf16.msra.mxu0 0
    %606 = vmatprep.subr.bf16.mxu0 0
    %607 = vmatpush1.bf16.msra.mxu0 0
    %608 = vmatprep.subr.bf16.mxu0 0
    %609 = vmatpush1.bf16.msra.mxu0 0
    %610 = vmatprep.subr.bf16.mxu0 0
    %611 = vmatpush1.bf16.msra.mxu0 0
    %612 = vmatprep.subr.bf16.mxu0 0
    %613 = vmatpush1.bf16.msra.mxu0 0
    %614 = vmatprep.subr.bf16.mxu0 0
    %615 = vmatpush1.bf16.msra.mxu0 0
    %616 = vmatprep.mubr.bf16.mxu0 0
    %617 = vmatmul.mubr.bf16.gmra.mrb[0].mxu0 %v491
    %v618 = vpop.f32.mrb[0].mxu0
    %v619 = vadd.f32 %v497, %v618
    %v620 = vpop.f32.mrb[0].mxu0
    %v621 = vadd.f32 %v501, %v620
    %v622 = vpop.f32.mrb[0].mxu0
    %v623 = vadd.f32 %v497, %v622
    %v624 = vpop.f32.mrb[0].mxu0
    %v625 = vadd.f32 %v501, %v624
    %626 = vdwg.mxu0
    %v627 = vmax.f32 %v619, 0.0
    %v628 = vmax.f32 %v621, 0.0
    %v629 = vmax.f32 %v623, 0.0
    %v630 = vmax.f32 %v625, 0.0
    %v631 = vld [vmem:[#allocation8] sm:$0xf]
    %v632 = vld [vmem:[#allocation8 + $0x4] sm:$0xf]
    %v633 = vld [vmem:[#allocation8 + $0x8] sm:$0xf]
    %v634 = vld [vmem:[#allocation8 + $0xc] sm:$0xf]
    %v635 = vld [vmem:[#allocation8 + $0x10] sm:$0xf]
    %v636 = vld [vmem:[#allocation8 + $0x14] sm:$0xf]
    %v637 = vld [vmem:[#allocation8 + $0x18] sm:$0xf]
    %v638 = vld [vmem:[#allocation8 + $0x1c] sm:$0xf]
    %v639 = vld [vmem:[#allocation8 + $0x20] sm:$0xf]
    %v640 = vld [vmem:[#allocation8 + $0x24] sm:$0xf]
    %v641 = vld [vmem:[#allocation8 + $0x28] sm:$0xf]
    %v642 = vld [vmem:[#allocation8 + $0x2c] sm:$0xf]
    %v643 = vld [vmem:[#allocation8 + $0x30] sm:$0xf]
    %v644 = vld [vmem:[#allocation8 + $0x34] sm:$0xf]
    %v645 = vld [vmem:[#allocation8 + $0x38] sm:$0xf]
    %v646 = vld [vmem:[#allocation8 + $0x3c] sm:$0xf]
    %v647 = vld [vmem:[#allocation8 + $0x40] sm:$0xf]
    %v648 = vld [vmem:[#allocation8 + $0x44] sm:$0xf]
    %v649 = vld [vmem:[#allocation8 + $0x48] sm:$0xf]
    %v650 = vld [vmem:[#allocation8 + $0x4c] sm:$0xf]
    %v651 = vld [vmem:[#allocation8 + $0x50] sm:$0xf]
    %v652 = vld [vmem:[#allocation8 + $0x54] sm:$0xf]
    %v653 = vld [vmem:[#allocation8 + $0x58] sm:$0xf]
    %v654 = vld [vmem:[#allocation8 + $0x5c] sm:$0xf]
    %v655 = vld [vmem:[#allocation8 + $0x60] sm:$0xf]
    %v656 = vld [vmem:[#allocation8 + $0x64] sm:$0xf]
    %v657 = vld [vmem:[#allocation8 + $0x68] sm:$0xf]
    %v658 = vld [vmem:[#allocation8 + $0x6c] sm:$0xf]
    %v659 = vld [vmem:[#allocation8 + $0x70] sm:$0xf]
    %v660 = vld [vmem:[#allocation8 + $0x74] sm:$0xf]
    %v661 = vld [vmem:[#allocation8 + $0x78] sm:$0xf]
    %v662 = vld [vmem:[#allocation8 + $0x7c] sm:$0xf]
    %v663 = vpack.c.bf16 %v629, %v627
    %v664 = vpack.c.bf16 %v630, %v628
    %v665 = vld [vmem:[%s12] sm:$0x1]
    %v667 = vlaneseq
    %v668 = vshrl.u32 %v667, 7
    %v669 = vsub.s32 0, %v668
    %v670 = vrot.slane %v665, %v669
    %v704 = vunpack.c.l.b16 %v631
    %v705 = vunpack.c.l.b16 %v632
    %v706 = vunpack.c.l.b16 %v633
    %v707 = vunpack.c.l.b16 %v634
    %v708 = vunpack.c.l.b16 %v635
    %v709 = vunpack.c.l.b16 %v636
    %v710 = vunpack.c.l.b16 %v637
    %v711 = vunpack.c.l.b16 %v638
    %v712 = vunpack.c.l.b16 %v639
    %v713 = vunpack.c.l.b16 %v640
    %v714 = vunpack.c.l.b16 %v641
    %v715 = vunpack.c.l.b16 %v642
    %v716 = vunpack.c.l.b16 %v643
    %v717 = vunpack.c.l.b16 %v644
    %v718 = vunpack.c.l.b16 %v645
    %v719 = vunpack.c.l.b16 %v646
    %v720 = vunpack.c.l.b16 %v647
    %v721 = vunpack.c.l.b16 %v648
    %v722 = vunpack.c.l.b16 %v649
    %v723 = vunpack.c.l.b16 %v650
    %v724 = vunpack.c.l.b16 %v651
    %v725 = vunpack.c.l.b16 %v652
    %v726 = vunpack.c.l.b16 %v653
    %v727 = vunpack.c.l.b16 %v654
    %v728 = vunpack.c.l.b16 %v655
    %v729 = vunpack.c.l.b16 %v656
    %v730 = vunpack.c.l.b16 %v657
    %v731 = vunpack.c.l.b16 %v658
    %v732 = vunpack.c.l.b16 %v659
    %v733 = vunpack.c.l.b16 %v660
    %v734 = vunpack.c.l.b16 %v661
    %v735 = vunpack.c.l.b16 %v662
    %v736 = vpack.c.b16 %v705, %v704
    %v737 = vpack.c.b16 %v707, %v706
    %v738 = vpack.c.b16 %v709, %v708
    %v739 = vpack.c.b16 %v711, %v710
    %v740 = vpack.c.b16 %v713, %v712
    %v741 = vpack.c.b16 %v715, %v714
    %v742 = vpack.c.b16 %v717, %v716
    %v743 = vpack.c.b16 %v719, %v718
    %v744 = vpack.c.b16 %v721, %v720
    %v745 = vpack.c.b16 %v723, %v722
    %v746 = vpack.c.b16 %v725, %v724
    %v747 = vpack.c.b16 %v727, %v726
    %v748 = vpack.c.b16 %v729, %v728
    %v749 = vpack.c.b16 %v731, %v730
    %v750 = vpack.c.b16 %v733, %v732
    %v751 = vpack.c.b16 %v735, %v734
    %768 = vmatprep.subr.bf16.mxu0 0
    %769 = vmatpush1.bf16.msra.mxu0 %v736
    %770 = vmatprep.subr.bf16.mxu0 0
    %771 = vmatpush1.bf16.msra.mxu0 %v737
    %772 = vmatprep.subr.bf16.mxu0 0
    %773 = vmatpush1.bf16.msra.mxu0 %v738
    %774 = vmatprep.subr.bf16.mxu0 0
    %775 = vmatpush1.bf16.msra.mxu0 %v739
    %776 = vmatprep.subr.bf16.mxu0 0
    %777 = vmatpush1.bf16.msra.mxu0 %v740
    %778 = vmatprep.subr.bf16.mxu0 0
    %779 = vmatpush1.bf16.msra.mxu0 %v741
    %780 = vmatprep.subr.bf16.mxu0 0
    %781 = vmatpush1.bf16.msra.mxu0 %v742
    %782 = vmatprep.subr.bf16.mxu0 0
    %783 = vmatpush1.bf16.msra.mxu0 %v743
    %784 = vmatprep.subr.bf16.mxu0 0
    %785 = vmatpush1.bf16.msra.mxu0 %v744
    %786 = vmatprep.subr.bf16.mxu0 0
    %787 = vmatpush1.bf16.msra.mxu0 %v745
    %788 = vmatprep.subr.bf16.mxu0 0
    %789 = vmatpush1.bf16.msra.mxu0 %v746
    %790 = vmatprep.subr.bf16.mxu0 0
    %791 = vmatpush1.bf16.msra.mxu0 %v747
    %792 = vmatprep.subr.bf16.mxu0 0
    %793 = vmatpush1.bf16.msra.mxu0 %v748
    %794 = vmatprep.subr.bf16.mxu0 0
    %795 = vmatpush1.bf16.msra.mxu0 %v749
    %796 = vmatprep.subr.bf16.mxu0 0
    %797 = vmatpush1.bf16.msra.mxu0 %v750
    %798 = vmatprep.subr.bf16.mxu0 0
    %799 = vmatpush1.bf16.msra.mxu0 %v751
    %800 = vmatprep.mubr.bf16.mxu0 %v664
    %801 = vmatmul.mubr.bf16.gmra.mrb[0].mxu0 %v663
    %v802 = vpop.f32.mrb[0].mxu0
    %v803 = vadd.f32 %v670, %v802
    %v804 = vpop.f32.mrb[0].mxu0
    %v805 = vpop.f32.mrb[0].mxu0
    %v806 = vadd.f32 %v670, %v805
    %v807 = vpop.f32.mrb[0].mxu0
    %808 = vdwg.mxu0
    %v809 = vadd.f32 %v473, %v803
    %v810 = vadd.f32 %v474, %v806
    %v811 = vld [vmem:[%s13] sm:$0x1]
    %v812 = vld [vmem:[%s14] sm:$0x1]
    %813 = vadd.xlane.f32.xlu0 %v809
    %v814 = vpop.xlane.xlu0 %813
    %815 = vadd.xlane.f32.xlu0 %v810
    %v816 = vpop.xlane.xlu0 %815
    %v817 = vmul.f32 %v814, %v440
    %v818 = vmul.f32 %v816, %v440
    %v819 = vsub.f32 %v809, %v817
    %v820 = vsub.f32 %v810, %v818
    %v821 = vmul.f32 %v819, %v819
    %v822 = vmul.f32 %v820, %v820
    %823 = vadd.xlane.f32.xlu0 %v821
    %v824 = vpop.xlane.xlu0 %823
    %825 = vadd.xlane.f32.xlu0 %v822
    %v826 = vpop.xlane.xlu0 %825
    %v827 = vmul.f32 %v824, %v440
    %v828 = vmul.f32 %v826, %v440
    %v829 = vadd.f32 %v827, 1e-05
    %v830 = vadd.f32 %v828, 1e-05
    %v831 = vrsqrt.pop %v829
    %v832 = vrsqrt.pop %v830
    %v833 = vmul.f32 %v819, %v831
    %v834 = vmul.f32 %v820, %v832
    %v836 = vlaneseq
    %v837 = vshrl.u32 %v836, 7
    %v838 = vsub.s32 0, %v837
    %v839 = vrot.slane %v811, %v838
    %v841 = vmul.f32 %v833, %v839
    %v842 = vmul.f32 %v834, %v839
    %v844 = vlaneseq
    %v845 = vshrl.u32 %v844, 7
    %v846 = vsub.s32 0, %v845
    %v847 = vrot.slane %v812, %v846
    %v849 = vadd.f32 %v841, %v847
    %v850 = vadd.f32 %v842, %v847
    %s851 = scalar_lea.vmem [#allocation2], 64
    %v852 = vld [vmem:[%s851] sm:$0xf]
    %v853 = vld [vmem:[%s851 + $0x4] sm:$0xf]
    %v854 = vld [vmem:[%s851 + $0x8] sm:$0xf]
    %v855 = vld [vmem:[%s851 + $0xc] sm:$0xf]
    %v856 = vld [vmem:[%s851 + $0x10] sm:$0xf]
    %v857 = vld [vmem:[%s851 + $0x14] sm:$0xf]
    %v858 = vld [vmem:[%s851 + $0x18] sm:$0xf]
    %v859 = vld [vmem:[%s851 + $0x1c] sm:$0xf]
    %v860 = vld [vmem:[%s851 + $0x20] sm:$0xf]
    %v861 = vld [vmem:[%s851 + $0x24] sm:$0xf]
    %v862 = vld [vmem:[%s851 + $0x28] sm:$0xf]
    %v863 = vld [vmem:[%s851 + $0x2c] sm:$0xf]
    %v864 = vld [vmem:[%s851 + $0x30] sm:$0xf]
    %v865 = vld [vmem:[%s851 + $0x34] sm:$0xf]
    %v866 = vld [vmem:[%s851 + $0x38] sm:$0xf]
    %v867 = vld [vmem:[%s851 + $0x3c] sm:$0xf]
    %v868 = vpack.c.bf16 %v850, %v849
    %s869 = scalar_lea.vmem %s4, 1
    %v870 = vld [vmem:[%s869] sm:$0x1]
    %v872 = vlaneseq
    %v873 = vshrl.u32 %v872, 7
    %v874 = vsub.s32 0, %v873
    %v875 = vrot.slane %v870, %v874
    %v893 = vunpack.c.l.b16 %v852
    %v894 = vunpack.c.l.b16 %v853
    %v895 = vunpack.c.l.b16 %v854
    %v896 = vunpack.c.l.b16 %v855
    %v897 = vunpack.c.l.b16 %v856
    %v898 = vunpack.c.l.b16 %v857
    %v899 = vunpack.c.l.b16 %v858
    %v900 = vunpack.c.l.b16 %v859
    %v901 = vunpack.c.l.b16 %v860
    %v902 = vunpack.c.l.b16 %v861
    %v903 = vunpack.c.l.b16 %v862
    %v904 = vunpack.c.l.b16 %v863
    %v905 = vunpack.c.l.b16 %v864
    %v906 = vunpack.c.l.b16 %v865
    %v907 = vunpack.c.l.b16 %v866
    %v908 = vunpack.c.l.b16 %v867
    %v909 = vpack.c.b16 %v894, %v893
    %v910 = vpack.c.b16 %v896, %v895
    %v911 = vpack.c.b16 %v898, %v897
    %v912 = vpack.c.b16 %v900, %v899
    %v913 = vpack.c.b16 %v902, %v901
    %v914 = vpack.c.b16 %v904, %v903
    %v915 = vpack.c.b16 %v906, %v905
    %v916 = vpack.c.b16 %v908, %v907
    %925 = vmatprep.subr.bf16.mxu0 0
    %926 = vmatpush1.bf16.msra.mxu0 %v909
    %927 = vmatprep.subr.bf16.mxu0 0
    %928 = vmatpush1.bf16.msra.mxu0 %v910
    %929 = vmatprep.subr.bf16.mxu0 0
    %930 = vmatpush1.bf16.msra.mxu0 %v911
    %931 = vmatprep.subr.bf16.mxu0 0
    %932 = vmatpush1.bf16.msra.mxu0 %v912
    %933 = vmatprep.subr.bf16.mxu0 0
    %934 = vmatpush1.bf16.msra.mxu0 %v913
    %935 = vmatprep.subr.bf16.mxu0 0
    %936 = vmatpush1.bf16.msra.mxu0 %v914
    %937 = vmatprep.subr.bf16.mxu0 0
    %938 = vmatpush1.bf16.msra.mxu0 %v915
    %939 = vmatprep.subr.bf16.mxu0 0
    %940 = vmatpush1.bf16.msra.mxu0 %v916
    %941 = vmatprep.subr.bf16.mxu0 0
    %942 = vmatpush1.bf16.msra.mxu0 0
    %943 = vmatprep.subr.bf16.mxu0 0
    %944 = vmatpush1.bf16.msra.mxu0 0
    %945 = vmatprep.subr.bf16.mxu0 0
    %946 = vmatpush1.bf16.msra.mxu0 0
    %947 = vmatprep.subr.bf16.mxu0 0
    %948 = vmatpush1.bf16.msra.mxu0 0
    %949 = vmatprep.subr.bf16.mxu0 0
    %950 = vmatpush1.bf16.msra.mxu0 0
    %951 = vmatprep.subr.bf16.mxu0 0
    %952 = vmatpush1.bf16.msra.mxu0 0
    %953 = vmatprep.subr.bf16.mxu0 0
    %954 = vmatpush1.bf16.msra.mxu0 0
    %955 = vmatprep.subr.bf16.mxu0 0
    %956 = vmatpush1.bf16.msra.mxu0 0
    %957 = vmatprep.mubr.bf16.mxu0 0
    %958 = vmatmul.mubr.bf16.gmra.mrb[0].mxu0 %v868
    %v959 = vpop.f32.mrb[0].mxu0
    %v960 = vadd.f32 %v875, %v959
    %v961 = vpop.f32.mrb[0].mxu0
    %v962 = vpop.f32.mrb[0].mxu0
    %v963 = vadd.f32 %v875, %v962
    %v964 = vpop.f32.mrb[0].mxu0
    %965 = vdwg.mxu0
    %s966 = scalar_lea.vmem [#allocation5], 64
    %v967 = vld [vmem:[%s966] sm:$0xf]
    %v968 = vld [vmem:[%s966 + $0x4] sm:$0xf]
    %v969 = vld [vmem:[%s966 + $0x8] sm:$0xf]
    %v970 = vld [vmem:[%s966 + $0xc] sm:$0xf]
    %v971 = vld [vmem:[%s966 + $0x10] sm:$0xf]
    %v972 = vld [vmem:[%s966 + $0x14] sm:$0xf]
    %v973 = vld [vmem:[%s966 + $0x18] sm:$0xf]
    %v974 = vld [vmem:[%s966 + $0x1c] sm:$0xf]
    %v975 = vld [vmem:[%s966 + $0x20] sm:$0xf]
    %v976 = vld [vmem:[%s966 + $0x24] sm:$0xf]
    %v977 = vld [vmem:[%s966 + $0x28] sm:$0xf]
    %v978 = vld [vmem:[%s966 + $0x2c] sm:$0xf]
    %v979 = vld [vmem:[%s966 + $0x30] sm:$0xf]
    %v980 = vld [vmem:[%s966 + $0x34] sm:$0xf]
    %v981 = vld [vmem:[%s966 + $0x38] sm:$0xf]
    %v982 = vld [vmem:[%s966 + $0x3c] sm:$0xf]
    %v983 = vpack.c.bf16 %v963, %v960
    %s984 = scalar_lea.vmem %s6, 1
    %v985 = vld [vmem:[%s984] sm:$0x1]
    %v987 = vlaneseq
    %v988 = vshrl.u32 %v987, 7
    %v989 = vsub.s32 0, %v988
    %v990 = vrot.slane %v985, %v989
    %v1008 = vunpack.c.l.b16 %v967
    %v1009 = vunpack.c.l.b16 %v968
    %v1010 = vunpack.c.l.b16 %v969
    %v1011 = vunpack.c.l.b16 %v970
    %v1012 = vunpack.c.l.b16 %v971
    %v1013 = vunpack.c.l.b16 %v972
    %v1014 = vunpack.c.l.b16 %v973
    %v1015 = vunpack.c.l.b16 %v974
    %v1016 = vunpack.c.l.b16 %v975
    %v1017 = vunpack.c.l.b16 %v976
    %v1018 = vunpack.c.l.b16 %v977
    %v1019 = vunpack.c.l.b16 %v978
    %v1020 = vunpack.c.l.b16 %v979
    %v1021 = vunpack.c.l.b16 %v980
    %v1022 = vunpack.c.l.b16 %v981
    %v1023 = vunpack.c.l.b16 %v982
    %v1024 = vpack.c.b16 %v1009, %v1008
    %v1025 = vpack.c.b16 %v1011, %v1010
    %v1026 = vpack.c.b16 %v1013, %v1012
    %v1027 = vpack.c.b16 %v1015, %v1014
    %v1028 = vpack.c.b16 %v1017, %v1016
    %v1029 = vpack.c.b16 %v1019, %v1018
    %v1030 = vpack.c.b16 %v1021, %v1020
    %v1031 = vpack.c.b16 %v1023, %v1022
    %1040 = vmatprep.subr.bf16.mxu0 0
    %1041 = vmatpush1.bf16.msra.mxu0 %v1024
    %1042 = vmatprep.subr.bf16.mxu0 0
    %1043 = vmatpush1.bf16.msra.mxu0 %v1025
    %1044 = vmatprep.subr.bf16.mxu0 0
    %1045 = vmatpush1.bf16.msra.mxu0 %v1026
    %1046 = vmatprep.subr.bf16.mxu0 0
    %1047 = vmatpush1.bf16.msra.mxu0 %v1027
    %1048 = vmatprep.subr.bf16.mxu0 0
    %1049 = vmatpush1.bf16.msra.mxu0 %v1028
    %1050 = vmatprep.subr.bf16.mxu0 0
    %1051 = vmatpush1.bf16.msra.mxu0 %v1029
    %1052 = vmatprep.subr.bf16.mxu0 0
    %1053 = vmatpush1.bf16.msra.mxu0 %v1030
    %1054 = vmatprep.subr.bf16.mxu0 0
    %1055 = vmatpush1.bf16.msra.mxu0 %v1031
    %1056 = vmatprep.subr.bf16.mxu0 0
    %1057 = vmatpush1.bf16.msra.mxu0 0
    %1058 = vmatprep.subr.bf16.mxu0 0
    %1059 = vmatpush1.bf16.msra.mxu0 0
    %1060 = vmatprep.subr.bf16.mxu0 0
    %1061 = vmatpush1.bf16.msra.mxu0 0
    %1062 = vmatprep.subr.bf16.mxu0 0
    %1063 = vmatpush1.bf16.msra.mxu0 0
    %1064 = vmatprep.subr.bf16.mxu0 0
    %1065 = vmatpush1.bf16.msra.mxu0 0
    %1066 = vmatprep.subr.bf16.mxu0 0
    %1067 = vmatpush1.bf16.msra.mxu0 0
    %1068 = vmatprep.subr.bf16.mxu0 0
    %1069 = vmatpush1.bf16.msra.mxu0 0
    %1070 = vmatprep.subr.bf16.mxu0 0
    %1071 = vmatpush1.bf16.msra.mxu0 0
    %1072 = vmatprep.mubr.bf16.mxu0 0
    %1073 = vmatmul.mubr.bf16.gmra.mrb[0].mxu0 %v983
    %v1074 = vpop.f32.mrb[0].mxu0
    %v1075 = vadd.f32 %v990, %v1074
    %v1076 = vpop.f32.mrb[0].mxu0
    %v1077 = vpop.f32.mrb[0].mxu0
    %v1078 = vadd.f32 %v990, %v1077
    %v1079 = vpop.f32.mrb[0].mxu0
    %1080 = vdwg.mxu0
    %v1081 = vadd.f32 %v849, %v1075
    %v1082 = vadd.f32 %v850, %v1078
    %s1083 = scalar_lea.vmem %s7, 1
    %v1084 = vld [vmem:[%s1083] sm:$0x1]
    %s1085 = scalar_lea.vmem %s8, 1
    %v1086 = vld [vmem:[%s1085] sm:$0x1]
    %1087 = vadd.xlane.f32.xlu0 %v1081
    %v1088 = vpop.xlane.xlu0 %1087
    %1089 = vadd.xlane.f32.xlu0 %v1082
    %v1090 = vpop.xlane.xlu0 %1089
    %v1091 = vmul.f32 %v1088, %v440
    %v1092 = vmul.f32 %v1090, %v440
    %v1093 = vsub.f32 %v1081, %v1091
    %v1094 = vsub.f32 %v1082, %v1092
    %v1095 = vmul.f32 %v1093, %v1093
    %v1096 = vmul.f32 %v1094, %v1094
    %1097 = vadd.xlane.f32.xlu0 %v1095
    %v1098 = vpop.xlane.xlu0 %1097
    %1099 = vadd.xlane.f32.xlu0 %v1096
    %v1100 = vpop.xlane.xlu0 %1099
    %v1101 = vmul.f32 %v1098, %v440
    %v1102 = vmul.f32 %v1100, %v440
    %v1103 = vadd.f32 %v1101, 1e-05
    %v1104 = vadd.f32 %v1102, 1e-05
    %v1105 = vrsqrt.pop %v1103
    %v1106 = vrsqrt.pop %v1104
    %v1107 = vmul.f32 %v1093, %v1105
    %v1108 = vmul.f32 %v1094, %v1106
    %v1110 = vlaneseq
    %v1111 = vshrl.u32 %v1110, 7
    %v1112 = vsub.s32 0, %v1111
    %v1113 = vrot.slane %v1084, %v1112
    %v1115 = vmul.f32 %v1107, %v1113
    %v1116 = vmul.f32 %v1108, %v1113
    %v1118 = vlaneseq
    %v1119 = vshrl.u32 %v1118, 7
    %v1120 = vsub.s32 0, %v1119
    %v1121 = vrot.slane %v1086, %v1120
    %v1123 = vadd.f32 %v1115, %v1121
    %v1124 = vadd.f32 %v1116, %v1121
    %s1125 = scalar_lea.vmem [#allocation7], 128
    %v1126 = vld [vmem:[%s1125] sm:$0xff]
    %v1127 = vld [vmem:[%s1125 + $0x8] sm:$0xff]
    %v1128 = vld [vmem:[%s1125 + $0x10] sm:$0xff]
    %v1129 = vld [vmem:[%s1125 + $0x18] sm:$0xff]
    %v1130 = vld [vmem:[%s1125 + $0x20] sm:$0xff]
    %v1131 = vld [vmem:[%s1125 + $0x28] sm:$0xff]
    %v1132 = vld [vmem:[%s1125 + $0x30] sm:$0xff]
    %v1133 = vld [vmem:[%s1125 + $0x38] sm:$0xff]
    %v1134 = vld [vmem:[%s1125 + $0x40] sm:$0xff]
    %v1135 = vld [vmem:[%s1125 + $0x48] sm:$0xff]
    %v1136 = vld [vmem:[%s1125 + $0x50] sm:$0xff]
    %v1137 = vld [vmem:[%s1125 + $0x58] sm:$0xff]
    %v1138 = vld [vmem:[%s1125 + $0x60] sm:$0xff]
    %v1139 = vld [vmem:[%s1125 + $0x68] sm:$0xff]
    %v1140 = vld [vmem:[%s1125 + $0x70] sm:$0xff]
    %v1141 = vld [vmem:[%s1125 + $0x78] sm:$0xff]
    %v1142 = vpack.c.bf16 %v1124, %v1123
    %s1143 = scalar_lea.vmem %s10, 2
    %v1144 = vld [vmem:[%s1143] sm:$0x3]
    %v1146 = vlaneseq
    %v1147 = vshrl.u32 %v1146, 7
    %v1148 = vsub.s32 0, %v1147
    %v1149 = vrot.slane %v1144, %v1148
    %v1150 = vlaneseq
    %v1151 = vshrl.u32 %v1150, 7
    %v1152 = vsub.s32 1, %v1151
    %v1153 = vrot.slane %v1144, %v1152
    %v1172 = vunpack.c.l.b16 %v1126
    %v1173 = vunpack.c.h.b16 %v1126
    %v1174 = vunpack.c.l.b16 %v1127
    %v1175 = vunpack.c.h.b16 %v1127
    %v1176 = vunpack.c.l.b16 %v1128
    %v1177 = vunpack.c.h.b16 %v1128
    %v1178 = vunpack.c.l.b16 %v1129
    %v1179 = vunpack.c.h.b16 %v1129
    %v1180 = vunpack.c.l.b16 %v1130
    %v1181 = vunpack.c.h.b16 %v1130
    %v1182 = vunpack.c.l.b16 %v1131
    %v1183 = vunpack.c.h.b16 %v1131
    %v1184 = vunpack.c.l.b16 %v1132
    %v1185 = vunpack.c.h.b16 %v1132
    %v1186 = vunpack.c.l.b16 %v1133
    %v1187 = vunpack.c.h.b16 %v1133
    %v1188 = vunpack.c.l.b16 %v1134
    %v1189 = vunpack.c.h.b16 %v1134
    %v1190 = vunpack.c.l.b16 %v1135
    %v1191 = vunpack.c.h.b16 %v1135
    %v1192 = vunpack.c.l.b16 %v1136
    %v1193 = vunpack.c.h.b16 %v1136
    %v1194 = vunpack.c.l.b16 %v1137
    %v1195 = vunpack.c.h.b16 %v1137
    %v1196 = vunpack.c.l.b16 %v1138
    %v1197 = vunpack.c.h.b16 %v1138
    %v1198 = vunpack.c.l.b16 %v1139
    %v1199 = vunpack.c.h.b16 %v1139
    %v1200 = vunpack.c.l.b16 %v1140
    %v1201 = vunpack.c.h.b16 %v1140
    %v1202 = vunpack.c.l.b16 %v1141
    %v1203 = vunpack.c.h.b16 %v1141
    %v1204 = vpack.c.b16 %v1174, %v1172
    %v1205 = vpack.c.b16 %v1175, %v1173
    %v1206 = vpack.c.b16 %v1178, %v1176
    %v1207 = vpack.c.b16 %v1179, %v1177
    %v1208 = vpack.c.b16 %v1182, %v1180
    %v1209 = vpack.c.b16 %v1183, %v1181
    %v1210 = vpack.c.b16 %v1186, %v1184
    %v1211 = vpack.c.b16 %v1187, %v1185
    %v1212 = vpack.c.b16 %v1190, %v1188
    %v1213 = vpack.c.b16 %v1191, %v1189
    %v1214 = vpack.c.b16 %v1194, %v1192
    %v1215 = vpack.c.b16 %v1195, %v1193
    %v1216 = vpack.c.b16 %v1198, %v1196
    %v1217 = vpack.c.b16 %v1199, %v1197
    %v1218 = vpack.c.b16 %v1202, %v1200
    %v1219 = vpack.c.b16 %v1203, %v1201
    %1236 = vmatprep.subr.bf16.mxu0 %v1205
    %1237 = vmatpush1.bf16.msra.mxu0 %v1204
    %1238 = vmatprep.subr.bf16.mxu0 %v1207
    %1239 = vmatpush1.bf16.msra.mxu0 %v1206
    %1240 = vmatprep.subr.bf16.mxu0 %v1209
    %1241 = vmatpush1.bf16.msra.mxu0 %v1208
    %1242 = vmatprep.subr.bf16.mxu0 %v1211
    %1243 = vmatpush1.bf16.msra.mxu0 %v1210
    %1244 = vmatprep.subr.bf16.mxu0 %v1213
    %1245 = vmatpush1.bf16.msra.mxu0 %v1212
    %1246 = vmatprep.subr.bf16.mxu0 %v1215
    %1247 = vmatpush1.bf16.msra.mxu0 %v1214
    %1248 = vmatprep.subr.bf16.mxu0 %v1217
    %1249 = vmatpush1.bf16.msra.mxu0 %v1216
    %1250 = vmatprep.subr.bf16.mxu0 %v1219
    %1251 = vmatpush1.bf16.msra.mxu0 %v1218
    %1252 = vmatprep.subr.bf16.mxu0 0
    %1253 = vmatpush1.bf16.msra.mxu0 0
    %1254 = vmatprep.subr.bf16.mxu0 0
    %1255 = vmatpush1.bf16.msra.mxu0 0
    %1256 = vmatprep.subr.bf16.mxu0 0
    %1257 = vmatpush1.bf16.msra.mxu0 0
    %1258 = vmatprep.subr.bf16.mxu0 0
    %1259 = vmatpush1.bf16.msra.mxu0 0
    %1260 = vmatprep.subr.bf16.mxu0 0
    %1261 = vmatpush1.bf16.msra.mxu0 0
    %1262 = vmatprep.subr.bf16.mxu0 0
    %1263 = vmatpush1.bf16.msra.mxu0 0
    %1264 = vmatprep.subr.bf16.mxu0 0
    %1265 = vmatpush1.bf16.msra.mxu0 0
    %1266 = vmatprep.subr.bf16.mxu0 0
    %1267 = vmatpush1.bf16.msra.mxu0 0
    %1268 = vmatprep.mubr.bf16.mxu0 0
    %1269 = vmatmul.mubr.bf16.gmra.mrb[0].mxu0 %v1142
    %v1270 = vpop.f32.mrb[0].mxu0
    %v1271 = vadd.f32 %v1149, %v1270
    %v1272 = vpop.f32.mrb[0].mxu0
    %v1273 = vadd.f32 %v1153, %v1272
    %v1274 = vpop.f32.mrb[0].mxu0
    %v1275 = vadd.f32 %v1149, %v1274
    %v1276 = vpop.f32.mrb[0].mxu0
    %v1277 = vadd.f32 %v1153, %v1276
    %1278 = vdwg.mxu0
    %v1279 = vmax.f32 %v1271, 0.0
    %v1280 = vmax.f32 %v1273, 0.0
    %v1281 = vmax.f32 %v1275, 0.0
    %v1282 = vmax.f32 %v1277, 0.0
    %s1283 = scalar_lea.vmem [#allocation8], 128
    %v1284 = vld [vmem:[%s1283] sm:$0xf]
    %v1285 = vld [vmem:[%s1283 + $0x4] sm:$0xf]
    %v1286 = vld [vmem:[%s1283 + $0x8] sm:$0xf]
    %v1287 = vld [vmem:[%s1283 + $0xc] sm:$0xf]
    %v1288 = vld [vmem:[%s1283 + $0x10] sm:$0xf]
    %v1289 = vld [vmem:[%s1283 + $0x14] sm:$0xf]
    %v1290 = vld [vmem:[%s1283 + $0x18] sm:$0xf]
    %v1291 = vld [vmem:[%s1283 + $0x1c] sm:$0xf]
    %v1292 = vld [vmem:[%s1283 + $0x20] sm:$0xf]
    %v1293 = vld [vmem:[%s1283 + $0x24] sm:$0xf]
    %v1294 = vld [vmem:[%s1283 + $0x28] sm:$0xf]
    %v1295 = vld [vmem:[%s1283 + $0x2c] sm:$0xf]
    %v1296 = vld [vmem:[%s1283 + $0x30] sm:$0xf]
    %v1297 = vld [vmem:[%s1283 + $0x34] sm:$0xf]
    %v1298 = vld [vmem:[%s1283 + $0x38] sm:$0xf]
    %v1299 = vld [vmem:[%s1283 + $0x3c] sm:$0xf]
    %v1300 = vld [vmem:[%s1283 + $0x40] sm:$0xf]
    %v1301 = vld [vmem:[%s1283 + $0x44] sm:$0xf]
    %v1302 = vld [vmem:[%s1283 + $0x48] sm:$0xf]
    %v1303 = vld [vmem:[%s1283 + $0x4c] sm:$0xf]
    %v1304 = vld [vmem:[%s1283 + $0x50] sm:$0xf]
    %v1305 = vld [vmem:[%s1283 + $0x54] sm:$0xf]
    %v1306 = vld [vmem:[%s1283 + $0x58] sm:$0xf]
    %v1307 = vld [vmem:[%s1283 + $0x5c] sm:$0xf]
    %v1308 = vld [vmem:[%s1283 + $0x60] sm:$0xf]
    %v1309 = vld [vmem:[%s1283 + $0x64] sm:$0xf]
    %v1310 = vld [vmem:[%s1283 + $0x68] sm:$0xf]
    %v1311 = vld [vmem:[%s1283 + $0x6c] sm:$0xf]
    %v1312 = vld [vmem:[%s1283 + $0x70] sm:$0xf]
    %v1313 = vld [vmem:[%s1283 + $0x74] sm:$0xf]
    %v1314 = vld [vmem:[%s1283 + $0x78] sm:$0xf]
    %v1315 = vld [vmem:[%s1283 + $0x7c] sm:$0xf]
    %v1316 = vpack.c.bf16 %v1281, %v1279
    %v1317 = vpack.c.bf16 %v1282, %v1280
    %s1318 = scalar_lea.vmem %s12, 1
    %v1319 = vld [vmem:[%s1318] sm:$0x1]
    %v1321 = vlaneseq
    %v1322 = vshrl.u32 %v1321, 7
    %v1323 = vsub.s32 0, %v1322
    %v1324 = vrot.slane %v1319, %v1323
    %v1358 = vunpack.c.l.b16 %v1284
    %v1359 = vunpack.c.l.b16 %v1285
    %v1360 = vunpack.c.l.b16 %v1286
    %v1361 = vunpack.c.l.b16 %v1287
    %v1362 = vunpack.c.l.b16 %v1288
    %v1363 = vunpack.c.l.b16 %v1289
    %v1364 = vunpack.c.l.b16 %v1290
    %v1365 = vunpack.c.l.b16 %v1291
    %v1366 = vunpack.c.l.b16 %v1292
    %v1367 = vunpack.c.l.b16 %v1293
    %v1368 = vunpack.c.l.b16 %v1294
    %v1369 = vunpack.c.l.b16 %v1295
    %v1370 = vunpack.c.l.b16 %v1296
    %v1371 = vunpack.c.l.b16 %v1297
    %v1372 = vunpack.c.l.b16 %v1298
    %v1373 = vunpack.c.l.b16 %v1299
    %v1374 = vunpack.c.l.b16 %v1300
    %v1375 = vunpack.c.l.b16 %v1301
    %v1376 = vunpack.c.l.b16 %v1302
    %v1377 = vunpack.c.l.b16 %v1303
    %v1378 = vunpack.c.l.b16 %v1304
    %v1379 = vunpack.c.l.b16 %v1305
    %v1380 = vunpack.c.l.b16 %v1306
    %v1381 = vunpack.c.l.b16 %v1307
    %v1382 = vunpack.c.l.b16 %v1308
    %v1383 = vunpack.c.l.b16 %v1309
    %v1384 = vunpack.c.l.b16 %v1310
    %v1385 = vunpack.c.l.b16 %v1311
    %v1386 = vunpack.c.l.b16 %v1312
    %v1387 = vunpack.c.l.b16 %v1313
    %v1388 = vunpack.c.l.b16 %v1314
    %v1389 = vunpack.c.l.b16 %v1315
    %v1390 = vpack.c.b16 %v1359, %v1358
    %v1391 = vpack.c.b16 %v1361, %v1360
    %v1392 = vpack.c.b16 %v1363, %v1362
    %v1393 = vpack.c.b16 %v1365, %v1364
    %v1394 = vpack.c.b16 %v1367, %v1366
    %v1395 = vpack.c.b16 %v1369, %v1368
    %v1396 = vpack.c.b16 %v1371, %v1370
    %v1397 = vpack.c.b16 %v1373, %v1372
    %v1398 = vpack.c.b16 %v1375, %v1374
    %v1399 = vpack.c.b16 %v1377, %v1376
    %v1400 = vpack.c.b16 %v1379, %v1378
    %v1401 = vpack.c.b16 %v1381, %v1380
    %v1402 = vpack.c.b16 %v1383, %v1382
    %v1403 = vpack.c.b16 %v1385, %v1384
    %v1404 = vpack.c.b16 %v1387, %v1386
    %v1405 = vpack.c.b16 %v1389, %v1388
    %1422 = vmatprep.subr.bf16.mxu0 0
    %1423 = vmatpush1.bf16.msra.mxu0 %v1390
    %1424 = vmatprep.subr.bf16.mxu0 0
    %1425 = vmatpush1.bf16.msra.mxu0 %v1391
    %1426 = vmatprep.subr.bf16.mxu0 0
    %1427 = vmatpush1.bf16.msra.mxu0 %v1392
    %1428 = vmatprep.subr.bf16.mxu0 0
    %1429 = vmatpush1.bf16.msra.mxu0 %v1393
    %1430 = vmatprep.subr.bf16.mxu0 0
    %1431 = vmatpush1.bf16.msra.mxu0 %v1394
    %1432 = vmatprep.subr.bf16.mxu0 0
    %1433 = vmatpush1.bf16.msra.mxu0 %v1395
    %1434 = vmatprep.subr.bf16.mxu0 0
    %1435 = vmatpush1.bf16.msra.mxu0 %v1396
    %1436 = vmatprep.subr.bf16.mxu0 0
    %1437 = vmatpush1.bf16.msra.mxu0 %v1397
    %1438 = vmatprep.subr.bf16.mxu0 0
    %1439 = vmatpush1.bf16.msra.mxu0 %v1398
    %1440 = vmatprep.subr.bf16.mxu0 0
    %1441 = vmatpush1.bf16.msra.mxu0 %v1399
    %1442 = vmatprep.subr.bf16.mxu0 0
    %1443 = vmatpush1.bf16.msra.mxu0 %v1400
    %1444 = vmatprep.subr.bf16.mxu0 0
    %1445 = vmatpush1.bf16.msra.mxu0 %v1401
    %1446 = vmatprep.subr.bf16.mxu0 0
    %1447 = vmatpush1.bf16.msra.mxu0 %v1402
    %1448 = vmatprep.subr.bf16.mxu0 0
    %1449 = vmatpush1.bf16.msra.mxu0 %v1403
    %1450 = vmatprep.subr.bf16.mxu0 0
    %1451 = vmatpush1.bf16.msra.mxu0 %v1404
    %1452 = vmatprep.subr.bf16.mxu0 0
    %1453 = vmatpush1.bf16.msra.mxu0 %v1405
    %1454 = vmatprep.mubr.bf16.mxu0 %v1317
    %1455 = vmatmul.mubr.bf16.gmra.mrb[0].mxu0 %v1316
    %v1456 = vpop.f32.mrb[0].mxu0
    %v1457 = vadd.f32 %v1324, %v1456
    %v1458 = vpop.f32.mrb[0].mxu0
    %v1459 = vpop.f32.mrb[0].mxu0
    %v1460 = vadd.f32 %v1324, %v1459
    %v1461 = vpop.f32.mrb[0].mxu0
    %1462 = vdwg.mxu0
    %v1463 = vadd.f32 %v1123, %v1457
    %v1464 = vadd.f32 %v1124, %v1460
    %s1465 = scalar_lea.vmem %s13, 1
    %v1466 = vld [vmem:[%s1465] sm:$0x1]
    %s1467 = scalar_lea.vmem %s14, 1
    %v1468 = vld [vmem:[%s1467] sm:$0x1]
    %1469 = vadd.xlane.f32.xlu0 %v1463
    %v1470 = vpop.xlane.xlu0 %1469
    %1471 = vadd.xlane.f32.xlu0 %v1464
    %v1472 = vpop.xlane.xlu0 %1471
    %v1473 = vmul.f32 %v1470, %v440
    %v1474 = vmul.f32 %v1472, %v440
    %v1475 = vsub.f32 %v1463, %v1473
    %v1476 = vsub.f32 %v1464, %v1474
    %v1477 = vmul.f32 %v1475, %v1475
    %v1478 = vmul.f32 %v1476, %v1476
    %1479 = vadd.xlane.f32.xlu0 %v1477
    %v1480 = vpop.xlane.xlu0 %1479
    %1481 = vadd.xlane.f32.xlu0 %v1478
    %v1482 = vpop.xlane.xlu0 %1481
    %v1483 = vmul.f32 %v1480, %v440
    %v1484 = vmul.f32 %v1482, %v440
    %v1485 = vadd.f32 %v1483, 1e-05
    %v1486 = vadd.f32 %v1484, 1e-05
    %v1487 = vrsqrt.pop %v1485
    %v1488 = vrsqrt.pop %v1486
    %v1489 = vmul.f32 %v1475, %v1487
    %v1490 = vmul.f32 %v1476, %v1488
    %v1492 = vlaneseq
    %v1493 = vshrl.u32 %v1492, 7
    %v1494 = vsub.s32 0, %v1493
    %v1495 = vrot.slane %v1466, %v1494
    %v1497 = vmul.f32 %v1489, %v1495
    %v1498 = vmul.f32 %v1490, %v1495
    %v1500 = vlaneseq
    %v1501 = vshrl.u32 %v1500, 7
    %v1502 = vsub.s32 0, %v1501
    %v1503 = vrot.slane %v1468, %v1502
    %v1505 = vadd.f32 %v1497, %v1503
    %v1506 = vadd.f32 %v1498, %v1503
    %s1507 = scalar_lea.vmem [#allocation2], 128
    %v1508 = vld [vmem:[%s1507] sm:$0xf]
    %v1509 = vld [vmem:[%s1507 + $0x4] sm:$0xf]
    %v1510 = vld [vmem:[%s1507 + $0x8] sm:$0xf]
    %v1511 = vld [vmem:[%s1507 + $0xc] sm:$0xf]
    %v1512 = vld [vmem:[%s1507 + $0x10] sm:$0xf]
    %v1513 = vld [vmem:[%s1507 + $0x14] sm:$0xf]
    %v1514 = vld [vmem:[%s1507 + $0x18] sm:$0xf]
    %v1515 = vld [vmem:[%s1507 + $0x1c] sm:$0xf]
    %v1516 = vld [vmem:[%s1507 + $0x20] sm:$0xf]
    %v1517 = vld [vmem:[%s1507 + $0x24] sm:$0xf]
    %v1518 = vld [vmem:[%s1507 + $0x28] sm:$0xf]
    %v1519 = vld [vmem:[%s1507 + $0x2c] sm:$0xf]
    %v1520 = vld [vmem:[%s1507 + $0x30] sm:$0xf]
    %v1521 = vld [vmem:[%s1507 + $0x34] sm:$0xf]
    %v1522 = vld [vmem:[%s1507 + $0x38] sm:$0xf]
    %v1523 = vld [vmem:[%s1507 + $0x3c] sm:$0xf]
    %v1524 = vpack.c.bf16 %v1506, %v1505
    %s1525 = scalar_lea.vmem %s4, 2
    %v1526 = vld [vmem:[%s1525] sm:$0x1]
    %v1528 = vlaneseq
    %v1529 = vshrl.u32 %v1528, 7
    %v1530 = vsub.s32 0, %v1529
    %v1531 = vrot.slane %v1526, %v1530
    %v1549 = vunpack.c.l.b16 %v1508
    %v1550 = vunpack.c.l.b16 %v1509
    %v1551 = vunpack.c.l.b16 %v1510
    %v1552 = vunpack.c.l.b16 %v1511
    %v1553 = vunpack.c.l.b16 %v1512
    %v1554 = vunpack.c.l.b16 %v1513
    %v1555 = vunpack.c.l.b16 %v1514
    %v1556 = vunpack.c.l.b16 %v1515
    %v1557 = vunpack.c.l.b16 %v1516
    %v1558 = vunpack.c.l.b16 %v1517
    %v1559 = vunpack.c.l.b16 %v1518
    %v1560 = vunpack.c.l.b16 %v1519
    %v1561 = vunpack.c.l.b16 %v1520
    %v1562 = vunpack.c.l.b16 %v1521
    %v1563 = vunpack.c.l.b16 %v1522
    %v1564 = vunpack.c.l.b16 %v1523
    %v1565 = vpack.c.b16 %v1550, %v1549
    %v1566 = vpack.c.b16 %v1552, %v1551
    %v1567 = vpack.c.b16 %v1554, %v1553
    %v1568 = vpack.c.b16 %v1556, %v1555
    %v1569 = vpack.c.b16 %v1558, %v1557
    %v1570 = vpack.c.b16 %v1560, %v1559
    %v1571 = vpack.c.b16 %v1562, %v1561
    %v1572 = vpack.c.b16 %v1564, %v1563
    %1581 = vmatprep.subr.bf16.mxu0 0
    %1582 = vmatpush1.bf16.msra.mxu0 %v1565
    %1583 = vmatprep.subr.bf16.mxu0 0
    %1584 = vmatpush1.bf16.msra.mxu0 %v1566
    %1585 = vmatprep.subr.bf16.mxu0 0
    %1586 = vmatpush1.bf16.msra.mxu0 %v1567
    %1587 = vmatprep.subr.bf16.mxu0 0
    %1588 = vmatpush1.bf16.msra.mxu0 %v1568
    %1589 = vmatprep.subr.bf16.mxu0 0
    %1590 = vmatpush1.bf16.msra.mxu0 %v1569
    %1591 = vmatprep.subr.bf16.mxu0 0
    %1592 = vmatpush1.bf16.msra.mxu0 %v1570
    %1593 = vmatprep.subr.bf16.mxu0 0
    %1594 = vmatpush1.bf16.msra.mxu0 %v1571
    %1595 = vmatprep.subr.bf16.mxu0 0
    %1596 = vmatpush1.bf16.msra.mxu0 %v1572
    %1597 = vmatprep.subr.bf16.mxu0 0
    %1598 = vmatpush1.bf16.msra.mxu0 0
    %1599 = vmatprep.subr.bf16.mxu0 0
    %1600 = vmatpush1.bf16.msra.mxu0 0
    %1601 = vmatprep.subr.bf16.mxu0 0
    %1602 = vmatpush1.bf16.msra.mxu0 0
    %1603 = vmatprep.subr.bf16.mxu0 0
    %1604 = vmatpush1.bf16.msra.mxu0 0
    %1605 = vmatprep.subr.bf16.mxu0 0
    %1606 = vmatpush1.bf16.msra.mxu0 0
    %1607 = vmatprep.subr.bf16.mxu0 0
    %1608 = vmatpush1.bf16.msra.mxu0 0
    %1609 = vmatprep.subr.bf16.mxu0 0
    %1610 = vmatpush1.bf16.msra.mxu0 0
    %1611 = vmatprep.subr.bf16.mxu0 0
    %1612 = vmatpush1.bf16.msra.mxu0 0
    %1613 = vmatprep.mubr.bf16.mxu0 0
    %1614 = vmatmul.mubr.bf16.gmra.mrb[0].mxu0 %v1524
    %v1615 = vpop.f32.mrb[0].mxu0
    %v1616 = vadd.f32 %v1531, %v1615
    %v1617 = vpop.f32.mrb[0].mxu0
    %v1618 = vpop.f32.mrb[0].mxu0
    %v1619 = vadd.f32 %v1531, %v1618
    %v1620 = vpop.f32.mrb[0].mxu0
    %1621 = vdwg.mxu0
    %s1622 = scalar_lea.vmem [#allocation5], 128
    %v1623 = vld [vmem:[%s1622] sm:$0xf]
    %v1624 = vld [vmem:[%s1622 + $0x4] sm:$0xf]
    %v1625 = vld [vmem:[%s1622 + $0x8] sm:$0xf]
    %v1626 = vld [vmem:[%s1622 + $0xc] sm:$0xf]
    %v1627 = vld [vmem:[%s1622 + $0x10] sm:$0xf]
    %v1628 = vld [vmem:[%s1622 + $0x14] sm:$0xf]
    %v1629 = vld [vmem:[%s1622 + $0x18] sm:$0xf]
    %v1630 = vld [vmem:[%s1622 + $0x1c] sm:$0xf]
    %v1631 = vld [vmem:[%s1622 + $0x20] sm:$0xf]
    %v1632 = vld [vmem:[%s1622 + $0x24] sm:$0xf]
    %v1633 = vld [vmem:[%s1622 + $0x28] sm:$0xf]
    %v1634 = vld [vmem:[%s1622 + $0x2c] sm:$0xf]
    %v1635 = vld [vmem:[%s1622 + $0x30] sm:$0xf]
    %v1636 = vld [vmem:[%s1622 + $0x34] sm:$0xf]
    %v1637 = vld [vmem:[%s1622 + $0x38] sm:$0xf]
    %v1638 = vld [vmem:[%s1622 + $0x3c] sm:$0xf]
    %v1639 = vpack.c.bf16 %v1619, %v1616
    %s1640 = scalar_lea.vmem %s6, 2
    %v1641 = vld [vmem:[%s1640] sm:$0x1]
    %v1643 = vlaneseq
    %v1644 = vshrl.u32 %v1643, 7
    %v1645 = vsub.s32 0, %v1644
    %v1646 = vrot.slane %v1641, %v1645
    %v1664 = vunpack.c.l.b16 %v1623
    %v1665 = vunpack.c.l.b16 %v1624
    %v1666 = vunpack.c.l.b16 %v1625
    %v1667 = vunpack.c.l.b16 %v1626
    %v1668 = vunpack.c.l.b16 %v1627
    %v1669 = vunpack.c.l.b16 %v1628
    %v1670 = vunpack.c.l.b16 %v1629
    %v1671 = vunpack.c.l.b16 %v1630
    %v1672 = vunpack.c.l.b16 %v1631
    %v1673 = vunpack.c.l.b16 %v1632
    %v1674 = vunpack.c.l.b16 %v1633
    %v1675 = vunpack.c.l.b16 %v1634
    %v1676 = vunpack.c.l.b16 %v1635
    %v1677 = vunpack.c.l.b16 %v1636
    %v1678 = vunpack.c.l.b16 %v1637
    %v1679 = vunpack.c.l.b16 %v1638
    %v1680 = vpack.c.b16 %v1665, %v1664
    %v1681 = vpack.c.b16 %v1667, %v1666
    %v1682 = vpack.c.b16 %v1669, %v1668
    %v1683 = vpack.c.b16 %v1671, %v1670
    %v1684 = vpack.c.b16 %v1673, %v1672
    %v1685 = vpack.c.b16 %v1675, %v1674
    %v1686 = vpack.c.b16 %v1677, %v1676
    %v1687 = vpack.c.b16 %v1679, %v1678
    %1696 = vmatprep.subr.bf16.mxu0 0
    %1697 = vmatpush1.bf16.msra.mxu0 %v1680
    %1698 = vmatprep.subr.bf16.mxu0 0
    %1699 = vmatpush1.bf16.msra.mxu0 %v1681
    %1700 = vmatprep.subr.bf16.mxu0 0
    %1701 = vmatpush1.bf16.msra.mxu0 %v1682
    %1702 = vmatprep.subr.bf16.mxu0 0
    %1703 = vmatpush1.bf16.msra.mxu0 %v1683
    %1704 = vmatprep.subr.bf16.mxu0 0
    %1705 = vmatpush1.bf16.msra.mxu0 %v1684
    %1706 = vmatprep.subr.bf16.mxu0 0
    %1707 = vmatpush1.bf16.msra.mxu0 %v1685
    %1708 = vmatprep.subr.bf16.mxu0 0
    %1709 = vmatpush1.bf16.msra.mxu0 %v1686
    %1710 = vmatprep.subr.bf16.mxu0 0
    %1711 = vmatpush1.bf16.msra.mxu0 %v1687
    %1712 = vmatprep.subr.bf16.mxu0 0
    %1713 = vmatpush1.bf16.msra.mxu0 0
    %1714 = vmatprep.subr.bf16.mxu0 0
    %1715 = vmatpush1.bf16.msra.mxu0 0
    %1716 = vmatprep.subr.bf16.mxu0 0
    %1717 = vmatpush1.bf16.msra.mxu0 0
    %1718 = vmatprep.subr.bf16.mxu0 0
    %1719 = vmatpush1.bf16.msra.mxu0 0
    %1720 = vmatprep.subr.bf16.mxu0 0
    %1721 = vmatpush1.bf16.msra.mxu0 0
    %1722 = vmatprep.subr.bf16.mxu0 0
    %1723 = vmatpush1.bf16.msra.mxu0 0
    %1724 = vmatprep.subr.bf16.mxu0 0
    %1725 = vmatpush1.bf16.msra.mxu0 0
    %1726 = vmatprep.subr.bf16.mxu0 0
    %1727 = vmatpush1.bf16.msra.mxu0 0
    %1728 = vmatprep.mubr.bf16.mxu0 0
    %1729 = vmatmul.mubr.bf16.gmra.mrb[0].mxu0 %v1639
    %v1730 = vpop.f32.mrb[0].mxu0
    %v1731 = vadd.f32 %v1646, %v1730
    %v1732 = vpop.f32.mrb[0].mxu0
    %v1733 = vpop.f32.mrb[0].mxu0
    %v1734 = vadd.f32 %v1646, %v1733
    %v1735 = vpop.f32.mrb[0].mxu0
    %1736 = vdwg.mxu0
    %v1737 = vadd.f32 %v1505, %v1731
    %v1738 = vadd.f32 %v1506, %v1734
    %s1739 = scalar_lea.vmem %s7, 2
    %v1740 = vld [vmem:[%s1739] sm:$0x1]
    %s1741 = scalar_lea.vmem %s8, 2
    %v1742 = vld [vmem:[%s1741] sm:$0x1]
    %1743 = vadd.xlane.f32.xlu0 %v1737
    %v1744 = vpop.xlane.xlu0 %1743
    %1745 = vadd.xlane.f32.xlu0 %v1738
    %v1746 = vpop.xlane.xlu0 %1745
    %v1747 = vmul.f32 %v1744, %v440
    %v1748 = vmul.f32 %v1746, %v440
    %v1749 = vsub.f32 %v1737, %v1747
    %v1750 = vsub.f32 %v1738, %v1748
    %v1751 = vmul.f32 %v1749, %v1749
    %v1752 = vmul.f32 %v1750, %v1750
    %1753 = vadd.xlane.f32.xlu0 %v1751
    %v1754 = vpop.xlane.xlu0 %1753
    %1755 = vadd.xlane.f32.xlu0 %v1752
    %v1756 = vpop.xlane.xlu0 %1755
    %v1757 = vmul.f32 %v1754, %v440
    %v1758 = vmul.f32 %v1756, %v440
    %v1759 = vadd.f32 %v1757, 1e-05
    %v1760 = vadd.f32 %v1758, 1e-05
    %v1761 = vrsqrt.pop %v1759
    %v1762 = vrsqrt.pop %v1760
    %v1763 = vmul.f32 %v1749, %v1761
    %v1764 = vmul.f32 %v1750, %v1762
    %v1766 = vlaneseq
    %v1767 = vshrl.u32 %v1766, 7
    %v1768 = vsub.s32 0, %v1767
    %v1769 = vrot.slane %v1740, %v1768
    %v1771 = vmul.f32 %v1763, %v1769
    %v1772 = vmul.f32 %v1764, %v1769
    %v1774 = vlaneseq
    %v1775 = vshrl.u32 %v1774, 7
    %v1776 = vsub.s32 0, %v1775
    %v1777 = vrot.slane %v1742, %v1776
    %v1779 = vadd.f32 %v1771, %v1777
    %v1780 = vadd.f32 %v1772, %v1777
    %s1781 = scalar_lea.vmem [#allocation7], 256
    %v1782 = vld [vmem:[%s1781] sm:$0xff]
    %v1783 = vld [vmem:[%s1781 + $0x8] sm:$0xff]
    %v1784 = vld [vmem:[%s1781 + $0x10] sm:$0xff]
    %v1785 = vld [vmem:[%s1781 + $0x18] sm:$0xff]
    %v1786 = vld [vmem:[%s1781 + $0x20] sm:$0xff]
    %v1787 = vld [vmem:[%s1781 + $0x28] sm:$0xff]
    %v1788 = vld [vmem:[%s1781 + $0x30] sm:$0xff]
    %v1789 = vld [vmem:[%s1781 + $0x38] sm:$0xff]
    %v1790 = vld [vmem:[%s1781 + $0x40] sm:$0xff]
    %v1791 = vld [vmem:[%s1781 + $0x48] sm:$0xff]
    %v1792 = vld [vmem:[%s1781 + $0x50] sm:$0xff]
    %v1793 = vld [vmem:[%s1781 + $0x58] sm:$0xff]
    %v1794 = vld [vmem:[%s1781 + $0x60] sm:$0xff]
    %v1795 = vld [vmem:[%s1781 + $0x68] sm:$0xff]
    %v1796 = vld [vmem:[%s1781 + $0x70] sm:$0xff]
    %v1797 = vld [vmem:[%s1781 + $0x78] sm:$0xff]
    %v1798 = vpack.c.bf16 %v1780, %v1779
    %s1799 = scalar_lea.vmem %s10, 4
    %v1800 = vld [vmem:[%s1799] sm:$0x3]
    %v1802 = vlaneseq
    %v1803 = vshrl.u32 %v1802, 7
    %v1804 = vsub.s32 0, %v1803
    %v1805 = vrot.slane %v1800, %v1804
    %v1806 = vlaneseq
    %v1807 = vshrl.u32 %v1806, 7
    %v1808 = vsub.s32 1, %v1807
    %v1809 = vrot.slane %v1800, %v1808
    %v1828 = vunpack.c.l.b16 %v1782
    %v1829 = vunpack.c.h.b16 %v1782
    %v1830 = vunpack.c.l.b16 %v1783
    %v1831 = vunpack.c.h.b16 %v1783
    %v1832 = vunpack.c.l.b16 %v1784
    %v1833 = vunpack.c.h.b16 %v1784
    %v1834 = vunpack.c.l.b16 %v1785
    %v1835 = vunpack.c.h.b16 %v1785
    %v1836 = vunpack.c.l.b16 %v1786
    %v1837 = vunpack.c.h.b16 %v1786
    %v1838 = vunpack.c.l.b16 %v1787
    %v1839 = vunpack.c.h.b16 %v1787
    %v1840 = vunpack.c.l.b16 %v1788
    %v1841 = vunpack.c.h.b16 %v1788
    %v1842 = vunpack.c.l.b16 %v1789
    %v1843 = vunpack.c.h.b16 %v1789
    %v1844 = vunpack.c.l.b16 %v1790
    %v1845 = vunpack.c.h.b16 %v1790
    %v1846 = vunpack.c.l.b16 %v1791
    %v1847 = vunpack.c.h.b16 %v1791
    %v1848 = vunpack.c.l.b16 %v1792
    %v1849 = vunpack.c.h.b16 %v1792
    %v1850 = vunpack.c.l.b16 %v1793
    %v1851 = vunpack.c.h.b16 %v1793
    %v1852 = vunpack.c.l.b16 %v1794
    %v1853 = vunpack.c.h.b16 %v1794
    %v1854 = vunpack.c.l.b16 %v1795
    %v1855 = vunpack.c.h.b16 %v1795
    %v1856 = vunpack.c.l.b16 %v1796
    %v1857 = vunpack.c.h.b16 %v1796
    %v1858 = vunpack.c.l.b16 %v1797
    %v1859 = vunpack.c.h.b16 %v1797
    %v1860 = vpack.c.b16 %v1830, %v1828
    %v1861 = vpack.c.b16 %v1831, %v1829
    %v1862 = vpack.c.b16 %v1834, %v1832
    %v1863 = vpack.c.b16 %v1835, %v1833
    %v1864 = vpack.c.b16 %v1838, %v1836
    %v1865 = vpack.c.b16 %v1839, %v1837
    %v1866 = vpack.c.b16 %v1842, %v1840
    %v1867 = vpack.c.b16 %v1843, %v1841
    %v1868 = vpack.c.b16 %v1846, %v1844
    %v1869 = vpack.c.b16 %v1847, %v1845
    %v1870 = vpack.c.b16 %v1850, %v1848
    %v1871 = vpack.c.b16 %v1851, %v1849
    %v1872 = vpack.c.b16 %v1854, %v1852
    %v1873 = vpack.c.b16 %v1855, %v1853
    %v1874 = vpack.c.b16 %v1858, %v1856
    %v1875 = vpack.c.b16 %v1859, %v1857
    %1892 = vmatprep.subr.bf16.mxu0 %v1861
    %1893 = vmatpush1.bf16.msra.mxu0 %v1860
    %1894 = vmatprep.subr.bf16.mxu0 %v1863
    %1895 = vmatpush1.bf16.msra.mxu0 %v1862
    %1896 = vmatprep.subr.bf16.mxu0 %v1865
    %1897 = vmatpush1.bf16.msra.mxu0 %v1864
    %1898 = vmatprep.subr.bf16.mxu0 %v1867
    %1899 = vmatpush1.bf16.msra.mxu0 %v1866
    %1900 = vmatprep.subr.bf16.mxu0 %v1869
    %1901 = vmatpush1.bf16.msra.mxu0 %v1868
    %1902 = vmatprep.subr.bf16.mxu0 %v1871
    %1903 = vmatpush1.bf16.msra.mxu0 %v1870
    %1904 = vmatprep.subr.bf16.mxu0 %v1873
    %1905 = vmatpush1.bf16.msra.mxu0 %v1872
    %1906 = vmatprep.subr.bf16.mxu0 %v1875
    %1907 = vmatpush1.bf16.msra.mxu0 %v1874
    %1908 = vmatprep.subr.bf16.mxu0 0
    %1909 = vmatpush1.bf16.msra.mxu0 0
    %1910 = vmatprep.subr.bf16.mxu0 0
    %1911 = vmatpush1.bf16.msra.mxu0 0
    %1912 = vmatprep.subr.bf16.mxu0 0
    %1913 = vmatpush1.bf16.msra.mxu0 0
    %1914 = vmatprep.subr.bf16.mxu0 0
    %1915 = vmatpush1.bf16.msra.mxu0 0
    %1916 = vmatprep.subr.bf16.mxu0 0
    %1917 = vmatpush1.bf16.msra.mxu0 0
    %1918 = vmatprep.subr.bf16.mxu0 0
    %1919 = vmatpush1.bf16.msra.mxu0 0
    %1920 = vmatprep.subr.bf16.mxu0 0
    %1921 = vmatpush1.bf16.msra.mxu0 0
    %1922 = vmatprep.subr.bf16.mxu0 0
    %1923 = vmatpush1.bf16.msra.mxu0 0
    %1924 = vmatprep.mubr.bf16.mxu0 0
    %1925 = vmatmul.mubr.bf16.gmra.mrb[0].mxu0 %v1798
    %v1926 = vpop.f32.mrb[0].mxu0
    %v1927 = vadd.f32 %v1805, %v1926
    %v1928 = vpop.f32.mrb[0].mxu0
    %v1929 = vadd.f32 %v1809, %v1928
    %v1930 = vpop.f32.mrb[0].mxu0
    %v1931 = vadd.f32 %v1805, %v1930
    %v1932 = vpop.f32.mrb[0].mxu0
    %v1933 = vadd.f32 %v1809, %v1932
    %1934 = vdwg.mxu0
    %v1935 = vmax.f32 %v1927, 0.0
    %v1936 = vmax.f32 %v1929, 0.0
    %v1937 = vmax.f32 %v1931, 0.0
    %v1938 = vmax.f32 %v1933, 0.0
    %s1939 = scalar_lea.vmem [#allocation8], 256
    %v1940 = vld [vmem:[%s1939] sm:$0xf]
    %v1941 = vld [vmem:[%s1939 + $0x4] sm:$0xf]
    %v1942 = vld [vmem:[%s1939 + $0x8] sm:$0xf]
    %v1943 = vld [vmem:[%s1939 + $0xc] sm:$0xf]
    %v1944 = vld [vmem:[%s1939 + $0x10] sm:$0xf]
    %v1945 = vld [vmem:[%s1939 + $0x14] sm:$0xf]
    %v1946 = vld [vmem:[%s1939 + $0x18] sm:$0xf]
    %v1947 = vld [vmem:[%s1939 + $0x1c] sm:$0xf]
    %v1948 = vld [vmem:[%s1939 + $0x20] sm:$0xf]
    %v1949 = vld [vmem:[%s1939 + $0x24] sm:$0xf]
    %v1950 = vld [vmem:[%s1939 + $0x28] sm:$0xf]
    %v1951 = vld [vmem:[%s1939 + $0x2c] sm:$0xf]
    %v1952 = vld [vmem:[%s1939 + $0x30] sm:$0xf]
    %v1953 = vld [vmem:[%s1939 + $0x34] sm:$0xf]
    %v1954 = vld [vmem:[%s1939 + $0x38] sm:$0xf]
    %v1955 = vld [vmem:[%s1939 + $0x3c] sm:$0xf]
    %v1956 = vld [vmem:[%s1939 + $0x40] sm:$0xf]
    %v1957 = vld [vmem:[%s1939 + $0x44] sm:$0xf]
    %v1958 = vld [vmem:[%s1939 + $0x48] sm:$0xf]
    %v1959 = vld [vmem:[%s1939 + $0x4c] sm:$0xf]
    %v1960 = vld [vmem:[%s1939 + $0x50] sm:$0xf]
    %v1961 = vld [vmem:[%s1939 + $0x54] sm:$0xf]
    %v1962 = vld [vmem:[%s1939 + $0x58] sm:$0xf]
    %v1963 = vld [vmem:[%s1939 + $0x5c] sm:$0xf]
    %v1964 = vld [vmem:[%s1939 + $0x60] sm:$0xf]
    %v1965 = vld [vmem:[%s1939 + $0x64] sm:$0xf]
    %v1966 = vld [vmem:[%s1939 + $0x68] sm:$0xf]
    %v1967 = vld [vmem:[%s1939 + $0x6c] sm:$0xf]
    %v1968 = vld [vmem:[%s1939 + $0x70] sm:$0xf]
    %v1969 = vld [vmem:[%s1939 + $0x74] sm:$0xf]
    %v1970 = vld [vmem:[%s1939 + $0x78] sm:$0xf]
    %v1971 = vld [vmem:[%s1939 + $0x7c] sm:$0xf]
    %v1972 = vpack.c.bf16 %v1937, %v1935
    %v1973 = vpack.c.bf16 %v1938, %v1936
    %s1974 = scalar_lea.vmem %s12, 2
    %v1975 = vld [vmem:[%s1974] sm:$0x1]
    %v1977 = vlaneseq
    %v1978 = vshrl.u32 %v1977, 7
    %v1979 = vsub.s32 0, %v1978
    %v1980 = vrot.slane %v1975, %v1979
    %v2014 = vunpack.c.l.b16 %v1940
    %v2015 = vunpack.c.l.b16 %v1941
    %v2016 = vunpack.c.l.b16 %v1942
    %v2017 = vunpack.c.l.b16 %v1943
    %v2018 = vunpack.c.l.b16 %v1944
    %v2019 = vunpack.c.l.b16 %v1945
    %v2020 = vunpack.c.l.b16 %v1946
    %v2021 = vunpack.c.l.b16 %v1947
    %v2022 = vunpack.c.l.b16 %v1948
    %v2023 = vunpack.c.l.b16 %v1949
    %v2024 = vunpack.c.l.b16 %v1950
    %v2025 = vunpack.c.l.b16 %v1951
    %v2026 = vunpack.c.l.b16 %v1952
    %v2027 = vunpack.c.l.b16 %v1953
    %v2028 = vunpack.c.l.b16 %v1954
    %v2029 = vunpack.c.l.b16 %v1955
    %v2030 = vunpack.c.l.b16 %v1956
    %v2031 = vunpack.c.l.b16 %v1957
    %v2032 = vunpack.c.l.b16 %v1958
    %v2033 = vunpack.c.l.b16 %v1959
    %v2034 = vunpack.c.l.b16 %v1960
    %v2035 = vunpack.c.l.b16 %v1961
    %v2036 = vunpack.c.l.b16 %v1962
    %v2037 = vunpack.c.l.b16 %v1963
    %v2038 = vunpack.c.l.b16 %v1964
    %v2039 = vunpack.c.l.b16 %v1965
    %v2040 = vunpack.c.l.b16 %v1966
    %v2041 = vunpack.c.l.b16 %v1967
    %v2042 = vunpack.c.l.b16 %v1968
    %v2043 = vunpack.c.l.b16 %v1969
    %v2044 = vunpack.c.l.b16 %v1970
    %v2045 = vunpack.c.l.b16 %v1971
    %v2046 = vpack.c.b16 %v2015, %v2014
    %v2047 = vpack.c.b16 %v2017, %v2016
    %v2048 = vpack.c.b16 %v2019, %v2018
    %v2049 = vpack.c.b16 %v2021, %v2020
    %v2050 = vpack.c.b16 %v2023, %v2022
    %v2051 = vpack.c.b16 %v2025, %v2024
    %v2052 = vpack.c.b16 %v2027, %v2026
    %v2053 = vpack.c.b16 %v2029, %v2028
    %v2054 = vpack.c.b16 %v2031, %v2030
    %v2055 = vpack.c.b16 %v2033, %v2032
    %v2056 = vpack.c.b16 %v2035, %v2034
    %v2057 = vpack.c.b16 %v2037, %v2036
    %v2058 = vpack.c.b16 %v2039, %v2038
    %v2059 = vpack.c.b16 %v2041, %v2040
    %v2060 = vpack.c.b16 %v2043, %v2042
    %v2061 = vpack.c.b16 %v2045, %v2044
    %2078 = vmatprep.subr.bf16.mxu0 0
    %2079 = vmatpush1.bf16.msra.mxu0 %v2046
    %2080 = vmatprep.subr.bf16.mxu0 0
    %2081 = vmatpush1.bf16.msra.mxu0 %v2047
    %2082 = vmatprep.subr.bf16.mxu0 0
    %2083 = vmatpush1.bf16.msra.mxu0 %v2048
    %2084 = vmatprep.subr.bf16.mxu0 0
    %2085 = vmatpush1.bf16.msra.mxu0 %v2049
    %2086 = vmatprep.subr.bf16.mxu0 0
    %2087 = vmatpush1.bf16.msra.mxu0 %v2050
    %2088 = vmatprep.subr.bf16.mxu0 0
    %2089 = vmatpush1.bf16.msra.mxu0 %v2051
    %2090 = vmatprep.subr.bf16.mxu0 0
    %2091 = vmatpush1.bf16.msra.mxu0 %v2052
    %2092 = vmatprep.subr.bf16.mxu0 0
    %2093 = vmatpush1.bf16.msra.mxu0 %v2053
    %2094 = vmatprep.subr.bf16.mxu0 0
    %2095 = vmatpush1.bf16.msra.mxu0 %v2054
    %2096 = vmatprep.subr.bf16.mxu0 0
    %2097 = vmatpush1.bf16.msra.mxu0 %v2055
    %2098 = vmatprep.subr.bf16.mxu0 0
    %2099 = vmatpush1.bf16.msra.mxu0 %v2056
    %2100 = vmatprep.subr.bf16.mxu0 0
    %2101 = vmatpush1.bf16.msra.mxu0 %v2057
    %2102 = vmatprep.subr.bf16.mxu0 0
    %2103 = vmatpush1.bf16.msra.mxu0 %v2058
    %2104 = vmatprep.subr.bf16.mxu0 0
    %2105 = vmatpush1.bf16.msra.mxu0 %v2059
    %2106 = vmatprep.subr.bf16.mxu0 0
    %2107 = vmatpush1.bf16.msra.mxu0 %v2060
    %2108 = vmatprep.subr.bf16.mxu0 0
    %2109 = vmatpush1.bf16.msra.mxu0 %v2061
    %2110 = vmatprep.mubr.bf16.mxu0 %v1973
    %2111 = vmatmul.mubr.bf16.gmra.mrb[0].mxu0 %v1972
    %v2112 = vpop.f32.mrb[0].mxu0
    %v2113 = vadd.f32 %v1980, %v2112
    %v2114 = vpop.f32.mrb[0].mxu0
    %v2115 = vpop.f32.mrb[0].mxu0
    %v2116 = vadd.f32 %v1980, %v2115
    %v2117 = vpop.f32.mrb[0].mxu0
    %2118 = vdwg.mxu0
    %v2119 = vadd.f32 %v1779, %v2113
    %v2120 = vadd.f32 %v1780, %v2116
    %s2121 = scalar_lea.vmem %s13, 2
    %v2122 = vld [vmem:[%s2121] sm:$0x1]
    %s2123 = scalar_lea.vmem %s14, 2
    %v2124 = vld [vmem:[%s2123] sm:$0x1]
    %2125 = vadd.xlane.f32.xlu0 %v2119
    %v2126 = vpop.xlane.xlu0 %2125
    %2127 = vadd.xlane.f32.xlu0 %v2120
    %v2128 = vpop.xlane.xlu0 %2127
    %v2129 = vmul.f32 %v2126, %v440
    %v2130 = vmul.f32 %v2128, %v440
    %v2131 = vsub.f32 %v2119, %v2129
    %v2132 = vsub.f32 %v2120, %v2130
    %v2133 = vmul.f32 %v2131, %v2131
    %v2134 = vmul.f32 %v2132, %v2132
    %2135 = vadd.xlane.f32.xlu0 %v2133
    %v2136 = vpop.xlane.xlu0 %2135
    %2137 = vadd.xlane.f32.xlu0 %v2134
    %v2138 = vpop.xlane.xlu0 %2137
    %v2139 = vmul.f32 %v2136, %v440
    %v2140 = vmul.f32 %v2138, %v440
    %v2141 = vadd.f32 %v2139, 1e-05
    %v2142 = vadd.f32 %v2140, 1e-05
    %v2143 = vrsqrt.pop %v2141
    %v2144 = vrsqrt.pop %v2142
    %v2145 = vmul.f32 %v2131, %v2143
    %v2146 = vmul.f32 %v2132, %v2144
    %v2148 = vlaneseq
    %v2149 = vshrl.u32 %v2148, 7
    %v2150 = vsub.s32 0, %v2149
    %v2151 = vrot.slane %v2122, %v2150
    %v2153 = vmul.f32 %v2145, %v2151
    %v2154 = vmul.f32 %v2146, %v2151
    %v2156 = vlaneseq
    %v2157 = vshrl.u32 %v2156, 7
    %v2158 = vsub.s32 0, %v2157
    %v2159 = vrot.slane %v2124, %v2158
    %v2161 = vadd.f32 %v2153, %v2159
    %v2162 = vadd.f32 %v2154, %v2159
    %s2163 = scalar_lea.vmem [#allocation2], 192
    %v2164 = vld [vmem:[%s2163] sm:$0xf]
    %v2165 = vld [vmem:[%s2163 + $0x4] sm:$0xf]
    %v2166 = vld [vmem:[%s2163 + $0x8] sm:$0xf]
    %v2167 = vld [vmem:[%s2163 + $0xc] sm:$0xf]
    %v2168 = vld [vmem:[%s2163 + $0x10] sm:$0xf]
    %v2169 = vld [vmem:[%s2163 + $0x14] sm:$0xf]
    %v2170 = vld [vmem:[%s2163 + $0x18] sm:$0xf]
    %v2171 = vld [vmem:[%s2163 + $0x1c] sm:$0xf]
    %v2172 = vld [vmem:[%s2163 + $0x20] sm:$0xf]
    %v2173 = vld [vmem:[%s2163 + $0x24] sm:$0xf]
    %v2174 = vld [vmem:[%s2163 + $0x28] sm:$0xf]
    %v2175 = vld [vmem:[%s2163 + $0x2c] sm:$0xf]
    %v2176 = vld [vmem:[%s2163 + $0x30] sm:$0xf]
    %v2177 = vld [vmem:[%s2163 + $0x34] sm:$0xf]
    %v2178 = vld [vmem:[%s2163 + $0x38] sm:$0xf]
    %v2179 = vld [vmem:[%s2163 + $0x3c] sm:$0xf]
    %v2180 = vpack.c.bf16 %v2162, %v2161
    %s2181 = scalar_lea.vmem %s4, 3
    %v2182 = vld [vmem:[%s2181] sm:$0x1]
    %v2184 = vlaneseq
    %v2185 = vshrl.u32 %v2184, 7
    %v2186 = vsub.s32 0, %v2185
    %v2187 = vrot.slane %v2182, %v2186
    %v2205 = vunpack.c.l.b16 %v2164
    %v2206 = vunpack.c.l.b16 %v2165
    %v2207 = vunpack.c.l.b16 %v2166
    %v2208 = vunpack.c.l.b16 %v2167
    %v2209 = vunpack.c.l.b16 %v2168
    %v2210 = vunpack.c.l.b16 %v2169
    %v2211 = vunpack.c.l.b16 %v2170
    %v2212 = vunpack.c.l.b16 %v2171
    %v2213 = vunpack.c.l.b16 %v2172
    %v2214 = vunpack.c.l.b16 %v2173
    %v2215 = vunpack.c.l.b16 %v2174
    %v2216 = vunpack.c.l.b16 %v2175
    %v2217 = vunpack.c.l.b16 %v2176
    %v2218 = vunpack.c.l.b16 %v2177
    %v2219 = vunpack.c.l.b16 %v2178
    %v2220 = vunpack.c.l.b16 %v2179
    %v2221 = vpack.c.b16 %v2206, %v2205
    %v2222 = vpack.c.b16 %v2208, %v2207
    %v2223 = vpack.c.b16 %v2210, %v2209
    %v2224 = vpack.c.b16 %v2212, %v2211
    %v2225 = vpack.c.b16 %v2214, %v2213
    %v2226 = vpack.c.b16 %v2216, %v2215
    %v2227 = vpack.c.b16 %v2218, %v2217
    %v2228 = vpack.c.b16 %v2220, %v2219
    %2237 = vmatprep.subr.bf16.mxu0 0
    %2238 = vmatpush1.bf16.msra.mxu0 %v2221
    %2239 = vmatprep.subr.bf16.mxu0 0
    %2240 = vmatpush1.bf16.msra.mxu0 %v2222
    %2241 = vmatprep.subr.bf16.mxu0 0
    %2242 = vmatpush1.bf16.msra.mxu0 %v2223
    %2243 = vmatprep.subr.bf16.mxu0 0
    %2244 = vmatpush1.bf16.msra.mxu0 %v2224
    %2245 = vmatprep.subr.bf16.mxu0 0
    %2246 = vmatpush1.bf16.msra.mxu0 %v2225
    %2247 = vmatprep.subr.bf16.mxu0 0
    %2248 = vmatpush1.bf16.msra.mxu0 %v2226
    %2249 = vmatprep.subr.bf16.mxu0 0
    %2250 = vmatpush1.bf16.msra.mxu0 %v2227
    %2251 = vmatprep.subr.bf16.mxu0 0
    %2252 = vmatpush1.bf16.msra.mxu0 %v2228
    %2253 = vmatprep.subr.bf16.mxu0 0
    %2254 = vmatpush1.bf16.msra.mxu0 0
    %2255 = vmatprep.subr.bf16.mxu0 0
    %2256 = vmatpush1.bf16.msra.mxu0 0
    %2257 = vmatprep.subr.bf16.mxu0 0
    %2258 = vmatpush1.bf16.msra.mxu0 0
    %2259 = vmatprep.subr.bf16.mxu0 0
    %2260 = vmatpush1.bf16.msra.mxu0 0
    %2261 = vmatprep.subr.bf16.mxu0 0
    %2262 = vmatpush1.bf16.msra.mxu0 0
    %2263 = vmatprep.subr.bf16.mxu0 0
    %2264 = vmatpush1.bf16.msra.mxu0 0
    %2265 = vmatprep.subr.bf16.mxu0 0
    %2266 = vmatpush1.bf16.msra.mxu0 0
    %2267 = vmatprep.subr.bf16.mxu0 0
    %2268 = vmatpush1.bf16.msra.mxu0 0
    %2269 = vmatprep.mubr.bf16.mxu0 0
    %2270 = vmatmul.mubr.bf16.gmra.mrb[0].mxu0 %v2180
    %v2271 = vpop.f32.mrb[0].mxu0
    %v2272 = vadd.f32 %v2187, %v2271
    %v2273 = vpop.f32.mrb[0].mxu0
    %v2274 = vpop.f32.mrb[0].mxu0
    %v2275 = vadd.f32 %v2187, %v2274
    %v2276 = vpop.f32.mrb[0].mxu0
    %2277 = vdwg.mxu0
    %s2278 = scalar_lea.vmem [#allocation5], 192
    %v2279 = vld [vmem:[%s2278] sm:$0xf]
    %v2280 = vld [vmem:[%s2278 + $0x4] sm:$0xf]
    %v2281 = vld [vmem:[%s2278 + $0x8] sm:$0xf]
    %v2282 = vld [vmem:[%s2278 + $0xc] sm:$0xf]
    %v2283 = vld [vmem:[%s2278 + $0x10] sm:$0xf]
    %v2284 = vld [vmem:[%s2278 + $0x14] sm:$0xf]
    %v2285 = vld [vmem:[%s2278 + $0x18] sm:$0xf]
    %v2286 = vld [vmem:[%s2278 + $0x1c] sm:$0xf]
    %v2287 = vld [vmem:[%s2278 + $0x20] sm:$0xf]
    %v2288 = vld [vmem:[%s2278 + $0x24] sm:$0xf]
    %v2289 = vld [vmem:[%s2278 + $0x28] sm:$0xf]
    %v2290 = vld [vmem:[%s2278 + $0x2c] sm:$0xf]
    %v2291 = vld [vmem:[%s2278 + $0x30] sm:$0xf]
    %v2292 = vld [vmem:[%s2278 + $0x34] sm:$0xf]
    %v2293 = vld [vmem:[%s2278 + $0x38] sm:$0xf]
    %v2294 = vld [vmem:[%s2278 + $0x3c] sm:$0xf]
    %v2295 = vpack.c.bf16 %v2275, %v2272
    %s2296 = scalar_lea.vmem %s6, 3
    %v2297 = vld [vmem:[%s2296] sm:$0x1]
    %v2299 = vlaneseq
    %v2300 = vshrl.u32 %v2299, 7
    %v2301 = vsub.s32 0, %v2300
    %v2302 = vrot.slane %v2297, %v2301
    %v2320 = vunpack.c.l.b16 %v2279
    %v2321 = vunpack.c.l.b16 %v2280
    %v2322 = vunpack.c.l.b16 %v2281
    %v2323 = vunpack.c.l.b16 %v2282
    %v2324 = vunpack.c.l.b16 %v2283
    %v2325 = vunpack.c.l.b16 %v2284
    %v2326 = vunpack.c.l.b16 %v2285
    %v2327 = vunpack.c.l.b16 %v2286
    %v2328 = vunpack.c.l.b16 %v2287
    %v2329 = vunpack.c.l.b16 %v2288
    %v2330 = vunpack.c.l.b16 %v2289
    %v2331 = vunpack.c.l.b16 %v2290
    %v2332 = vunpack.c.l.b16 %v2291
    %v2333 = vunpack.c.l.b16 %v2292
    %v2334 = vunpack.c.l.b16 %v2293
    %v2335 = vunpack.c.l.b16 %v2294
    %v2336 = vpack.c.b16 %v2321, %v2320
    %v2337 = vpack.c.b16 %v2323, %v2322
    %v2338 = vpack.c.b16 %v2325, %v2324
    %v2339 = vpack.c.b16 %v2327, %v2326
    %v2340 = vpack.c.b16 %v2329, %v2328
    %v2341 = vpack.c.b16 %v2331, %v2330
    %v2342 = vpack.c.b16 %v2333, %v2332
    %v2343 = vpack.c.b16 %v2335, %v2334
    %2352 = vmatprep.subr.bf16.mxu0 0
    %2353 = vmatpush1.bf16.msra.mxu0 %v2336
    %2354 = vmatprep.subr.bf16.mxu0 0
    %2355 = vmatpush1.bf16.msra.mxu0 %v2337
    %2356 = vmatprep.subr.bf16.mxu0 0
    %2357 = vmatpush1.bf16.msra.mxu0 %v2338
    %2358 = vmatprep.subr.bf16.mxu0 0
    %2359 = vmatpush1.bf16.msra.mxu0 %v2339
    %2360 = vmatprep.subr.bf16.mxu0 0
    %2361 = vmatpush1.bf16.msra.mxu0 %v2340
    %2362 = vmatprep.subr.bf16.mxu0 0
    %2363 = vmatpush1.bf16.msra.mxu0 %v2341
    %2364 = vmatprep.subr.bf16.mxu0 0
    %2365 = vmatpush1.bf16.msra.mxu0 %v2342
    %2366 = vmatprep.subr.bf16.mxu0 0
    %2367 = vmatpush1.bf16.msra.mxu0 %v2343
    %2368 = vmatprep.subr.bf16.mxu0 0
    %2369 = vmatpush1.bf16.msra.mxu0 0
    %2370 = vmatprep.subr.bf16.mxu0 0
    %2371 = vmatpush1.bf16.msra.mxu0 0
    %2372 = vmatprep.subr.bf16.mxu0 0
    %2373 = vmatpush1.bf16.msra.mxu0 0
    %2374 = vmatprep.subr.bf16.mxu0 0
    %2375 = vmatpush1.bf16.msra.mxu0 0
    %2376 = vmatprep.subr.bf16.mxu0 0
    %2377 = vmatpush1.bf16.msra.mxu0 0
    %2378 = vmatprep.subr.bf16.mxu0 0
    %2379 = vmatpush1.bf16.msra.mxu0 0
    %2380 = vmatprep.subr.bf16.mxu0 0
    %2381 = vmatpush1.bf16.msra.mxu0 0
    %2382 = vmatprep.subr.bf16.mxu0 0
    %2383 = vmatpush1.bf16.msra.mxu0 0
    %2384 = vmatprep.mubr.bf16.mxu0 0
    %2385 = vmatmul.mubr.bf16.gmra.mrb[0].mxu0 %v2295
    %v2386 = vpop.f32.mrb[0].mxu0
    %v2387 = vadd.f32 %v2302, %v2386
    %v2388 = vpop.f32.mrb[0].mxu0
    %v2389 = vpop.f32.mrb[0].mxu0
    %v2390 = vadd.f32 %v2302, %v2389
    %v2391 = vpop.f32.mrb[0].mxu0
    %2392 = vdwg.mxu0
    %v2393 = vadd.f32 %v2161, %v2387
    %v2394 = vadd.f32 %v2162, %v2390
    %s2395 = scalar_lea.vmem %s7, 3
    %v2396 = vld [vmem:[%s2395] sm:$0x1]
    %s2397 = scalar_lea.vmem %s8, 3
    %v2398 = vld [vmem:[%s2397] sm:$0x1]
    %2399 = vadd.xlane.f32.xlu0 %v2393
    %v2400 = vpop.xlane.xlu0 %2399
    %2401 = vadd.xlane.f32.xlu0 %v2394
    %v2402 = vpop.xlane.xlu0 %2401
    %v2403 = vmul.f32 %v2400, %v440
    %v2404 = vmul.f32 %v2402, %v440
    %v2405 = vsub.f32 %v2393, %v2403
    %v2406 = vsub.f32 %v2394, %v2404
    %v2407 = vmul.f32 %v2405, %v2405
    %v2408 = vmul.f32 %v2406, %v2406
    %2409 = vadd.xlane.f32.xlu0 %v2407
    %v2410 = vpop.xlane.xlu0 %2409
    %2411 = vadd.xlane.f32.xlu0 %v2408
    %v2412 = vpop.xlane.xlu0 %2411
    %v2413 = vmul.f32 %v2410, %v440
    %v2414 = vmul.f32 %v2412, %v440
    %v2415 = vadd.f32 %v2413, 1e-05
    %v2416 = vadd.f32 %v2414, 1e-05
    %v2417 = vrsqrt.pop %v2415
    %v2418 = vrsqrt.pop %v2416
    %v2419 = vmul.f32 %v2405, %v2417
    %v2420 = vmul.f32 %v2406, %v2418
    %v2422 = vlaneseq
    %v2423 = vshrl.u32 %v2422, 7
    %v2424 = vsub.s32 0, %v2423
    %v2425 = vrot.slane %v2396, %v2424
    %v2427 = vmul.f32 %v2419, %v2425
    %v2428 = vmul.f32 %v2420, %v2425
    %v2430 = vlaneseq
    %v2431 = vshrl.u32 %v2430, 7
    %v2432 = vsub.s32 0, %v2431
    %v2433 = vrot.slane %v2398, %v2432
    %v2435 = vadd.f32 %v2427, %v2433
    %v2436 = vadd.f32 %v2428, %v2433
    %s2437 = scalar_lea.vmem [#allocation7], 384
    %v2438 = vld [vmem:[%s2437] sm:$0xff]
    %v2439 = vld [vmem:[%s2437 + $0x8] sm:$0xff]
    %v2440 = vld [vmem:[%s2437 + $0x10] sm:$0xff]
    %v2441 = vld [vmem:[%s2437 + $0x18] sm:$0xff]
    %v2442 = vld [vmem:[%s2437 + $0x20] sm:$0xff]
    %v2443 = vld [vmem:[%s2437 + $0x28] sm:$0xff]
    %v2444 = vld [vmem:[%s2437 + $0x30] sm:$0xff]
    %v2445 = vld [vmem:[%s2437 + $0x38] sm:$0xff]
    %v2446 = vld [vmem:[%s2437 + $0x40] sm:$0xff]
    %v2447 = vld [vmem:[%s2437 + $0x48] sm:$0xff]
    %v2448 = vld [vmem:[%s2437 + $0x50] sm:$0xff]
    %v2449 = vld [vmem:[%s2437 + $0x58] sm:$0xff]
    %v2450 = vld [vmem:[%s2437 + $0x60] sm:$0xff]
    %v2451 = vld [vmem:[%s2437 + $0x68] sm:$0xff]
    %v2452 = vld [vmem:[%s2437 + $0x70] sm:$0xff]
    %v2453 = vld [vmem:[%s2437 + $0x78] sm:$0xff]
    %v2454 = vpack.c.bf16 %v2436, %v2435
    %s2455 = scalar_lea.vmem %s10, 6
    %v2456 = vld [vmem:[%s2455] sm:$0x3]
    %v2458 = vlaneseq
    %v2459 = vshrl.u32 %v2458, 7
    %v2460 = vsub.s32 0, %v2459
    %v2461 = vrot.slane %v2456, %v2460
    %v2462 = vlaneseq
    %v2463 = vshrl.u32 %v2462, 7
    %v2464 = vsub.s32 1, %v2463
    %v2465 = vrot.slane %v2456, %v2464
    %v2484 = vunpack.c.l.b16 %v2438
    %v2485 = vunpack.c.h.b16 %v2438
    %v2486 = vunpack.c.l.b16 %v2439
    %v2487 = vunpack.c.h.b16 %v2439
    %v2488 = vunpack.c.l.b16 %v2440
    %v2489 = vunpack.c.h.b16 %v2440
    %v2490 = vunpack.c.l.b16 %v2441
    %v2491 = vunpack.c.h.b16 %v2441
    %v2492 = vunpack.c.l.b16 %v2442
    %v2493 = vunpack.c.h.b16 %v2442
    %v2494 = vunpack.c.l.b16 %v2443
    %v2495 = vunpack.c.h.b16 %v2443
    %v2496 = vunpack.c.l.b16 %v2444
    %v2497 = vunpack.c.h.b16 %v2444
    %v2498 = vunpack.c.l.b16 %v2445
    %v2499 = vunpack.c.h.b16 %v2445
    %v2500 = vunpack.c.l.b16 %v2446
    %v2501 = vunpack.c.h.b16 %v2446
    %v2502 = vunpack.c.l.b16 %v2447
    %v2503 = vunpack.c.h.b16 %v2447
    %v2504 = vunpack.c.l.b16 %v2448
    %v2505 = vunpack.c.h.b16 %v2448
    %v2506 = vunpack.c.l.b16 %v2449
    %v2507 = vunpack.c.h.b16 %v2449
    %v2508 = vunpack.c.l.b16 %v2450
    %v2509 = vunpack.c.h.b16 %v2450
    %v2510 = vunpack.c.l.b16 %v2451
    %v2511 = vunpack.c.h.b16 %v2451
    %v2512 = vunpack.c.l.b16 %v2452
    %v2513 = vunpack.c.h.b16 %v2452
    %v2514 = vunpack.c.l.b16 %v2453
    %v2515 = vunpack.c.h.b16 %v2453
    %v2516 = vpack.c.b16 %v2486, %v2484
    %v2517 = vpack.c.b16 %v2487, %v2485
    %v2518 = vpack.c.b16 %v2490, %v2488
    %v2519 = vpack.c.b16 %v2491, %v2489
    %v2520 = vpack.c.b16 %v2494, %v2492
    %v2521 = vpack.c.b16 %v2495, %v2493
    %v2522 = vpack.c.b16 %v2498, %v2496
    %v2523 = vpack.c.b16 %v2499, %v2497
    %v2524 = vpack.c.b16 %v2502, %v2500
    %v2525 = vpack.c.b16 %v2503, %v2501
    %v2526 = vpack.c.b16 %v2506, %v2504
    %v2527 = vpack.c.b16 %v2507, %v2505
    %v2528 = vpack.c.b16 %v2510, %v2508
    %v2529 = vpack.c.b16 %v2511, %v2509
    %v2530 = vpack.c.b16 %v2514, %v2512
    %v2531 = vpack.c.b16 %v2515, %v2513
    %2548 = vmatprep.subr.bf16.mxu0 %v2517
    %2549 = vmatpush1.bf16.msra.mxu0 %v2516
    %2550 = vmatprep.subr.bf16.mxu0 %v2519
    %2551 = vmatpush1.bf16.msra.mxu0 %v2518
    %2552 = vmatprep.subr.bf16.mxu0 %v2521
    %2553 = vmatpush1.bf16.msra.mxu0 %v2520
    %2554 = vmatprep.subr.bf16.mxu0 %v2523
    %2555 = vmatpush1.bf16.msra.mxu0 %v2522
    %2556 = vmatprep.subr.bf16.mxu0 %v2525
    %2557 = vmatpush1.bf16.msra.mxu0 %v2524
    %2558 = vmatprep.subr.bf16.mxu0 %v2527
    %2559 = vmatpush1.bf16.msra.mxu0 %v2526
    %2560 = vmatprep.subr.bf16.mxu0 %v2529
    %2561 = vmatpush1.bf16.msra.mxu0 %v2528
    %2562 = vmatprep.subr.bf16.mxu0 %v2531
    %2563 = vmatpush1.bf16.msra.mxu0 %v2530
    %2564 = vmatprep.subr.bf16.mxu0 0
    %2565 = vmatpush1.bf16.msra.mxu0 0
    %2566 = vmatprep.subr.bf16.mxu0 0
    %2567 = vmatpush1.bf16.msra.mxu0 0
    %2568 = vmatprep.subr.bf16.mxu0 0
    %2569 = vmatpush1.bf16.msra.mxu0 0
    %2570 = vmatprep.subr.bf16.mxu0 0
    %2571 = vmatpush1.bf16.msra.mxu0 0
    %2572 = vmatprep.subr.bf16.mxu0 0
    %2573 = vmatpush1.bf16.msra.mxu0 0
    %2574 = vmatprep.subr.bf16.mxu0 0
    %2575 = vmatpush1.bf16.msra.mxu0 0
    %2576 = vmatprep.subr.bf16.mxu0 0
    %2577 = vmatpush1.bf16.msra.mxu0 0
    %2578 = vmatprep.subr.bf16.mxu0 0
    %2579 = vmatpush1.bf16.msra.mxu0 0
    %2580 = vmatprep.mubr.bf16.mxu0 0
    %2581 = vmatmul.mubr.bf16.gmra.mrb[0].mxu0 %v2454
    %v2582 = vpop.f32.mrb[0].mxu0
    %v2583 = vadd.f32 %v2461, %v2582
    %v2584 = vpop.f32.mrb[0].mxu0
    %v2585 = vadd.f32 %v2465, %v2584
    %v2586 = vpop.f32.mrb[0].mxu0
    %v2587 = vadd.f32 %v2461, %v2586
    %v2588 = vpop.f32.mrb[0].mxu0
    %v2589 = vadd.f32 %v2465, %v2588
    %2590 = vdwg.mxu0
    %v2591 = vmax.f32 %v2583, 0.0
    %v2592 = vmax.f32 %v2585, 0.0
    %v2593 = vmax.f32 %v2587, 0.0
    %v2594 = vmax.f32 %v2589, 0.0
    %s2595 = scalar_lea.vmem [#allocation8], 384
    %v2596 = vld [vmem:[%s2595] sm:$0xf]
    %v2597 = vld [vmem:[%s2595 + $0x4] sm:$0xf]
    %v2598 = vld [vmem:[%s2595 + $0x8] sm:$0xf]
    %v2599 = vld [vmem:[%s2595 + $0xc] sm:$0xf]
    %v2600 = vld [vmem:[%s2595 + $0x10] sm:$0xf]
    %v2601 = vld [vmem:[%s2595 + $0x14] sm:$0xf]
    %v2602 = vld [vmem:[%s2595 + $0x18] sm:$0xf]
    %v2603 = vld [vmem:[%s2595 + $0x1c] sm:$0xf]
    %v2604 = vld [vmem:[%s2595 + $0x20] sm:$0xf]
    %v2605 = vld [vmem:[%s2595 + $0x24] sm:$0xf]
    %v2606 = vld [vmem:[%s2595 + $0x28] sm:$0xf]
    %v2607 = vld [vmem:[%s2595 + $0x2c] sm:$0xf]
    %v2608 = vld [vmem:[%s2595 + $0x30] sm:$0xf]
    %v2609 = vld [vmem:[%s2595 + $0x34] sm:$0xf]
    %v2610 = vld [vmem:[%s2595 + $0x38] sm:$0xf]
    %v2611 = vld [vmem:[%s2595 + $0x3c] sm:$0xf]
    %v2612 = vld [vmem:[%s2595 + $0x40] sm:$0xf]
    %v2613 = vld [vmem:[%s2595 + $0x44] sm:$0xf]
    %v2614 = vld [vmem:[%s2595 + $0x48] sm:$0xf]
    %v2615 = vld [vmem:[%s2595 + $0x4c] sm:$0xf]
    %v2616 = vld [vmem:[%s2595 + $0x50] sm:$0xf]
    %v2617 = vld [vmem:[%s2595 + $0x54] sm:$0xf]
    %v2618 = vld [vmem:[%s2595 + $0x58] sm:$0xf]
    %v2619 = vld [vmem:[%s2595 + $0x5c] sm:$0xf]
    %v2620 = vld [vmem:[%s2595 + $0x60] sm:$0xf]
    %v2621 = vld [vmem:[%s2595 + $0x64] sm:$0xf]
    %v2622 = vld [vmem:[%s2595 + $0x68] sm:$0xf]
    %v2623 = vld [vmem:[%s2595 + $0x6c] sm:$0xf]
    %v2624 = vld [vmem:[%s2595 + $0x70] sm:$0xf]
    %v2625 = vld [vmem:[%s2595 + $0x74] sm:$0xf]
    %v2626 = vld [vmem:[%s2595 + $0x78] sm:$0xf]
    %v2627 = vld [vmem:[%s2595 + $0x7c] sm:$0xf]
    %v2628 = vpack.c.bf16 %v2593, %v2591
    %v2629 = vpack.c.bf16 %v2594, %v2592
    %s2630 = scalar_lea.vmem %s12, 3
    %v2631 = vld [vmem:[%s2630] sm:$0x1]
    %v2633 = vlaneseq
    %v2634 = vshrl.u32 %v2633, 7
    %v2635 = vsub.s32 0, %v2634
    %v2636 = vrot.slane %v2631, %v2635
    %v2670 = vunpack.c.l.b16 %v2596
    %v2671 = vunpack.c.l.b16 %v2597
    %v2672 = vunpack.c.l.b16 %v2598
    %v2673 = vunpack.c.l.b16 %v2599
    %v2674 = vunpack.c.l.b16 %v2600
    %v2675 = vunpack.c.l.b16 %v2601
    %v2676 = vunpack.c.l.b16 %v2602
    %v2677 = vunpack.c.l.b16 %v2603
    %v2678 = vunpack.c.l.b16 %v2604
    %v2679 = vunpack.c.l.b16 %v2605
    %v2680 = vunpack.c.l.b16 %v2606
    %v2681 = vunpack.c.l.b16 %v2607
    %v2682 = vunpack.c.l.b16 %v2608
    %v2683 = vunpack.c.l.b16 %v2609
    %v2684 = vunpack.c.l.b16 %v2610
    %v2685 = vunpack.c.l.b16 %v2611
    %v2686 = vunpack.c.l.b16 %v2612
    %v2687 = vunpack.c.l.b16 %v2613
    %v2688 = vunpack.c.l.b16 %v2614
    %v2689 = vunpack.c.l.b16 %v2615
    %v2690 = vunpack.c.l.b16 %v2616
    %v2691 = vunpack.c.l.b16 %v2617
    %v2692 = vunpack.c.l.b16 %v2618
    %v2693 = vunpack.c.l.b16 %v2619
    %v2694 = vunpack.c.l.b16 %v2620
    %v2695 = vunpack.c.l.b16 %v2621
    %v2696 = vunpack.c.l.b16 %v2622
    %v2697 = vunpack.c.l.b16 %v2623
    %v2698 = vunpack.c.l.b16 %v2624
    %v2699 = vunpack.c.l.b16 %v2625
    %v2700 = vunpack.c.l.b16 %v2626
    %v2701 = vunpack.c.l.b16 %v2627
    %v2702 = vpack.c.b16 %v2671, %v2670
    %v2703 = vpack.c.b16 %v2673, %v2672
    %v2704 = vpack.c.b16 %v2675, %v2674
    %v2705 = vpack.c.b16 %v2677, %v2676
    %v2706 = vpack.c.b16 %v2679, %v2678
    %v2707 = vpack.c.b16 %v2681, %v2680
    %v2708 = vpack.c.b16 %v2683, %v2682
    %v2709 = vpack.c.b16 %v2685, %v2684
    %v2710 = vpack.c.b16 %v2687, %v2686
    %v2711 = vpack.c.b16 %v2689, %v2688
    %v2712 = vpack.c.b16 %v2691, %v2690
    %v2713 = vpack.c.b16 %v2693, %v2692
    %v2714 = vpack.c.b16 %v2695, %v2694
    %v2715 = vpack.c.b16 %v2697, %v2696
    %v2716 = vpack.c.b16 %v2699, %v2698
    %v2717 = vpack.c.b16 %v2701, %v2700
    %2734 = vmatprep.subr.bf16.mxu0 0
    %2735 = vmatpush1.bf16.msra.mxu0 %v2702
    %2736 = vmatprep.subr.bf16.mxu0 0
    %2737 = vmatpush1.bf16.msra.mxu0 %v2703
    %2738 = vmatprep.subr.bf16.mxu0 0
    %2739 = vmatpush1.bf16.msra.mxu0 %v2704
    %2740 = vmatprep.subr.bf16.mxu0 0
    %2741 = vmatpush1.bf16.msra.mxu0 %v2705
    %2742 = vmatprep.subr.bf16.mxu0 0
    %2743 = vmatpush1.bf16.msra.mxu0 %v2706
    %2744 = vmatprep.subr.bf16.mxu0 0
    %2745 = vmatpush1.bf16.msra.mxu0 %v2707
    %2746 = vmatprep.subr.bf16.mxu0 0
    %2747 = vmatpush1.bf16.msra.mxu0 %v2708
    %2748 = vmatprep.subr.bf16.mxu0 0
    %2749 = vmatpush1.bf16.msra.mxu0 %v2709
    %2750 = vmatprep.subr.bf16.mxu0 0
    %2751 = vmatpush1.bf16.msra.mxu0 %v2710
    %2752 = vmatprep.subr.bf16.mxu0 0
    %2753 = vmatpush1.bf16.msra.mxu0 %v2711
    %2754 = vmatprep.subr.bf16.mxu0 0
    %2755 = vmatpush1.bf16.msra.mxu0 %v2712
    %2756 = vmatprep.subr.bf16.mxu0 0
    %2757 = vmatpush1.bf16.msra.mxu0 %v2713
    %2758 = vmatprep.subr.bf16.mxu0 0
    %2759 = vmatpush1.bf16.msra.mxu0 %v2714
    %2760 = vmatprep.subr.bf16.mxu0 0
    %2761 = vmatpush1.bf16.msra.mxu0 %v2715
    %2762 = vmatprep.subr.bf16.mxu0 0
    %2763 = vmatpush1.bf16.msra.mxu0 %v2716
    %2764 = vmatprep.subr.bf16.mxu0 0
    %2765 = vmatpush1.bf16.msra.mxu0 %v2717
    %2766 = vmatprep.mubr.bf16.mxu0 %v2629
    %2767 = vmatmul.mubr.bf16.gmra.mrb[0].mxu0 %v2628
    %v2768 = vpop.f32.mrb[0].mxu0
    %v2769 = vadd.f32 %v2636, %v2768
    %v2770 = vpop.f32.mrb[0].mxu0
    %v2771 = vpop.f32.mrb[0].mxu0
    %v2772 = vadd.f32 %v2636, %v2771
    %v2773 = vpop.f32.mrb[0].mxu0
    %2774 = vdwg.mxu0
    %v2775 = vadd.f32 %v2435, %v2769
    %v2776 = vadd.f32 %v2436, %v2772
    %s2777 = scalar_lea.vmem %s13, 3
    %v2778 = vld [vmem:[%s2777] sm:$0x1]
    %s2779 = scalar_lea.vmem %s14, 3
    %v2780 = vld [vmem:[%s2779] sm:$0x1]
    %2781 = vadd.xlane.f32.xlu0 %v2775
    %v2782 = vpop.xlane.xlu0 %2781
    %2783 = vadd.xlane.f32.xlu0 %v2776
    %v2784 = vpop.xlane.xlu0 %2783
    %v2785 = vmul.f32 %v2782, %v440
    %v2786 = vmul.f32 %v2784, %v440
    %v2787 = vsub.f32 %v2775, %v2785
    %v2788 = vsub.f32 %v2776, %v2786
    %v2789 = vmul.f32 %v2787, %v2787
    %v2790 = vmul.f32 %v2788, %v2788
    %2791 = vadd.xlane.f32.xlu0 %v2789
    %v2792 = vpop.xlane.xlu0 %2791
    %2793 = vadd.xlane.f32.xlu0 %v2790
    %v2794 = vpop.xlane.xlu0 %2793
    %v2795 = vmul.f32 %v2792, %v440
    %v2796 = vmul.f32 %v2794, %v440
    %v2797 = vadd.f32 %v2795, 1e-05
    %v2798 = vadd.f32 %v2796, 1e-05
    %v2799 = vrsqrt.pop %v2797
    %v2800 = vrsqrt.pop %v2798
    %v2801 = vmul.f32 %v2787, %v2799
    %v2802 = vmul.f32 %v2788, %v2800
    %v2804 = vlaneseq
    %v2805 = vshrl.u32 %v2804, 7
    %v2806 = vsub.s32 0, %v2805
    %v2807 = vrot.slane %v2778, %v2806
    %v2809 = vmul.f32 %v2801, %v2807
    %v2810 = vmul.f32 %v2802, %v2807
    %v2812 = vlaneseq
    %v2813 = vshrl.u32 %v2812, 7
    %v2814 = vsub.s32 0, %v2813
    %v2815 = vrot.slane %v2780, %v2814
    %v2817 = vadd.f32 %v2809, %v2815
    %v2818 = vadd.f32 %v2810, %v2815
    %v2819 = vld [vmem:[%s15] sm:$0xf]
    %v2820 = vld [vmem:[%s15 + $0x4] sm:$0xf]
    %v2821 = vld [vmem:[%s15 + $0x8] sm:$0xf]
    %v2822 = vld [vmem:[%s15 + $0xc] sm:$0xf]
    %v2823 = vld [vmem:[%s15 + $0x10] sm:$0xf]
    %v2824 = vld [vmem:[%s15 + $0x14] sm:$0xf]
    %v2825 = vld [vmem:[%s15 + $0x18] sm:$0xf]
    %v2826 = vld [vmem:[%s15 + $0x1c] sm:$0xf]
    %v2827 = vld [vmem:[%s15 + $0x20] sm:$0xf]
    %v2828 = vld [vmem:[%s15 + $0x24] sm:$0xf]
    %v2829 = vld [vmem:[%s15 + $0x28] sm:$0xf]
    %v2830 = vld [vmem:[%s15 + $0x2c] sm:$0xf]
    %v2831 = vld [vmem:[%s15 + $0x30] sm:$0xf]
    %v2832 = vld [vmem:[%s15 + $0x34] sm:$0xf]
    %v2833 = vld [vmem:[%s15 + $0x38] sm:$0xf]
    %v2834 = vld [vmem:[%s15 + $0x3c] sm:$0xf]
    %v2835 = vpack.c.bf16 %v2818, %v2817
    %v2836 = vld [vmem:[%s16] sm:$0x1]
    %v2838 = vlaneseq
    %v2839 = vshrl.u32 %v2838, 7
    %v2840 = vsub.s32 0, %v2839
    %v2841 = vrot.slane %v2836, %v2840
    %v2859 = vunpack.c.l.b16 %v2819
    %v2860 = vunpack.c.l.b16 %v2820
    %v2861 = vunpack.c.l.b16 %v2821
    %v2862 = vunpack.c.l.b16 %v2822
    %v2863 = vunpack.c.l.b16 %v2823
    %v2864 = vunpack.c.l.b16 %v2824
    %v2865 = vunpack.c.l.b16 %v2825
    %v2866 = vunpack.c.l.b16 %v2826
    %v2867 = vunpack.c.l.b16 %v2827
    %v2868 = vunpack.c.l.b16 %v2828
    %v2869 = vunpack.c.l.b16 %v2829
    %v2870 = vunpack.c.l.b16 %v2830
    %v2871 = vunpack.c.l.b16 %v2831
    %v2872 = vunpack.c.l.b16 %v2832
    %v2873 = vunpack.c.l.b16 %v2833
    %v2874 = vunpack.c.l.b16 %v2834
    %v2875 = vpack.c.b16 %v2860, %v2859
    %v2876 = vpack.c.b16 %v2862, %v2861
    %v2877 = vpack.c.b16 %v2864, %v2863
    %v2878 = vpack.c.b16 %v2866, %v2865
    %v2879 = vpack.c.b16 %v2868, %v2867
    %v2880 = vpack.c.b16 %v2870, %v2869
    %v2881 = vpack.c.b16 %v2872, %v2871
    %v2882 = vpack.c.b16 %v2874, %v2873
    %2891 = vmatprep.subr.bf16.mxu0 0
    %2892 = vmatpush1.bf16.msra.mxu0 %v2875
    %2893 = vmatprep.subr.bf16.mxu0 0
    %2894 = vmatpush1.bf16.msra.mxu0 %v2876
    %2895 = vmatprep.subr.bf16.mxu0 0
    %2896 = vmatpush1.bf16.msra.mxu0 %v2877
    %2897 = vmatprep.subr.bf16.mxu0 0
    %2898 = vmatpush1.bf16.msra.mxu0 %v2878
    %2899 = vmatprep.subr.bf16.mxu0 0
    %2900 = vmatpush1.bf16.msra.mxu0 %v2879
    %2901 = vmatprep.subr.bf16.mxu0 0
    %2902 = vmatpush1.bf16.msra.mxu0 %v2880
    %2903 = vmatprep.subr.bf16.mxu0 0
    %2904 = vmatpush1.bf16.msra.mxu0 %v2881
    %2905 = vmatprep.subr.bf16.mxu0 0
    %2906 = vmatpush1.bf16.msra.mxu0 %v2882
    %2907 = vmatprep.subr.bf16.mxu0 0
    %2908 = vmatpush1.bf16.msra.mxu0 0
    %2909 = vmatprep.subr.bf16.mxu0 0
    %2910 = vmatpush1.bf16.msra.mxu0 0
    %2911 = vmatprep.subr.bf16.mxu0 0
    %2912 = vmatpush1.bf16.msra.mxu0 0
    %2913 = vmatprep.subr.bf16.mxu0 0
    %2914 = vmatpush1.bf16.msra.mxu0 0
    %2915 = vmatprep.subr.bf16.mxu0 0
    %2916 = vmatpush1.bf16.msra.mxu0 0
    %2917 = vmatprep.subr.bf16.mxu0 0
    %2918 = vmatpush1.bf16.msra.mxu0 0
    %2919 = vmatprep.subr.bf16.mxu0 0
    %2920 = vmatpush1.bf16.msra.mxu0 0
    %2921 = vmatprep.subr.bf16.mxu0 0
    %2922 = vmatpush1.bf16.msra.mxu0 0
    %2923 = vmatprep.mubr.bf16.mxu0 0
    %2924 = vmatmul.mubr.bf16.gmra.mrb[0].mxu0 %v2835
    %v2925 = vpop.f32.mrb[0].mxu0
    %v2926 = vadd.f32 %v2841, %v2925
    %v2927 = vpop.f32.mrb[0].mxu0
    %v2928 = vpop.f32.mrb[0].mxu0
    %v2929 = vadd.f32 %v2841, %v2928
    %v2930 = vpop.f32.mrb[0].mxu0
    %2931 = vdwg.mxu0
    %v2932 = vmax.f32 %v2926, 0.0
    %v2933 = vmax.f32 %v2929, 0.0
    %v2934 = vld [vmem:[%s17] sm:$0xf]
    %v2935 = vld [vmem:[%s17 + $0x4] sm:$0xf]
    %v2936 = vld [vmem:[%s17 + $0x8] sm:$0xf]
    %v2937 = vld [vmem:[%s17 + $0xc] sm:$0xf]
    %v2938 = vld [vmem:[%s17 + $0x10] sm:$0xf]
    %v2939 = vld [vmem:[%s17 + $0x14] sm:$0xf]
    %v2940 = vld [vmem:[%s17 + $0x18] sm:$0xf]
    %v2941 = vld [vmem:[%s17 + $0x1c] sm:$0xf]
    %v2942 = vpack.c.bf16 %v2933, %v2932
    %v2943 = vld [vmem:[%s18] sm:$0x1]
    %v2945 = vlaneseq
    %v2946 = vshrl.u32 %v2945, 7
    %v2947 = vsub.s32 0, %v2946
    %v2948 = vrot.slane %v2943, %v2947
    %v2958 = vunpack.c.l.b16 %v2934
    %v2959 = vunpack.c.l.b16 %v2935
    %v2960 = vunpack.c.l.b16 %v2936
    %v2961 = vunpack.c.l.b16 %v2937
    %v2962 = vunpack.c.l.b16 %v2938
    %v2963 = vunpack.c.l.b16 %v2939
    %v2964 = vunpack.c.l.b16 %v2940
    %v2965 = vunpack.c.l.b16 %v2941
    %v2966 = vpack.c.b16 %v2959, %v2958
    %v2967 = vpack.c.b16 %v2961, %v2960
    %v2968 = vpack.c.b16 %v2963, %v2962
    %v2969 = vpack.c.b16 %v2965, %v2964
    %v2975 = vsel %vm161, %v2942, 0
    %2977 = vmatprep.subr.bf16.mxu0 0
    %2978 = vmatpush1.bf16.msra.mxu0 %v2966
    %2979 = vmatprep.subr.bf16.mxu0 0
    %2980 = vmatpush1.bf16.msra.mxu0 %v2967
    %2981 = vmatprep.subr.bf16.mxu0 0
    %2982 = vmatpush1.bf16.msra.mxu0 %v2968
    %2983 = vmatprep.subr.bf16.mxu0 0
    %2984 = vmatpush1.bf16.msra.mxu0 %v2969
    %2985 = vmatprep.subr.bf16.mxu0 0
    %2986 = vmatpush1.bf16.msra.mxu0 0
    %2987 = vmatprep.subr.bf16.mxu0 0
    %2988 = vmatpush1.bf16.msra.mxu0 0
    %2989 = vmatprep.subr.bf16.mxu0 0
    %2990 = vmatpush1.bf16.msra.mxu0 0
    %2991 = vmatprep.subr.bf16.mxu0 0
    %2992 = vmatpush1.bf16.msra.mxu0 0
    %2993 = vmatprep.subr.bf16.mxu0 0
    %2994 = vmatpush1.bf16.msra.mxu0 0
    %2995 = vmatprep.subr.bf16.mxu0 0
    %2996 = vmatpush1.bf16.msra.mxu0 0
    %2997 = vmatprep.subr.bf16.mxu0 0
    %2998 = vmatpush1.bf16.msra.mxu0 0
    %2999 = vmatprep.subr.bf16.mxu0 0
    %3000 = vmatpush1.bf16.msra.mxu0 0
    %3001 = vmatprep.subr.bf16.mxu0 0
    %3002 = vmatpush1.bf16.msra.mxu0 0
    %3003 = vmatprep.subr.bf16.mxu0 0
    %3004 = vmatpush1.bf16.msra.mxu0 0
    %3005 = vmatprep.subr.bf16.mxu0 0
    %3006 = vmatpush1.bf16.msra.mxu0 0
    %3007 = vmatprep.subr.bf16.mxu0 0
    %3008 = vmatpush1.bf16.msra.mxu0 0
    %3009 = vmatprep.mubr.bf16.mxu0 0
    %3010 = vmatmul.mubr.bf16.gmra.mrb[0].mxu0 %v2975
    %v3011 = vpop.f32.mrb[0].mxu0
    %v3012 = vadd.f32 %v2948, %v3011
    %v3013 = vpop.f32.mrb[0].mxu0
    %v3014 = vpop.f32.mrb[0].mxu0
    %v3015 = vadd.f32 %v2948, %v3014
    %v3016 = vpop.f32.mrb[0].mxu0
    %3017 = vdwg.mxu0
    %3018 = vst [vmem:[#allocation10] sm:$0xff] %v3012
    %3019 = vst [vmem:[#allocation10 + $0x8] sm:$0xff] %v3015
    // Predicated region
    $region94: #{tpu_custom_call.1} parent=1 // pred_check
      _
    $region95: #{tpu_custom_call.1} parent=1 // pred_check_branch
      %3021 = sbr.rel (0) target = $region97
    $region96: #{tpu_custom_call.1} parent=1 // pred_region
      %s3023 = ssub.s32 256, 256
      %3024 = vsyncadd [#allocation4], %s3023
      %s3025 = sshll.u32 [#allocation10], 4
      %s3026 = int_to_ptr.vmem [resolvable:$true] %s3025
      %3031 = dma.vmem_to_hbm [thread:$0]  %s3026, 256, %s19, [#allocation4], 128, 128, 8
    $region97: #{tpu_custom_call.1} parent=1 // pred_fallthru
      _
    // Predicated region
    $region98: #{tpu_custom_call.1} parent=1 // pred_check
      _
    $region99: #{tpu_custom_call.1} parent=1 // pred_check_branch
      %3033 = sbr.rel (0) target = $region101
    $region100: #{tpu_custom_call.1} parent=1 // pred_region
      %3034 = dma.done [#allocation4], 256
    $region101: #{tpu_custom_call.1} parent=1 // pred_fallthru
      _
    %3035 = vsyncpa [#allocation3], 1
    %3036 = vsyncpa [#allocation6], 1
    %3037 = vsyncpa [#allocation9], 1
    %3038 = vsyncpa [#allocation4], 1

</llo_original>
